<compile_context>
chip_gen: v7x
topology: tpu7x:2x2x1
jax: 0.10.0
libtpu: 0.0.40
codegen_flags: <defaults>
</compile_context>

<pallas_src>
import functools

import numpy as np
import jax
import jax.numpy as jnp
from jax import lax
from jax.experimental import pallas as pl
from jax.experimental.pallas import tpu as pltpu


# ---------------------------------------------------------------------------
# Fused kernel: one grid step = TB batch lanes; everything stays in VMEM/vregs.
# Layout inside the kernel:
#   xd_ref / xe_ref : (A|R, N*TB)   with lane index q = token*TB + batch
#   per-token slab  : (N, TB)       slab[i][j, b] == Matrix[b, i, j]
# ---------------------------------------------------------------------------
def _structured_attention_kernel(n, xd_ref, xe_ref, wcat_ref, bcat_ref, waT_ref,
                                 wf1_ref, wf2_ref, bf_ref, exparam_ref, out_ref):
    f32 = jnp.float32
    A, ntb = xd_ref.shape
    R = xe_ref.shape[0]
    tb = ntb // n

    xd = xd_ref[...]                       # (A, n*tb): xd[a, i*tb+b] = inpd[b, i, a]
    xe = xe_ref[...]                       # (R, n*tb): xe[r, i*tb+b] = inpe[b, i, r]

    # ---- stage 1: fused projections (wp|wc|wr in one MXU call, wa in a second) --
    proj = jnp.dot(wcat_ref[...], xd, preferred_element_type=f32) + bcat_ref[...]
    tp_all = jnp.tanh(proj[:A, :])                       # (A, n*tb)
    tc_all = jnp.tanh(proj[A:2 * A, :])                  # (A, n*tb)
    fr_all = jnp.exp(proj[2 * A:2 * A + 1, :])           # (1, n*tb), fr[b,i]
    tpw_all = jnp.dot(waT_ref[...], tp_all, preferred_element_type=f32)   # (A, n*tb)

    lane = lambda arr, i: arr[:, i * tb:(i + 1) * tb]    # 128-aligned lane slice (free)
    tpw_blk = [lane(tpw_all, i) for i in range(n)]       # (A, tb) per token
    tc_blk = [lane(tc_all, i) for i in range(n)]         # (A, tb)
    fr_blk = [lane(fr_all, i) for i in range(n)]         # (1, tb)
    xe_blk = [lane(xe, i) for i in range(n)]             # (R, tb)

    sub = lax.broadcasted_iota(jnp.int32, (n, 1), 0)     # matrix column id (sublanes)
    onehot = [(sub == j).astype(f32) for j in range(n)]  # (n, 1) each

    # ---- stage 2: Aij and the LLx matrix, batch-in-lanes slabs -----------------
    # fij[b,i,j] = sum_a tpw[b,i,a] * tc[b,j,a]  (VPU mul + XLU sublane reduce)
    aij = []
    for i in range(n):
        slab = None
        for j in range(n):
            if j == i:                                   # maskij zeroes the diagonal
                continue
            fij = jnp.sum(tpw_blk[i] * tc_blk[j], axis=0, keepdims=True)   # (1, tb)
            row = onehot[j] * jnp.exp(fij)
            slab = row if slab is None else slab + row
        aij.append(slab)                                 # (n, tb): Aij[b, i, :]

    di = aij[0]
    for i in range(1, n):
        di = di + aij[i]                                 # Di[b, j] = sum_i Aij[b,i,j]

    fr_l = None                                          # fr_l[j, b] = fr[b, j]
    for j in range(n):
        row = onehot[j] * fr_blk[j]
        fr_l = row if fr_l is None else fr_l + row

    # LLx: row 0 = fr, rows i>=1 = -Aij + diag(Di)
    m = [fr_l] + [onehot[i] * di - aij[i] for i in range(1, n)]
    inv = [onehot[i] for i in range(n)]                  # identity rows (broadcast)

    # ---- stage 3: unrolled, slice-based, branch-free Gauss-Jordan inverse ------
    # TODO(synk): no partial pivoting (torch.inverse uses pivoted LU); fine for this
    # diagonally-dominant Laplacian-like system, less robust for arbitrary inputs.
    for k in range(n):
        pr = m[k]                                        # (n, tb) pivot row
        piv = pr[k:k + 1, :]                             # (1, tb) pivot per lane
        r = pl.reciprocal(piv, approx=True)              # EUP slot
        r = r * (2.0 - piv * r)                          # 1 Newton step -> ~f32 exact
        pr_n = pr * r
        pi_n = inv[k] * r
        for i in range(n):
            fac = m[i][k:k + 1, :]
            if i == k:
                fac = fac - 1.0                          # row k ends as pr_n / pi_n
            m[i] = m[i] - fac * pr_n
            inv[i] = inv[i] - fac * pi_n

    # ---- stage 4: dx, d0, pinp (all per-lane VPU work) --------------------------
    diag_l = None                                        # diag_l[j, b] = LLinv[b,j,j]
    for j in range(n):
        row = onehot[j] * inv[j][j:j + 1, :]
        diag_l = row if diag_l is None else diag_l + row

    # dx[b,i,j] = [(j!=0) - (i!=0)] * LLinv[b,j,j] * Aij[b,i,j]  (tmp1 == tmp2)
    sign_row0 = 1.0 - onehot[0]
    sign_rest = -onehot[0]
    dx = [(sign_row0 if i == 0 else sign_rest) * (diag_l * aij[i]) for i in range(n)]

    # pinp[b,i,r] = d0[b,i]*exparam[r] + sum_j dx[b,j,i] * inpe[b,j,r]
    exparam = exparam_ref[...]                           # (R, 1)
    pinp_blk = []
    for i in range(n):
        acc = exparam * (fr_blk[i] * inv[i][0:1, :])     # d0[b,i] * exparam[r]
        for j in range(n):
            acc = acc + xe_blk[j] * dx[j][i:i + 1, :]
        pinp_blk.append(acc)                             # (R, tb)
    pinp_all = jnp.concatenate(pinp_blk, axis=1)         # (R, n*tb) lane-aligned concat

    # ---- stage 5: fused output projection + relu, one lane-dense store ----------
    out = jnp.dot(wf1_ref[...], xe, preferred_element_type=f32)
    out = out + jnp.dot(wf2_ref[...], pinp_all, preferred_element_type=f32)
    out_ref[...] = jnp.maximum(out + bf_ref[...], 0.0)   # (R, n*tb), unmasked vst
    # TODO(synk): cinp = dx @ inpe in the PyTorch module is dead code; skipped.


# ---------------------------------------------------------------------------
# Wrapper: generation-aware tiling, XLA-side layout plumbing, pallas_call glue.
# ---------------------------------------------------------------------------
def _round_up(x, m):
    return ((x + m - 1) // m) * m


def _vmem_capacity_bytes():
    try:
        return int(pltpu.get_tpu_info().vmem_capacity_bytes)
    except Exception:
        return 64 << 20                                   # conservative (v7x-sized)


def _per_lane_bytes(N, A, R):
    f = 4
    io = 2 * N * (A + R) * f + 2 * N * R * f              # double-buffered in/out
    stage1 = (N * (A + R) + N * (2 * A + 1) + 3 * N * A) * f
    mats = 7 * N * N * f                                  # aij / m / inv / dx / slop
    post = 3 * N * R * f
    return int(1.5 * (io + stage1 + mats + post)) + 512


def _pick_batch_tile(B, N, A, R):
    cap = _vmem_capacity_bytes()
    per_lane = _per_lane_bytes(N, A, R)
    budget = int(cap * 0.30)                              # headroom for scratch/spills
    tb = (budget // per_lane) // 128 * 128
    tb = max(128, min(512, tb))                           # lane-dense, bounded tile
    bp = _round_up(max(B, 1), 128)
    if bp >= 256:
        # keep >= 2 grid steps so the "parallel" axis can shard over v7x's 2 TCs
        tb = min(tb, max(128, _round_up(bp // 2, 128)))
    tb = min(tb, bp)
    bp = _round_up(bp, tb)
    return tb, bp, cap


def _to_blocks(t, tb, bp):
    """(B, N, F) -> (G, F, N*tb) with lane order q = token*tb + batch (XLA side)."""
    B, N, F = t.shape
    t = jnp.pad(t, ((0, bp - B), (0, 0), (0, 0)))
    g = bp // tb
    t = t.reshape(g, tb, N, F)
    t = jnp.transpose(t, (0, 3, 2, 1))                    # (G, F, N, tb)
    return t.reshape(g, F, N * tb)


def _from_blocks(o, B, N, R, tb):
    """(G, R, N*tb) -> (B, N, R) (XLA side)."""
    g = o.shape[0]
    o = o.reshape(g, R, N, tb)
    o = jnp.transpose(o, (0, 3, 2, 1))                    # (G, tb, N, R)
    return o.reshape(g * tb, N, R)[:B]


def structured_attention_forward(x, params, att_dim_arg, bidirec=True):
    x = jnp.asarray(x, jnp.float32)
    B, N, D = x.shape
    A = 2 * att_dim_arg if bidirec else att_dim_arg       # self.att_dim
    R = D - A                                             # self.rep_dim

    # Encoder-half slicing stays in plain JAX (layout plumbing).
    if bidirec:
        half, rh = D // 2, R // 2
        inpe = jnp.concatenate([x[:, :, :half][:, :, :rh],
                                x[:, :, half:][:, :, :rh]], axis=2)    # (B, N, R)
        inpd = jnp.concatenate([x[:, :, :half][:, :, rh:],
                                x[:, :, half:][:, :, rh:]], axis=2)    # (B, N, A)
    else:
        inpe = x[:, :, :R]
        inpd = x[:, :, R:]

    TB, Bp, cap = _pick_batch_tile(B, N, A, R)
    G = Bp // TB
    NTB = N * TB

    xd_blk = _to_blocks(inpd, TB, Bp)                     # (G, A, N*TB)
    xe_blk = _to_blocks(inpe, TB, Bp)                     # (G, R, N*TB)

    # Fused projection weight: rows = [wp; wc; wr], bias = [bp; bc; 0].
    wcat = jnp.concatenate([params["wp"], params["wc"],
                            params["wr"].reshape(1, A)], axis=0).astype(jnp.float32)
    bcat = jnp.concatenate([params["bp"], params["bc"],
                            jnp.zeros((1,), jnp.float32)]).reshape(2 * A + 1, 1)
    waT = params["wa"].T.astype(jnp.float32)
    wf1 = params["wf"][:, :R].astype(jnp.float32)         # inpe half of fzlinear
    wf2 = params["wf"][:, R:].astype(jnp.float32)         # pinp half
    bf_col = params["bf"].reshape(R, 1).astype(jnp.float32)
    exp_col = params["exparam"].reshape(R, 1).astype(jnp.float32)

    per_lane = _per_lane_bytes(N, A, R)
    vmem_limit = int(min(cap * 3 // 4, max(32 << 20, 8 * TB * per_lane)))

    def _full_spec(a):
        # Constant-index weight block (revisited every step; VMEM cost negligible).
        return pl.BlockSpec(a.shape, lambda g: (0,) * a.ndim)

    kernel = functools.partial(_structured_attention_kernel, N)

    out_blk = pl.pallas_call(
        kernel,
        out_shape=jax.ShapeDtypeStruct((G, R, NTB), jnp.float32),
        grid=(G,),
        in_specs=[
            pl.BlockSpec((None, A, NTB), lambda g: (g, 0, 0)),
            pl.BlockSpec((None, R, NTB), lambda g: (g, 0, 0)),
            _full_spec(wcat), _full_spec(bcat), _full_spec(waT),
            _full_spec(wf1), _full_spec(wf2), _full_spec(bf_col), _full_spec(exp_col),
        ],
        out_specs=pl.BlockSpec((None, R, NTB), lambda g: (g, 0, 0)),
        compiler_params=pltpu.CompilerParams(
            dimension_semantics=("parallel",),
            vmem_limit_bytes=vmem_limit),
    )(xd_blk, xe_blk, wcat, bcat, waT, wf1, wf2, bf_col, exp_col)

    return _from_blocks(out_blk, B, N, R, TB)


# ---------------------------------------------------------------------------
# Pure-JAX reference (mirrors the PyTorch forward exactly) for verification.
# ---------------------------------------------------------------------------
def reference_forward(x, params, att_dim_arg, bidirec=True):
    B, N, D = x.shape
    A = 2 * att_dim_arg if bidirec else att_dim_arg
    R = D - A
    if bidirec:
        half, rh = D // 2, R // 2
        inpe = jnp.concatenate([x[:, :, :half][:, :, :rh],
                                x[:, :, half:][:, :, :rh]], 2)
        inpd = jnp.concatenate([x[:, :, :half][:, :, rh:],
                                x[:, :, half:][:, :, rh:]], 2)
    else:
        inpe = x[:, :, :R]
        inpd = x[:, :, R:]

    tp = jnp.tanh(inpd @ params["wp"].T + params["bp"])
    tc = jnp.tanh(inpd @ params["wc"].T + params["bc"])
    fij = jnp.einsum('bia,ac,bjc->bij', tp, params["wa"], tc)
    fr = jnp.exp(jnp.einsum('bia,a->bi', inpd, params["wr"]))
    eye = jnp.eye(N, dtype=x.dtype)
    aij = jnp.exp(fij) * (1.0 - eye)[None]
    di = jnp.sum(aij, axis=1)
    dij = eye[None] * di[:, None, :]
    lij = -aij + dij
    llx = jnp.concatenate([fr[:, None, :], lij[:, 1:, :]], axis=1)
    llinv = jnp.linalg.inv(llx)
    d0 = fr * llinv[:, :, 0]
    diag = jnp.diagonal(llinv, axis1=1, axis2=2)
    tmp1 = diag[:, None, :] * aij
    tmp2 = aij * diag[:, None, :]
    mask1 = (jnp.arange(N)[None, None, :] != 0).astype(x.dtype)
    mask2 = (jnp.arange(N)[None, :, None] != 0).astype(x.dtype)
    dx = mask1 * tmp1 - mask2 * tmp2
    d = jnp.concatenate([d0[:, None, :], dx], axis=1)
    df = jnp.transpose(d, (0, 2, 1))
    ssr = jnp.concatenate(
        [jnp.broadcast_to(params["exparam"], (B, 1, R)), inpe], axis=1)
    pinp = jnp.einsum('bij,bjr->bir', df, ssr)
    finp = jnp.concatenate([inpe, pinp], axis=2)
    return jax.nn.relu(finp @ params["wf"].T + params["bf"])


if __name__ == "__main__":
    key = jax.random.PRNGKey(0)
    input_dim_arg, att_dim_arg = 16, 8       # module ctor args
    bidirec = True
    D = 2 * input_dim_arg                    # self.input_dim = 32
    A = 2 * att_dim_arg                      # self.att_dim   = 16
    R = D - A                                # self.rep_dim   = 16
    B, N = 2, 8

    ks = jax.random.split(key, 10)
    params = {
        "wp": 0.2 * jax.random.normal(ks[0], (A, A), jnp.float32),
        "bp": 0.2 * jax.random.normal(ks[1], (A,), jnp.float32),
        "wc": 0.2 * jax.random.normal(ks[2], (A, A), jnp.float32),
        "bc": 0.2 * jax.random.normal(ks[3], (A,), jnp.float32),
        "wa": 0.2 * jax.random.normal(ks[4], (A, A), jnp.float32),   # Bilinear weight[0]
        "wr": 0.2 * jax.random.normal(ks[5], (A,), jnp.float32),
        "wf": 0.2 * jax.random.normal(ks[6], (R, 2 * R), jnp.float32),
        "bf": 0.2 * jax.random.normal(ks[7], (R,), jnp.float32),
        "exparam": 0.2 * jax.random.normal(ks[8], (1, 1, R), jnp.float32),
    }
    x = jax.random.normal(ks[9], (B, N, D), jnp.float32)

    out = structured_attention_forward(x, params, att_dim_arg, bidirec=bidirec)
    out = jax.block_until_ready(out)

    ref = reference_forward(x, params, att_dim_arg, bidirec=bidirec)
    # Slightly relaxed vs 1e-4: kernel sums fij/pinp in a different order and uses an
    # unpivoted Gauss-Jordan (vs LAPACK-style pivoted LU); both are f32-accurate.
    np.testing.assert_allclose(np.asarray(out), np.asarray(ref), rtol=5e-4, atol=5e-4)
    print("KERNEL_OK")
</pallas_src>

<mosaic_0001>
module attributes {stable_mosaic.version = 11 : i64} {
  func.func @_structured_attention_kernel(%arg0: i32, %arg1: memref<1x16x1024xf32, #tpu.memory_space<vmem>>, %arg2: memref<1x16x1024xf32, #tpu.memory_space<vmem>>, %arg3: memref<33x16xf32, #tpu.memory_space<vmem>>, %arg4: memref<33x1xf32, #tpu.memory_space<vmem>>, %arg5: memref<16x16xf32, #tpu.memory_space<vmem>>, %arg6: memref<16x16xf32, #tpu.memory_space<vmem>>, %arg7: memref<16x16xf32, #tpu.memory_space<vmem>>, %arg8: memref<16x1xf32, #tpu.memory_space<vmem>>, %arg9: memref<16x1xf32, #tpu.memory_space<vmem>>, %arg10: memref<1x16x1024xf32, #tpu.memory_space<vmem>>) attributes {dimension_semantics = [#tpu.dimension_semantics<parallel>], iteration_bounds = array<i64: 1>, scalar_prefetch = 0 : i64, scratch_operands = 0 : i64, tpu.core_type = #tpu.core_type<tc>, window_params = [{transform_indices = @transform_0, window_bounds = array<i64: 1, 16, 1024>}, {transform_indices = @transform_1, window_bounds = array<i64: 1, 16, 1024>}, {pipeline_mode = #tpu.pipeline_mode<synchronous>, transform_indices = @transform_2, window_bounds = array<i64: 33, 16>}, {pipeline_mode = #tpu.pipeline_mode<synchronous>, transform_indices = @transform_3, window_bounds = array<i64: 33, 1>}, {pipeline_mode = #tpu.pipeline_mode<synchronous>, transform_indices = @transform_4, window_bounds = array<i64: 16, 16>}, {pipeline_mode = #tpu.pipeline_mode<synchronous>, transform_indices = @transform_5, window_bounds = array<i64: 16, 16>}, {pipeline_mode = #tpu.pipeline_mode<synchronous>, transform_indices = @transform_6, window_bounds = array<i64: 16, 16>}, {pipeline_mode = #tpu.pipeline_mode<synchronous>, transform_indices = @transform_7, window_bounds = array<i64: 16, 1>}, {pipeline_mode = #tpu.pipeline_mode<synchronous>, transform_indices = @transform_8, window_bounds = array<i64: 16, 1>}, {transform_indices = @transform_9, window_bounds = array<i64: 1, 16, 1024>}]} {
    %c0 = arith.constant 0 : index
    %c0_0 = arith.constant 0 : index
    %c0_1 = arith.constant 0 : index
    %0 = vector.load %arg1[%c0, %c0_0, %c0_1] : memref<1x16x1024xf32, #tpu.memory_space<vmem>>, vector<1x16x1024xf32>
    %1 = vector.shape_cast %0 : vector<1x16x1024xf32> to vector<16x1024xf32>
    %c0_2 = arith.constant 0 : index
    %c0_3 = arith.constant 0 : index
    %c0_4 = arith.constant 0 : index
    %2 = vector.load %arg2[%c0_2, %c0_3, %c0_4] : memref<1x16x1024xf32, #tpu.memory_space<vmem>>, vector<1x16x1024xf32>
    %3 = vector.shape_cast %2 : vector<1x16x1024xf32> to vector<16x1024xf32>
    %c0_5 = arith.constant 0 : index
    %c0_6 = arith.constant 0 : index
    %4 = vector.load %arg3[%c0_5, %c0_6] : memref<33x16xf32, #tpu.memory_space<vmem>>, vector<33x16xf32>
    %cst = arith.constant dense<0.000000e+00> : vector<33x1024xf32>
    %5 = tpu.matmul %4, %1, %cst {dimension_numbers = #tpu.dot_dimension_numbers<[1], [0], [0], [1], [0, 0, 1, 1], [], []>} : vector<33x16xf32>, vector<16x1024xf32>, vector<33x1024xf32> -> vector<33x1024xf32>
    %c0_7 = arith.constant 0 : index
    %c0_8 = arith.constant 0 : index
    %6 = vector.load %arg4[%c0_7, %c0_8] : memref<33x1xf32, #tpu.memory_space<vmem>>, vector<33x1xf32>
    %7 = vector.broadcast %6 : vector<33x1xf32> to vector<33x1024xf32>
    %8 = arith.addf %5, %7 : vector<33x1024xf32>
    %9 = vector.extract_strided_slice %8 {offsets = [0, 0], sizes = [16, 1024], strides = [1, 1]} : vector<33x1024xf32> to vector<16x1024xf32>
    %10 = math.tanh %9 : vector<16x1024xf32>
    %11 = vector.extract_strided_slice %8 {offsets = [16, 0], sizes = [16, 1024], strides = [1, 1]} : vector<33x1024xf32> to vector<16x1024xf32>
    %12 = math.tanh %11 : vector<16x1024xf32>
    %13 = vector.extract_strided_slice %8 {offsets = [32, 0], sizes = [1, 1024], strides = [1, 1]} : vector<33x1024xf32> to vector<1x1024xf32>
    %14 = math.exp %13 : vector<1x1024xf32>
    %c0_9 = arith.constant 0 : index
    %c0_10 = arith.constant 0 : index
    %15 = vector.load %arg5[%c0_9, %c0_10] : memref<16x16xf32, #tpu.memory_space<vmem>>, vector<16x16xf32>
    %cst_11 = arith.constant dense<0.000000e+00> : vector<16x1024xf32>
    %16 = tpu.matmul %15, %10, %cst_11 {dimension_numbers = #tpu.dot_dimension_numbers<[1], [0], [0], [1], [0, 0, 1, 1], [], []>} : vector<16x16xf32>, vector<16x1024xf32>, vector<16x1024xf32> -> vector<16x1024xf32>
    %17 = vector.extract_strided_slice %16 {offsets = [0, 0], sizes = [16, 128], strides = [1, 1]} : vector<16x1024xf32> to vector<16x128xf32>
    %18 = vector.extract_strided_slice %16 {offsets = [0, 128], sizes = [16, 128], strides = [1, 1]} : vector<16x1024xf32> to vector<16x128xf32>
    %19 = vector.extract_strided_slice %16 {offsets = [0, 256], sizes = [16, 128], strides = [1, 1]} : vector<16x1024xf32> to vector<16x128xf32>
    %20 = vector.extract_strided_slice %16 {offsets = [0, 384], sizes = [16, 128], strides = [1, 1]} : vector<16x1024xf32> to vector<16x128xf32>
    %21 = vector.extract_strided_slice %16 {offsets = [0, 512], sizes = [16, 128], strides = [1, 1]} : vector<16x1024xf32> to vector<16x128xf32>
    %22 = vector.extract_strided_slice %16 {offsets = [0, 640], sizes = [16, 128], strides = [1, 1]} : vector<16x1024xf32> to vector<16x128xf32>
    %23 = vector.extract_strided_slice %16 {offsets = [0, 768], sizes = [16, 128], strides = [1, 1]} : vector<16x1024xf32> to vector<16x128xf32>
    %24 = vector.extract_strided_slice %16 {offsets = [0, 896], sizes = [16, 128], strides = [1, 1]} : vector<16x1024xf32> to vector<16x128xf32>
    %25 = vector.extract_strided_slice %12 {offsets = [0, 0], sizes = [16, 128], strides = [1, 1]} : vector<16x1024xf32> to vector<16x128xf32>
    %26 = vector.extract_strided_slice %12 {offsets = [0, 128], sizes = [16, 128], strides = [1, 1]} : vector<16x1024xf32> to vector<16x128xf32>
    %27 = vector.extract_strided_slice %12 {offsets = [0, 256], sizes = [16, 128], strides = [1, 1]} : vector<16x1024xf32> to vector<16x128xf32>
    %28 = vector.extract_strided_slice %12 {offsets = [0, 384], sizes = [16, 128], strides = [1, 1]} : vector<16x1024xf32> to vector<16x128xf32>
    %29 = vector.extract_strided_slice %12 {offsets = [0, 512], sizes = [16, 128], strides = [1, 1]} : vector<16x1024xf32> to vector<16x128xf32>
    %30 = vector.extract_strided_slice %12 {offsets = [0, 640], sizes = [16, 128], strides = [1, 1]} : vector<16x1024xf32> to vector<16x128xf32>
    %31 = vector.extract_strided_slice %12 {offsets = [0, 768], sizes = [16, 128], strides = [1, 1]} : vector<16x1024xf32> to vector<16x128xf32>
    %32 = vector.extract_strided_slice %12 {offsets = [0, 896], sizes = [16, 128], strides = [1, 1]} : vector<16x1024xf32> to vector<16x128xf32>
    %33 = vector.extract_strided_slice %14 {offsets = [0, 0], sizes = [1, 128], strides = [1, 1]} : vector<1x1024xf32> to vector<1x128xf32>
    %34 = vector.extract_strided_slice %14 {offsets = [0, 128], sizes = [1, 128], strides = [1, 1]} : vector<1x1024xf32> to vector<1x128xf32>
    %35 = vector.extract_strided_slice %14 {offsets = [0, 256], sizes = [1, 128], strides = [1, 1]} : vector<1x1024xf32> to vector<1x128xf32>
    %36 = vector.extract_strided_slice %14 {offsets = [0, 384], sizes = [1, 128], strides = [1, 1]} : vector<1x1024xf32> to vector<1x128xf32>
    %37 = vector.extract_strided_slice %14 {offsets = [0, 512], sizes = [1, 128], strides = [1, 1]} : vector<1x1024xf32> to vector<1x128xf32>
    %38 = vector.extract_strided_slice %14 {offsets = [0, 640], sizes = [1, 128], strides = [1, 1]} : vector<1x1024xf32> to vector<1x128xf32>
    %39 = vector.extract_strided_slice %14 {offsets = [0, 768], sizes = [1, 128], strides = [1, 1]} : vector<1x1024xf32> to vector<1x128xf32>
    %40 = vector.extract_strided_slice %14 {offsets = [0, 896], sizes = [1, 128], strides = [1, 1]} : vector<1x1024xf32> to vector<1x128xf32>
    %41 = vector.extract_strided_slice %3 {offsets = [0, 0], sizes = [16, 128], strides = [1, 1]} : vector<16x1024xf32> to vector<16x128xf32>
    %42 = vector.extract_strided_slice %3 {offsets = [0, 128], sizes = [16, 128], strides = [1, 1]} : vector<16x1024xf32> to vector<16x128xf32>
    %43 = vector.extract_strided_slice %3 {offsets = [0, 256], sizes = [16, 128], strides = [1, 1]} : vector<16x1024xf32> to vector<16x128xf32>
    %44 = vector.extract_strided_slice %3 {offsets = [0, 384], sizes = [16, 128], strides = [1, 1]} : vector<16x1024xf32> to vector<16x128xf32>
    %45 = vector.extract_strided_slice %3 {offsets = [0, 512], sizes = [16, 128], strides = [1, 1]} : vector<16x1024xf32> to vector<16x128xf32>
    %46 = vector.extract_strided_slice %3 {offsets = [0, 640], sizes = [16, 128], strides = [1, 1]} : vector<16x1024xf32> to vector<16x128xf32>
    %47 = vector.extract_strided_slice %3 {offsets = [0, 768], sizes = [16, 128], strides = [1, 1]} : vector<16x1024xf32> to vector<16x128xf32>
    %48 = vector.extract_strided_slice %3 {offsets = [0, 896], sizes = [16, 128], strides = [1, 1]} : vector<16x1024xf32> to vector<16x128xf32>
    %49 = tpu.iota {dimensions = array<i32: 0>} : vector<8x1xi32>
    %c0_i32 = arith.constant 0 : i32
    %50 = vector.broadcast %c0_i32 : i32 to vector<8x1xi32>
    %51 = arith.cmpi eq, %49, %50 : vector<8x1xi32>
    %52 = arith.extui %51 : vector<8x1xi1> to vector<8x1xi32>
    %53 = arith.sitofp %52 : vector<8x1xi32> to vector<8x1xf32>
    %c1_i32 = arith.constant 1 : i32
    %54 = vector.broadcast %c1_i32 : i32 to vector<8x1xi32>
    %55 = arith.cmpi eq, %49, %54 : vector<8x1xi32>
    %56 = arith.extui %55 : vector<8x1xi1> to vector<8x1xi32>
    %57 = arith.sitofp %56 : vector<8x1xi32> to vector<8x1xf32>
    %c2_i32 = arith.constant 2 : i32
    %58 = vector.broadcast %c2_i32 : i32 to vector<8x1xi32>
    %59 = arith.cmpi eq, %49, %58 : vector<8x1xi32>
    %60 = arith.extui %59 : vector<8x1xi1> to vector<8x1xi32>
    %61 = arith.sitofp %60 : vector<8x1xi32> to vector<8x1xf32>
    %c3_i32 = arith.constant 3 : i32
    %62 = vector.broadcast %c3_i32 : i32 to vector<8x1xi32>
    %63 = arith.cmpi eq, %49, %62 : vector<8x1xi32>
    %64 = arith.extui %63 : vector<8x1xi1> to vector<8x1xi32>
    %65 = arith.sitofp %64 : vector<8x1xi32> to vector<8x1xf32>
    %c4_i32 = arith.constant 4 : i32
    %66 = vector.broadcast %c4_i32 : i32 to vector<8x1xi32>
    %67 = arith.cmpi eq, %49, %66 : vector<8x1xi32>
    %68 = arith.extui %67 : vector<8x1xi1> to vector<8x1xi32>
    %69 = arith.sitofp %68 : vector<8x1xi32> to vector<8x1xf32>
    %c5_i32 = arith.constant 5 : i32
    %70 = vector.broadcast %c5_i32 : i32 to vector<8x1xi32>
    %71 = arith.cmpi eq, %49, %70 : vector<8x1xi32>
    %72 = arith.extui %71 : vector<8x1xi1> to vector<8x1xi32>
    %73 = arith.sitofp %72 : vector<8x1xi32> to vector<8x1xf32>
    %c6_i32 = arith.constant 6 : i32
    %74 = vector.broadcast %c6_i32 : i32 to vector<8x1xi32>
    %75 = arith.cmpi eq, %49, %74 : vector<8x1xi32>
    %76 = arith.extui %75 : vector<8x1xi1> to vector<8x1xi32>
    %77 = arith.sitofp %76 : vector<8x1xi32> to vector<8x1xf32>
    %c7_i32 = arith.constant 7 : i32
    %78 = vector.broadcast %c7_i32 : i32 to vector<8x1xi32>
    %79 = arith.cmpi eq, %49, %78 : vector<8x1xi32>
    %80 = arith.extui %79 : vector<8x1xi1> to vector<8x1xi32>
    %81 = arith.sitofp %80 : vector<8x1xi32> to vector<8x1xf32>
    %82 = arith.mulf %17, %26 : vector<16x128xf32>
    %cst_12 = arith.constant dense<0.000000e+00> : vector<128xf32>
    %83 = vector.multi_reduction <add>, %82, %cst_12 [0] : vector<16x128xf32> to vector<128xf32>
    %84 = vector.shape_cast %83 : vector<128xf32> to vector<1x128xf32>
    %85 = math.exp %84 : vector<1x128xf32>
    %86 = vector.broadcast %57 : vector<8x1xf32> to vector<8x128xf32>
    %87 = vector.broadcast %85 : vector<1x128xf32> to vector<8x128xf32>
    %88 = arith.mulf %86, %87 : vector<8x128xf32>
    %89 = arith.mulf %17, %27 : vector<16x128xf32>
    %cst_13 = arith.constant dense<0.000000e+00> : vector<128xf32>
    %90 = vector.multi_reduction <add>, %89, %cst_13 [0] : vector<16x128xf32> to vector<128xf32>
    %91 = vector.shape_cast %90 : vector<128xf32> to vector<1x128xf32>
    %92 = math.exp %91 : vector<1x128xf32>
    %93 = vector.broadcast %61 : vector<8x1xf32> to vector<8x128xf32>
    %94 = vector.broadcast %92 : vector<1x128xf32> to vector<8x128xf32>
    %95 = arith.mulf %93, %94 : vector<8x128xf32>
    %96 = arith.addf %88, %95 : vector<8x128xf32>
    %97 = arith.mulf %17, %28 : vector<16x128xf32>
    %cst_14 = arith.constant dense<0.000000e+00> : vector<128xf32>
    %98 = vector.multi_reduction <add>, %97, %cst_14 [0] : vector<16x128xf32> to vector<128xf32>
    %99 = vector.shape_cast %98 : vector<128xf32> to vector<1x128xf32>
    %100 = math.exp %99 : vector<1x128xf32>
    %101 = vector.broadcast %65 : vector<8x1xf32> to vector<8x128xf32>
    %102 = vector.broadcast %100 : vector<1x128xf32> to vector<8x128xf32>
    %103 = arith.mulf %101, %102 : vector<8x128xf32>
    %104 = arith.addf %96, %103 : vector<8x128xf32>
    %105 = arith.mulf %17, %29 : vector<16x128xf32>
    %cst_15 = arith.constant dense<0.000000e+00> : vector<128xf32>
    %106 = vector.multi_reduction <add>, %105, %cst_15 [0] : vector<16x128xf32> to vector<128xf32>
    %107 = vector.shape_cast %106 : vector<128xf32> to vector<1x128xf32>
    %108 = math.exp %107 : vector<1x128xf32>
    %109 = vector.broadcast %69 : vector<8x1xf32> to vector<8x128xf32>
    %110 = vector.broadcast %108 : vector<1x128xf32> to vector<8x128xf32>
    %111 = arith.mulf %109, %110 : vector<8x128xf32>
    %112 = arith.addf %104, %111 : vector<8x128xf32>
    %113 = arith.mulf %17, %30 : vector<16x128xf32>
    %cst_16 = arith.constant dense<0.000000e+00> : vector<128xf32>
    %114 = vector.multi_reduction <add>, %113, %cst_16 [0] : vector<16x128xf32> to vector<128xf32>
    %115 = vector.shape_cast %114 : vector<128xf32> to vector<1x128xf32>
    %116 = math.exp %115 : vector<1x128xf32>
    %117 = vector.broadcast %73 : vector<8x1xf32> to vector<8x128xf32>
    %118 = vector.broadcast %116 : vector<1x128xf32> to vector<8x128xf32>
    %119 = arith.mulf %117, %118 : vector<8x128xf32>
    %120 = arith.addf %112, %119 : vector<8x128xf32>
    %121 = arith.mulf %17, %31 : vector<16x128xf32>
    %cst_17 = arith.constant dense<0.000000e+00> : vector<128xf32>
    %122 = vector.multi_reduction <add>, %121, %cst_17 [0] : vector<16x128xf32> to vector<128xf32>
    %123 = vector.shape_cast %122 : vector<128xf32> to vector<1x128xf32>
    %124 = math.exp %123 : vector<1x128xf32>
    %125 = vector.broadcast %77 : vector<8x1xf32> to vector<8x128xf32>
    %126 = vector.broadcast %124 : vector<1x128xf32> to vector<8x128xf32>
    %127 = arith.mulf %125, %126 : vector<8x128xf32>
    %128 = arith.addf %120, %127 : vector<8x128xf32>
    %129 = arith.mulf %17, %32 : vector<16x128xf32>
    %cst_18 = arith.constant dense<0.000000e+00> : vector<128xf32>
    %130 = vector.multi_reduction <add>, %129, %cst_18 [0] : vector<16x128xf32> to vector<128xf32>
    %131 = vector.shape_cast %130 : vector<128xf32> to vector<1x128xf32>
    %132 = math.exp %131 : vector<1x128xf32>
    %133 = vector.broadcast %81 : vector<8x1xf32> to vector<8x128xf32>
    %134 = vector.broadcast %132 : vector<1x128xf32> to vector<8x128xf32>
    %135 = arith.mulf %133, %134 : vector<8x128xf32>
    %136 = arith.addf %128, %135 : vector<8x128xf32>
    %137 = arith.mulf %18, %25 : vector<16x128xf32>
    %cst_19 = arith.constant dense<0.000000e+00> : vector<128xf32>
    %138 = vector.multi_reduction <add>, %137, %cst_19 [0] : vector<16x128xf32> to vector<128xf32>
    %139 = vector.shape_cast %138 : vector<128xf32> to vector<1x128xf32>
    %140 = math.exp %139 : vector<1x128xf32>
    %141 = vector.broadcast %53 : vector<8x1xf32> to vector<8x128xf32>
    %142 = vector.broadcast %140 : vector<1x128xf32> to vector<8x128xf32>
    %143 = arith.mulf %141, %142 : vector<8x128xf32>
    %144 = arith.mulf %18, %27 : vector<16x128xf32>
    %cst_20 = arith.constant dense<0.000000e+00> : vector<128xf32>
    %145 = vector.multi_reduction <add>, %144, %cst_20 [0] : vector<16x128xf32> to vector<128xf32>
    %146 = vector.shape_cast %145 : vector<128xf32> to vector<1x128xf32>
    %147 = math.exp %146 : vector<1x128xf32>
    %148 = vector.broadcast %61 : vector<8x1xf32> to vector<8x128xf32>
    %149 = vector.broadcast %147 : vector<1x128xf32> to vector<8x128xf32>
    %150 = arith.mulf %148, %149 : vector<8x128xf32>
    %151 = arith.addf %143, %150 : vector<8x128xf32>
    %152 = arith.mulf %18, %28 : vector<16x128xf32>
    %cst_21 = arith.constant dense<0.000000e+00> : vector<128xf32>
    %153 = vector.multi_reduction <add>, %152, %cst_21 [0] : vector<16x128xf32> to vector<128xf32>
    %154 = vector.shape_cast %153 : vector<128xf32> to vector<1x128xf32>
    %155 = math.exp %154 : vector<1x128xf32>
    %156 = vector.broadcast %65 : vector<8x1xf32> to vector<8x128xf32>
    %157 = vector.broadcast %155 : vector<1x128xf32> to vector<8x128xf32>
    %158 = arith.mulf %156, %157 : vector<8x128xf32>
    %159 = arith.addf %151, %158 : vector<8x128xf32>
    %160 = arith.mulf %18, %29 : vector<16x128xf32>
    %cst_22 = arith.constant dense<0.000000e+00> : vector<128xf32>
    %161 = vector.multi_reduction <add>, %160, %cst_22 [0] : vector<16x128xf32> to vector<128xf32>
    %162 = vector.shape_cast %161 : vector<128xf32> to vector<1x128xf32>
    %163 = math.exp %162 : vector<1x128xf32>
    %164 = vector.broadcast %69 : vector<8x1xf32> to vector<8x128xf32>
    %165 = vector.broadcast %163 : vector<1x128xf32> to vector<8x128xf32>
    %166 = arith.mulf %164, %165 : vector<8x128xf32>
    %167 = arith.addf %159, %166 : vector<8x128xf32>
    %168 = arith.mulf %18, %30 : vector<16x128xf32>
    %cst_23 = arith.constant dense<0.000000e+00> : vector<128xf32>
    %169 = vector.multi_reduction <add>, %168, %cst_23 [0] : vector<16x128xf32> to vector<128xf32>
    %170 = vector.shape_cast %169 : vector<128xf32> to vector<1x128xf32>
    %171 = math.exp %170 : vector<1x128xf32>
    %172 = vector.broadcast %73 : vector<8x1xf32> to vector<8x128xf32>
    %173 = vector.broadcast %171 : vector<1x128xf32> to vector<8x128xf32>
    %174 = arith.mulf %172, %173 : vector<8x128xf32>
    %175 = arith.addf %167, %174 : vector<8x128xf32>
    %176 = arith.mulf %18, %31 : vector<16x128xf32>
    %cst_24 = arith.constant dense<0.000000e+00> : vector<128xf32>
    %177 = vector.multi_reduction <add>, %176, %cst_24 [0] : vector<16x128xf32> to vector<128xf32>
    %178 = vector.shape_cast %177 : vector<128xf32> to vector<1x128xf32>
    %179 = math.exp %178 : vector<1x128xf32>
    %180 = vector.broadcast %77 : vector<8x1xf32> to vector<8x128xf32>
    %181 = vector.broadcast %179 : vector<1x128xf32> to vector<8x128xf32>
    %182 = arith.mulf %180, %181 : vector<8x128xf32>
    %183 = arith.addf %175, %182 : vector<8x128xf32>
    %184 = arith.mulf %18, %32 : vector<16x128xf32>
    %cst_25 = arith.constant dense<0.000000e+00> : vector<128xf32>
    %185 = vector.multi_reduction <add>, %184, %cst_25 [0] : vector<16x128xf32> to vector<128xf32>
    %186 = vector.shape_cast %185 : vector<128xf32> to vector<1x128xf32>
    %187 = math.exp %186 : vector<1x128xf32>
    %188 = vector.broadcast %81 : vector<8x1xf32> to vector<8x128xf32>
    %189 = vector.broadcast %187 : vector<1x128xf32> to vector<8x128xf32>
    %190 = arith.mulf %188, %189 : vector<8x128xf32>
    %191 = arith.addf %183, %190 : vector<8x128xf32>
    %192 = arith.mulf %19, %25 : vector<16x128xf32>
    %cst_26 = arith.constant dense<0.000000e+00> : vector<128xf32>
    %193 = vector.multi_reduction <add>, %192, %cst_26 [0] : vector<16x128xf32> to vector<128xf32>
    %194 = vector.shape_cast %193 : vector<128xf32> to vector<1x128xf32>
    %195 = math.exp %194 : vector<1x128xf32>
    %196 = vector.broadcast %53 : vector<8x1xf32> to vector<8x128xf32>
    %197 = vector.broadcast %195 : vector<1x128xf32> to vector<8x128xf32>
    %198 = arith.mulf %196, %197 : vector<8x128xf32>
    %199 = arith.mulf %19, %26 : vector<16x128xf32>
    %cst_27 = arith.constant dense<0.000000e+00> : vector<128xf32>
    %200 = vector.multi_reduction <add>, %199, %cst_27 [0] : vector<16x128xf32> to vector<128xf32>
    %201 = vector.shape_cast %200 : vector<128xf32> to vector<1x128xf32>
    %202 = math.exp %201 : vector<1x128xf32>
    %203 = vector.broadcast %57 : vector<8x1xf32> to vector<8x128xf32>
    %204 = vector.broadcast %202 : vector<1x128xf32> to vector<8x128xf32>
    %205 = arith.mulf %203, %204 : vector<8x128xf32>
    %206 = arith.addf %198, %205 : vector<8x128xf32>
    %207 = arith.mulf %19, %28 : vector<16x128xf32>
    %cst_28 = arith.constant dense<0.000000e+00> : vector<128xf32>
    %208 = vector.multi_reduction <add>, %207, %cst_28 [0] : vector<16x128xf32> to vector<128xf32>
    %209 = vector.shape_cast %208 : vector<128xf32> to vector<1x128xf32>
    %210 = math.exp %209 : vector<1x128xf32>
    %211 = vector.broadcast %65 : vector<8x1xf32> to vector<8x128xf32>
    %212 = vector.broadcast %210 : vector<1x128xf32> to vector<8x128xf32>
    %213 = arith.mulf %211, %212 : vector<8x128xf32>
    %214 = arith.addf %206, %213 : vector<8x128xf32>
    %215 = arith.mulf %19, %29 : vector<16x128xf32>
    %cst_29 = arith.constant dense<0.000000e+00> : vector<128xf32>
    %216 = vector.multi_reduction <add>, %215, %cst_29 [0] : vector<16x128xf32> to vector<128xf32>
    %217 = vector.shape_cast %216 : vector<128xf32> to vector<1x128xf32>
    %218 = math.exp %217 : vector<1x128xf32>
    %219 = vector.broadcast %69 : vector<8x1xf32> to vector<8x128xf32>
    %220 = vector.broadcast %218 : vector<1x128xf32> to vector<8x128xf32>
    %221 = arith.mulf %219, %220 : vector<8x128xf32>
    %222 = arith.addf %214, %221 : vector<8x128xf32>
    %223 = arith.mulf %19, %30 : vector<16x128xf32>
    %cst_30 = arith.constant dense<0.000000e+00> : vector<128xf32>
    %224 = vector.multi_reduction <add>, %223, %cst_30 [0] : vector<16x128xf32> to vector<128xf32>
    %225 = vector.shape_cast %224 : vector<128xf32> to vector<1x128xf32>
    %226 = math.exp %225 : vector<1x128xf32>
    %227 = vector.broadcast %73 : vector<8x1xf32> to vector<8x128xf32>
    %228 = vector.broadcast %226 : vector<1x128xf32> to vector<8x128xf32>
    %229 = arith.mulf %227, %228 : vector<8x128xf32>
    %230 = arith.addf %222, %229 : vector<8x128xf32>
    %231 = arith.mulf %19, %31 : vector<16x128xf32>
    %cst_31 = arith.constant dense<0.000000e+00> : vector<128xf32>
    %232 = vector.multi_reduction <add>, %231, %cst_31 [0] : vector<16x128xf32> to vector<128xf32>
    %233 = vector.shape_cast %232 : vector<128xf32> to vector<1x128xf32>
    %234 = math.exp %233 : vector<1x128xf32>
    %235 = vector.broadcast %77 : vector<8x1xf32> to vector<8x128xf32>
    %236 = vector.broadcast %234 : vector<1x128xf32> to vector<8x128xf32>
    %237 = arith.mulf %235, %236 : vector<8x128xf32>
    %238 = arith.addf %230, %237 : vector<8x128xf32>
    %239 = arith.mulf %19, %32 : vector<16x128xf32>
    %cst_32 = arith.constant dense<0.000000e+00> : vector<128xf32>
    %240 = vector.multi_reduction <add>, %239, %cst_32 [0] : vector<16x128xf32> to vector<128xf32>
    %241 = vector.shape_cast %240 : vector<128xf32> to vector<1x128xf32>
    %242 = math.exp %241 : vector<1x128xf32>
    %243 = vector.broadcast %81 : vector<8x1xf32> to vector<8x128xf32>
    %244 = vector.broadcast %242 : vector<1x128xf32> to vector<8x128xf32>
    %245 = arith.mulf %243, %244 : vector<8x128xf32>
    %246 = arith.addf %238, %245 : vector<8x128xf32>
    %247 = arith.mulf %20, %25 : vector<16x128xf32>
    %cst_33 = arith.constant dense<0.000000e+00> : vector<128xf32>
    %248 = vector.multi_reduction <add>, %247, %cst_33 [0] : vector<16x128xf32> to vector<128xf32>
    %249 = vector.shape_cast %248 : vector<128xf32> to vector<1x128xf32>
    %250 = math.exp %249 : vector<1x128xf32>
    %251 = vector.broadcast %53 : vector<8x1xf32> to vector<8x128xf32>
    %252 = vector.broadcast %250 : vector<1x128xf32> to vector<8x128xf32>
    %253 = arith.mulf %251, %252 : vector<8x128xf32>
    %254 = arith.mulf %20, %26 : vector<16x128xf32>
    %cst_34 = arith.constant dense<0.000000e+00> : vector<128xf32>
    %255 = vector.multi_reduction <add>, %254, %cst_34 [0] : vector<16x128xf32> to vector<128xf32>
    %256 = vector.shape_cast %255 : vector<128xf32> to vector<1x128xf32>
    %257 = math.exp %256 : vector<1x128xf32>
    %258 = vector.broadcast %57 : vector<8x1xf32> to vector<8x128xf32>
    %259 = vector.broadcast %257 : vector<1x128xf32> to vector<8x128xf32>
    %260 = arith.mulf %258, %259 : vector<8x128xf32>
    %261 = arith.addf %253, %260 : vector<8x128xf32>
    %262 = arith.mulf %20, %27 : vector<16x128xf32>
    %cst_35 = arith.constant dense<0.000000e+00> : vector<128xf32>
    %263 = vector.multi_reduction <add>, %262, %cst_35 [0] : vector<16x128xf32> to vector<128xf32>
    %264 = vector.shape_cast %263 : vector<128xf32> to vector<1x128xf32>
    %265 = math.exp %264 : vector<1x128xf32>
    %266 = vector.broadcast %61 : vector<8x1xf32> to vector<8x128xf32>
    %267 = vector.broadcast %265 : vector<1x128xf32> to vector<8x128xf32>
    %268 = arith.mulf %266, %267 : vector<8x128xf32>
    %269 = arith.addf %261, %268 : vector<8x128xf32>
    %270 = arith.mulf %20, %29 : vector<16x128xf32>
    %cst_36 = arith.constant dense<0.000000e+00> : vector<128xf32>
    %271 = vector.multi_reduction <add>, %270, %cst_36 [0] : vector<16x128xf32> to vector<128xf32>
    %272 = vector.shape_cast %271 : vector<128xf32> to vector<1x128xf32>
    %273 = math.exp %272 : vector<1x128xf32>
    %274 = vector.broadcast %69 : vector<8x1xf32> to vector<8x128xf32>
    %275 = vector.broadcast %273 : vector<1x128xf32> to vector<8x128xf32>
    %276 = arith.mulf %274, %275 : vector<8x128xf32>
    %277 = arith.addf %269, %276 : vector<8x128xf32>
    %278 = arith.mulf %20, %30 : vector<16x128xf32>
    %cst_37 = arith.constant dense<0.000000e+00> : vector<128xf32>
    %279 = vector.multi_reduction <add>, %278, %cst_37 [0] : vector<16x128xf32> to vector<128xf32>
    %280 = vector.shape_cast %279 : vector<128xf32> to vector<1x128xf32>
    %281 = math.exp %280 : vector<1x128xf32>
    %282 = vector.broadcast %73 : vector<8x1xf32> to vector<8x128xf32>
    %283 = vector.broadcast %281 : vector<1x128xf32> to vector<8x128xf32>
    %284 = arith.mulf %282, %283 : vector<8x128xf32>
    %285 = arith.addf %277, %284 : vector<8x128xf32>
    %286 = arith.mulf %20, %31 : vector<16x128xf32>
    %cst_38 = arith.constant dense<0.000000e+00> : vector<128xf32>
    %287 = vector.multi_reduction <add>, %286, %cst_38 [0] : vector<16x128xf32> to vector<128xf32>
    %288 = vector.shape_cast %287 : vector<128xf32> to vector<1x128xf32>
    %289 = math.exp %288 : vector<1x128xf32>
    %290 = vector.broadcast %77 : vector<8x1xf32> to vector<8x128xf32>
    %291 = vector.broadcast %289 : vector<1x128xf32> to vector<8x128xf32>
    %292 = arith.mulf %290, %291 : vector<8x128xf32>
    %293 = arith.addf %285, %292 : vector<8x128xf32>
    %294 = arith.mulf %20, %32 : vector<16x128xf32>
    %cst_39 = arith.constant dense<0.000000e+00> : vector<128xf32>
    %295 = vector.multi_reduction <add>, %294, %cst_39 [0] : vector<16x128xf32> to vector<128xf32>
    %296 = vector.shape_cast %295 : vector<128xf32> to vector<1x128xf32>
    %297 = math.exp %296 : vector<1x128xf32>
    %298 = vector.broadcast %81 : vector<8x1xf32> to vector<8x128xf32>
    %299 = vector.broadcast %297 : vector<1x128xf32> to vector<8x128xf32>
    %300 = arith.mulf %298, %299 : vector<8x128xf32>
    %301 = arith.addf %293, %300 : vector<8x128xf32>
    %302 = arith.mulf %21, %25 : vector<16x128xf32>
    %cst_40 = arith.constant dense<0.000000e+00> : vector<128xf32>
    %303 = vector.multi_reduction <add>, %302, %cst_40 [0] : vector<16x128xf32> to vector<128xf32>
    %304 = vector.shape_cast %303 : vector<128xf32> to vector<1x128xf32>
    %305 = math.exp %304 : vector<1x128xf32>
    %306 = vector.broadcast %53 : vector<8x1xf32> to vector<8x128xf32>
    %307 = vector.broadcast %305 : vector<1x128xf32> to vector<8x128xf32>
    %308 = arith.mulf %306, %307 : vector<8x128xf32>
    %309 = arith.mulf %21, %26 : vector<16x128xf32>
    %cst_41 = arith.constant dense<0.000000e+00> : vector<128xf32>
    %310 = vector.multi_reduction <add>, %309, %cst_41 [0] : vector<16x128xf32> to vector<128xf32>
    %311 = vector.shape_cast %310 : vector<128xf32> to vector<1x128xf32>
    %312 = math.exp %311 : vector<1x128xf32>
    %313 = vector.broadcast %57 : vector<8x1xf32> to vector<8x128xf32>
    %314 = vector.broadcast %312 : vector<1x128xf32> to vector<8x128xf32>
    %315 = arith.mulf %313, %314 : vector<8x128xf32>
    %316 = arith.addf %308, %315 : vector<8x128xf32>
    %317 = arith.mulf %21, %27 : vector<16x128xf32>
    %cst_42 = arith.constant dense<0.000000e+00> : vector<128xf32>
    %318 = vector.multi_reduction <add>, %317, %cst_42 [0] : vector<16x128xf32> to vector<128xf32>
    %319 = vector.shape_cast %318 : vector<128xf32> to vector<1x128xf32>
    %320 = math.exp %319 : vector<1x128xf32>
    %321 = vector.broadcast %61 : vector<8x1xf32> to vector<8x128xf32>
    %322 = vector.broadcast %320 : vector<1x128xf32> to vector<8x128xf32>
    %323 = arith.mulf %321, %322 : vector<8x128xf32>
    %324 = arith.addf %316, %323 : vector<8x128xf32>
    %325 = arith.mulf %21, %28 : vector<16x128xf32>
    %cst_43 = arith.constant dense<0.000000e+00> : vector<128xf32>
    %326 = vector.multi_reduction <add>, %325, %cst_43 [0] : vector<16x128xf32> to vector<128xf32>
    %327 = vector.shape_cast %326 : vector<128xf32> to vector<1x128xf32>
    %328 = math.exp %327 : vector<1x128xf32>
    %329 = vector.broadcast %65 : vector<8x1xf32> to vector<8x128xf32>
    %330 = vector.broadcast %328 : vector<1x128xf32> to vector<8x128xf32>
    %331 = arith.mulf %329, %330 : vector<8x128xf32>
    %332 = arith.addf %324, %331 : vector<8x128xf32>
    %333 = arith.mulf %21, %30 : vector<16x128xf32>
    %cst_44 = arith.constant dense<0.000000e+00> : vector<128xf32>
    %334 = vector.multi_reduction <add>, %333, %cst_44 [0] : vector<16x128xf32> to vector<128xf32>
    %335 = vector.shape_cast %334 : vector<128xf32> to vector<1x128xf32>
    %336 = math.exp %335 : vector<1x128xf32>
    %337 = vector.broadcast %73 : vector<8x1xf32> to vector<8x128xf32>
    %338 = vector.broadcast %336 : vector<1x128xf32> to vector<8x128xf32>
    %339 = arith.mulf %337, %338 : vector<8x128xf32>
    %340 = arith.addf %332, %339 : vector<8x128xf32>
    %341 = arith.mulf %21, %31 : vector<16x128xf32>
    %cst_45 = arith.constant dense<0.000000e+00> : vector<128xf32>
    %342 = vector.multi_reduction <add>, %341, %cst_45 [0] : vector<16x128xf32> to vector<128xf32>
    %343 = vector.shape_cast %342 : vector<128xf32> to vector<1x128xf32>
    %344 = math.exp %343 : vector<1x128xf32>
    %345 = vector.broadcast %77 : vector<8x1xf32> to vector<8x128xf32>
    %346 = vector.broadcast %344 : vector<1x128xf32> to vector<8x128xf32>
    %347 = arith.mulf %345, %346 : vector<8x128xf32>
    %348 = arith.addf %340, %347 : vector<8x128xf32>
    %349 = arith.mulf %21, %32 : vector<16x128xf32>
    %cst_46 = arith.constant dense<0.000000e+00> : vector<128xf32>
    %350 = vector.multi_reduction <add>, %349, %cst_46 [0] : vector<16x128xf32> to vector<128xf32>
    %351 = vector.shape_cast %350 : vector<128xf32> to vector<1x128xf32>
    %352 = math.exp %351 : vector<1x128xf32>
    %353 = vector.broadcast %81 : vector<8x1xf32> to vector<8x128xf32>
    %354 = vector.broadcast %352 : vector<1x128xf32> to vector<8x128xf32>
    %355 = arith.mulf %353, %354 : vector<8x128xf32>
    %356 = arith.addf %348, %355 : vector<8x128xf32>
    %357 = arith.mulf %22, %25 : vector<16x128xf32>
    %cst_47 = arith.constant dense<0.000000e+00> : vector<128xf32>
    %358 = vector.multi_reduction <add>, %357, %cst_47 [0] : vector<16x128xf32> to vector<128xf32>
    %359 = vector.shape_cast %358 : vector<128xf32> to vector<1x128xf32>
    %360 = math.exp %359 : vector<1x128xf32>
    %361 = vector.broadcast %53 : vector<8x1xf32> to vector<8x128xf32>
    %362 = vector.broadcast %360 : vector<1x128xf32> to vector<8x128xf32>
    %363 = arith.mulf %361, %362 : vector<8x128xf32>
    %364 = arith.mulf %22, %26 : vector<16x128xf32>
    %cst_48 = arith.constant dense<0.000000e+00> : vector<128xf32>
    %365 = vector.multi_reduction <add>, %364, %cst_48 [0] : vector<16x128xf32> to vector<128xf32>
    %366 = vector.shape_cast %365 : vector<128xf32> to vector<1x128xf32>
    %367 = math.exp %366 : vector<1x128xf32>
    %368 = vector.broadcast %57 : vector<8x1xf32> to vector<8x128xf32>
    %369 = vector.broadcast %367 : vector<1x128xf32> to vector<8x128xf32>
    %370 = arith.mulf %368, %369 : vector<8x128xf32>
    %371 = arith.addf %363, %370 : vector<8x128xf32>
    %372 = arith.mulf %22, %27 : vector<16x128xf32>
    %cst_49 = arith.constant dense<0.000000e+00> : vector<128xf32>
    %373 = vector.multi_reduction <add>, %372, %cst_49 [0] : vector<16x128xf32> to vector<128xf32>
    %374 = vector.shape_cast %373 : vector<128xf32> to vector<1x128xf32>
    %375 = math.exp %374 : vector<1x128xf32>
    %376 = vector.broadcast %61 : vector<8x1xf32> to vector<8x128xf32>
    %377 = vector.broadcast %375 : vector<1x128xf32> to vector<8x128xf32>
    %378 = arith.mulf %376, %377 : vector<8x128xf32>
    %379 = arith.addf %371, %378 : vector<8x128xf32>
    %380 = arith.mulf %22, %28 : vector<16x128xf32>
    %cst_50 = arith.constant dense<0.000000e+00> : vector<128xf32>
    %381 = vector.multi_reduction <add>, %380, %cst_50 [0] : vector<16x128xf32> to vector<128xf32>
    %382 = vector.shape_cast %381 : vector<128xf32> to vector<1x128xf32>
    %383 = math.exp %382 : vector<1x128xf32>
    %384 = vector.broadcast %65 : vector<8x1xf32> to vector<8x128xf32>
    %385 = vector.broadcast %383 : vector<1x128xf32> to vector<8x128xf32>
    %386 = arith.mulf %384, %385 : vector<8x128xf32>
    %387 = arith.addf %379, %386 : vector<8x128xf32>
    %388 = arith.mulf %22, %29 : vector<16x128xf32>
    %cst_51 = arith.constant dense<0.000000e+00> : vector<128xf32>
    %389 = vector.multi_reduction <add>, %388, %cst_51 [0] : vector<16x128xf32> to vector<128xf32>
    %390 = vector.shape_cast %389 : vector<128xf32> to vector<1x128xf32>
    %391 = math.exp %390 : vector<1x128xf32>
    %392 = vector.broadcast %69 : vector<8x1xf32> to vector<8x128xf32>
    %393 = vector.broadcast %391 : vector<1x128xf32> to vector<8x128xf32>
    %394 = arith.mulf %392, %393 : vector<8x128xf32>
    %395 = arith.addf %387, %394 : vector<8x128xf32>
    %396 = arith.mulf %22, %31 : vector<16x128xf32>
    %cst_52 = arith.constant dense<0.000000e+00> : vector<128xf32>
    %397 = vector.multi_reduction <add>, %396, %cst_52 [0] : vector<16x128xf32> to vector<128xf32>
    %398 = vector.shape_cast %397 : vector<128xf32> to vector<1x128xf32>
    %399 = math.exp %398 : vector<1x128xf32>
    %400 = vector.broadcast %77 : vector<8x1xf32> to vector<8x128xf32>
    %401 = vector.broadcast %399 : vector<1x128xf32> to vector<8x128xf32>
    %402 = arith.mulf %400, %401 : vector<8x128xf32>
    %403 = arith.addf %395, %402 : vector<8x128xf32>
    %404 = arith.mulf %22, %32 : vector<16x128xf32>
    %cst_53 = arith.constant dense<0.000000e+00> : vector<128xf32>
    %405 = vector.multi_reduction <add>, %404, %cst_53 [0] : vector<16x128xf32> to vector<128xf32>
    %406 = vector.shape_cast %405 : vector<128xf32> to vector<1x128xf32>
    %407 = math.exp %406 : vector<1x128xf32>
    %408 = vector.broadcast %81 : vector<8x1xf32> to vector<8x128xf32>
    %409 = vector.broadcast %407 : vector<1x128xf32> to vector<8x128xf32>
    %410 = arith.mulf %408, %409 : vector<8x128xf32>
    %411 = arith.addf %403, %410 : vector<8x128xf32>
    %412 = arith.mulf %23, %25 : vector<16x128xf32>
    %cst_54 = arith.constant dense<0.000000e+00> : vector<128xf32>
    %413 = vector.multi_reduction <add>, %412, %cst_54 [0] : vector<16x128xf32> to vector<128xf32>
    %414 = vector.shape_cast %413 : vector<128xf32> to vector<1x128xf32>
    %415 = math.exp %414 : vector<1x128xf32>
    %416 = vector.broadcast %53 : vector<8x1xf32> to vector<8x128xf32>
    %417 = vector.broadcast %415 : vector<1x128xf32> to vector<8x128xf32>
    %418 = arith.mulf %416, %417 : vector<8x128xf32>
    %419 = arith.mulf %23, %26 : vector<16x128xf32>
    %cst_55 = arith.constant dense<0.000000e+00> : vector<128xf32>
    %420 = vector.multi_reduction <add>, %419, %cst_55 [0] : vector<16x128xf32> to vector<128xf32>
    %421 = vector.shape_cast %420 : vector<128xf32> to vector<1x128xf32>
    %422 = math.exp %421 : vector<1x128xf32>
    %423 = vector.broadcast %57 : vector<8x1xf32> to vector<8x128xf32>
    %424 = vector.broadcast %422 : vector<1x128xf32> to vector<8x128xf32>
    %425 = arith.mulf %423, %424 : vector<8x128xf32>
    %426 = arith.addf %418, %425 : vector<8x128xf32>
    %427 = arith.mulf %23, %27 : vector<16x128xf32>
    %cst_56 = arith.constant dense<0.000000e+00> : vector<128xf32>
    %428 = vector.multi_reduction <add>, %427, %cst_56 [0] : vector<16x128xf32> to vector<128xf32>
    %429 = vector.shape_cast %428 : vector<128xf32> to vector<1x128xf32>
    %430 = math.exp %429 : vector<1x128xf32>
    %431 = vector.broadcast %61 : vector<8x1xf32> to vector<8x128xf32>
    %432 = vector.broadcast %430 : vector<1x128xf32> to vector<8x128xf32>
    %433 = arith.mulf %431, %432 : vector<8x128xf32>
    %434 = arith.addf %426, %433 : vector<8x128xf32>
    %435 = arith.mulf %23, %28 : vector<16x128xf32>
    %cst_57 = arith.constant dense<0.000000e+00> : vector<128xf32>
    %436 = vector.multi_reduction <add>, %435, %cst_57 [0] : vector<16x128xf32> to vector<128xf32>
    %437 = vector.shape_cast %436 : vector<128xf32> to vector<1x128xf32>
    %438 = math.exp %437 : vector<1x128xf32>
    %439 = vector.broadcast %65 : vector<8x1xf32> to vector<8x128xf32>
    %440 = vector.broadcast %438 : vector<1x128xf32> to vector<8x128xf32>
    %441 = arith.mulf %439, %440 : vector<8x128xf32>
    %442 = arith.addf %434, %441 : vector<8x128xf32>
    %443 = arith.mulf %23, %29 : vector<16x128xf32>
    %cst_58 = arith.constant dense<0.000000e+00> : vector<128xf32>
    %444 = vector.multi_reduction <add>, %443, %cst_58 [0] : vector<16x128xf32> to vector<128xf32>
    %445 = vector.shape_cast %444 : vector<128xf32> to vector<1x128xf32>
    %446 = math.exp %445 : vector<1x128xf32>
    %447 = vector.broadcast %69 : vector<8x1xf32> to vector<8x128xf32>
    %448 = vector.broadcast %446 : vector<1x128xf32> to vector<8x128xf32>
    %449 = arith.mulf %447, %448 : vector<8x128xf32>
    %450 = arith.addf %442, %449 : vector<8x128xf32>
    %451 = arith.mulf %23, %30 : vector<16x128xf32>
    %cst_59 = arith.constant dense<0.000000e+00> : vector<128xf32>
    %452 = vector.multi_reduction <add>, %451, %cst_59 [0] : vector<16x128xf32> to vector<128xf32>
    %453 = vector.shape_cast %452 : vector<128xf32> to vector<1x128xf32>
    %454 = math.exp %453 : vector<1x128xf32>
    %455 = vector.broadcast %73 : vector<8x1xf32> to vector<8x128xf32>
    %456 = vector.broadcast %454 : vector<1x128xf32> to vector<8x128xf32>
    %457 = arith.mulf %455, %456 : vector<8x128xf32>
    %458 = arith.addf %450, %457 : vector<8x128xf32>
    %459 = arith.mulf %23, %32 : vector<16x128xf32>
    %cst_60 = arith.constant dense<0.000000e+00> : vector<128xf32>
    %460 = vector.multi_reduction <add>, %459, %cst_60 [0] : vector<16x128xf32> to vector<128xf32>
    %461 = vector.shape_cast %460 : vector<128xf32> to vector<1x128xf32>
    %462 = math.exp %461 : vector<1x128xf32>
    %463 = vector.broadcast %81 : vector<8x1xf32> to vector<8x128xf32>
    %464 = vector.broadcast %462 : vector<1x128xf32> to vector<8x128xf32>
    %465 = arith.mulf %463, %464 : vector<8x128xf32>
    %466 = arith.addf %458, %465 : vector<8x128xf32>
    %467 = arith.mulf %24, %25 : vector<16x128xf32>
    %cst_61 = arith.constant dense<0.000000e+00> : vector<128xf32>
    %468 = vector.multi_reduction <add>, %467, %cst_61 [0] : vector<16x128xf32> to vector<128xf32>
    %469 = vector.shape_cast %468 : vector<128xf32> to vector<1x128xf32>
    %470 = math.exp %469 : vector<1x128xf32>
    %471 = vector.broadcast %53 : vector<8x1xf32> to vector<8x128xf32>
    %472 = vector.broadcast %470 : vector<1x128xf32> to vector<8x128xf32>
    %473 = arith.mulf %471, %472 : vector<8x128xf32>
    %474 = arith.mulf %24, %26 : vector<16x128xf32>
    %cst_62 = arith.constant dense<0.000000e+00> : vector<128xf32>
    %475 = vector.multi_reduction <add>, %474, %cst_62 [0] : vector<16x128xf32> to vector<128xf32>
    %476 = vector.shape_cast %475 : vector<128xf32> to vector<1x128xf32>
    %477 = math.exp %476 : vector<1x128xf32>
    %478 = vector.broadcast %57 : vector<8x1xf32> to vector<8x128xf32>
    %479 = vector.broadcast %477 : vector<1x128xf32> to vector<8x128xf32>
    %480 = arith.mulf %478, %479 : vector<8x128xf32>
    %481 = arith.addf %473, %480 : vector<8x128xf32>
    %482 = arith.mulf %24, %27 : vector<16x128xf32>
    %cst_63 = arith.constant dense<0.000000e+00> : vector<128xf32>
    %483 = vector.multi_reduction <add>, %482, %cst_63 [0] : vector<16x128xf32> to vector<128xf32>
    %484 = vector.shape_cast %483 : vector<128xf32> to vector<1x128xf32>
    %485 = math.exp %484 : vector<1x128xf32>
    %486 = vector.broadcast %61 : vector<8x1xf32> to vector<8x128xf32>
    %487 = vector.broadcast %485 : vector<1x128xf32> to vector<8x128xf32>
    %488 = arith.mulf %486, %487 : vector<8x128xf32>
    %489 = arith.addf %481, %488 : vector<8x128xf32>
    %490 = arith.mulf %24, %28 : vector<16x128xf32>
    %cst_64 = arith.constant dense<0.000000e+00> : vector<128xf32>
    %491 = vector.multi_reduction <add>, %490, %cst_64 [0] : vector<16x128xf32> to vector<128xf32>
    %492 = vector.shape_cast %491 : vector<128xf32> to vector<1x128xf32>
    %493 = math.exp %492 : vector<1x128xf32>
    %494 = vector.broadcast %65 : vector<8x1xf32> to vector<8x128xf32>
    %495 = vector.broadcast %493 : vector<1x128xf32> to vector<8x128xf32>
    %496 = arith.mulf %494, %495 : vector<8x128xf32>
    %497 = arith.addf %489, %496 : vector<8x128xf32>
    %498 = arith.mulf %24, %29 : vector<16x128xf32>
    %cst_65 = arith.constant dense<0.000000e+00> : vector<128xf32>
    %499 = vector.multi_reduction <add>, %498, %cst_65 [0] : vector<16x128xf32> to vector<128xf32>
    %500 = vector.shape_cast %499 : vector<128xf32> to vector<1x128xf32>
    %501 = math.exp %500 : vector<1x128xf32>
    %502 = vector.broadcast %69 : vector<8x1xf32> to vector<8x128xf32>
    %503 = vector.broadcast %501 : vector<1x128xf32> to vector<8x128xf32>
    %504 = arith.mulf %502, %503 : vector<8x128xf32>
    %505 = arith.addf %497, %504 : vector<8x128xf32>
    %506 = arith.mulf %24, %30 : vector<16x128xf32>
    %cst_66 = arith.constant dense<0.000000e+00> : vector<128xf32>
    %507 = vector.multi_reduction <add>, %506, %cst_66 [0] : vector<16x128xf32> to vector<128xf32>
    %508 = vector.shape_cast %507 : vector<128xf32> to vector<1x128xf32>
    %509 = math.exp %508 : vector<1x128xf32>
    %510 = vector.broadcast %73 : vector<8x1xf32> to vector<8x128xf32>
    %511 = vector.broadcast %509 : vector<1x128xf32> to vector<8x128xf32>
    %512 = arith.mulf %510, %511 : vector<8x128xf32>
    %513 = arith.addf %505, %512 : vector<8x128xf32>
    %514 = arith.mulf %24, %31 : vector<16x128xf32>
    %cst_67 = arith.constant dense<0.000000e+00> : vector<128xf32>
    %515 = vector.multi_reduction <add>, %514, %cst_67 [0] : vector<16x128xf32> to vector<128xf32>
    %516 = vector.shape_cast %515 : vector<128xf32> to vector<1x128xf32>
    %517 = math.exp %516 : vector<1x128xf32>
    %518 = vector.broadcast %77 : vector<8x1xf32> to vector<8x128xf32>
    %519 = vector.broadcast %517 : vector<1x128xf32> to vector<8x128xf32>
    %520 = arith.mulf %518, %519 : vector<8x128xf32>
    %521 = arith.addf %513, %520 : vector<8x128xf32>
    %522 = arith.addf %136, %191 : vector<8x128xf32>
    %523 = arith.addf %522, %246 : vector<8x128xf32>
    %524 = arith.addf %523, %301 : vector<8x128xf32>
    %525 = arith.addf %524, %356 : vector<8x128xf32>
    %526 = arith.addf %525, %411 : vector<8x128xf32>
    %527 = arith.addf %526, %466 : vector<8x128xf32>
    %528 = arith.addf %527, %521 : vector<8x128xf32>
    %529 = vector.broadcast %53 : vector<8x1xf32> to vector<8x128xf32>
    %530 = vector.broadcast %33 : vector<1x128xf32> to vector<8x128xf32>
    %531 = arith.mulf %529, %530 : vector<8x128xf32>
    %532 = vector.broadcast %57 : vector<8x1xf32> to vector<8x128xf32>
    %533 = vector.broadcast %34 : vector<1x128xf32> to vector<8x128xf32>
    %534 = arith.mulf %532, %533 : vector<8x128xf32>
    %535 = arith.addf %531, %534 : vector<8x128xf32>
    %536 = vector.broadcast %61 : vector<8x1xf32> to vector<8x128xf32>
    %537 = vector.broadcast %35 : vector<1x128xf32> to vector<8x128xf32>
    %538 = arith.mulf %536, %537 : vector<8x128xf32>
    %539 = arith.addf %535, %538 : vector<8x128xf32>
    %540 = vector.broadcast %65 : vector<8x1xf32> to vector<8x128xf32>
    %541 = vector.broadcast %36 : vector<1x128xf32> to vector<8x128xf32>
    %542 = arith.mulf %540, %541 : vector<8x128xf32>
    %543 = arith.addf %539, %542 : vector<8x128xf32>
    %544 = vector.broadcast %69 : vector<8x1xf32> to vector<8x128xf32>
    %545 = vector.broadcast %37 : vector<1x128xf32> to vector<8x128xf32>
    %546 = arith.mulf %544, %545 : vector<8x128xf32>
    %547 = arith.addf %543, %546 : vector<8x128xf32>
    %548 = vector.broadcast %73 : vector<8x1xf32> to vector<8x128xf32>
    %549 = vector.broadcast %38 : vector<1x128xf32> to vector<8x128xf32>
    %550 = arith.mulf %548, %549 : vector<8x128xf32>
    %551 = arith.addf %547, %550 : vector<8x128xf32>
    %552 = vector.broadcast %77 : vector<8x1xf32> to vector<8x128xf32>
    %553 = vector.broadcast %39 : vector<1x128xf32> to vector<8x128xf32>
    %554 = arith.mulf %552, %553 : vector<8x128xf32>
    %555 = arith.addf %551, %554 : vector<8x128xf32>
    %556 = vector.broadcast %81 : vector<8x1xf32> to vector<8x128xf32>
    %557 = vector.broadcast %40 : vector<1x128xf32> to vector<8x128xf32>
    %558 = arith.mulf %556, %557 : vector<8x128xf32>
    %559 = arith.addf %555, %558 : vector<8x128xf32>
    %560 = vector.broadcast %57 : vector<8x1xf32> to vector<8x128xf32>
    %561 = arith.mulf %560, %528 : vector<8x128xf32>
    %562 = arith.subf %561, %191 : vector<8x128xf32>
    %563 = vector.broadcast %61 : vector<8x1xf32> to vector<8x128xf32>
    %564 = arith.mulf %563, %528 : vector<8x128xf32>
    %565 = arith.subf %564, %246 : vector<8x128xf32>
    %566 = vector.broadcast %65 : vector<8x1xf32> to vector<8x128xf32>
    %567 = arith.mulf %566, %528 : vector<8x128xf32>
    %568 = arith.subf %567, %301 : vector<8x128xf32>
    %569 = vector.broadcast %69 : vector<8x1xf32> to vector<8x128xf32>
    %570 = arith.mulf %569, %528 : vector<8x128xf32>
    %571 = arith.subf %570, %356 : vector<8x128xf32>
    %572 = vector.broadcast %73 : vector<8x1xf32> to vector<8x128xf32>
    %573 = arith.mulf %572, %528 : vector<8x128xf32>
    %574 = arith.subf %573, %411 : vector<8x128xf32>
    %575 = vector.broadcast %77 : vector<8x1xf32> to vector<8x128xf32>
    %576 = arith.mulf %575, %528 : vector<8x128xf32>
    %577 = arith.subf %576, %466 : vector<8x128xf32>
    %578 = vector.broadcast %81 : vector<8x1xf32> to vector<8x128xf32>
    %579 = arith.mulf %578, %528 : vector<8x128xf32>
    %580 = arith.subf %579, %521 : vector<8x128xf32>
    %581 = vector.extract_strided_slice %559 {offsets = [0, 0], sizes = [1, 128], strides = [1, 1]} : vector<8x128xf32> to vector<1x128xf32>
    %582 = tpu.reciprocal %581 {approx = true} : vector<1x128xf32> -> vector<1x128xf32>
    %583 = arith.mulf %581, %582 : vector<1x128xf32>
    %cst_68 = arith.constant 2.000000e+00 : f32
    %584 = vector.broadcast %cst_68 : f32 to vector<1x128xf32>
    %585 = arith.subf %584, %583 : vector<1x128xf32>
    %586 = arith.mulf %582, %585 : vector<1x128xf32>
    %587 = vector.broadcast %586 : vector<1x128xf32> to vector<8x128xf32>
    %588 = arith.mulf %559, %587 : vector<8x128xf32>
    %589 = vector.broadcast %53 : vector<8x1xf32> to vector<8x128xf32>
    %590 = vector.broadcast %586 : vector<1x128xf32> to vector<8x128xf32>
    %591 = arith.mulf %589, %590 : vector<8x128xf32>
    %592 = vector.extract_strided_slice %559 {offsets = [0, 0], sizes = [1, 128], strides = [1, 1]} : vector<8x128xf32> to vector<1x128xf32>
    %cst_69 = arith.constant 1.000000e+00 : f32
    %593 = vector.broadcast %cst_69 : f32 to vector<1x128xf32>
    %594 = arith.subf %592, %593 : vector<1x128xf32>
    %595 = vector.broadcast %594 : vector<1x128xf32> to vector<8x128xf32>
    %596 = arith.mulf %595, %588 : vector<8x128xf32>
    %597 = arith.subf %559, %596 : vector<8x128xf32>
    %598 = vector.broadcast %594 : vector<1x128xf32> to vector<8x128xf32>
    %599 = arith.mulf %598, %591 : vector<8x128xf32>
    %600 = vector.broadcast %53 : vector<8x1xf32> to vector<8x128xf32>
    %601 = arith.subf %600, %599 : vector<8x128xf32>
    %602 = vector.extract_strided_slice %562 {offsets = [0, 0], sizes = [1, 128], strides = [1, 1]} : vector<8x128xf32> to vector<1x128xf32>
    %603 = vector.broadcast %602 : vector<1x128xf32> to vector<8x128xf32>
    %604 = arith.mulf %603, %588 : vector<8x128xf32>
    %605 = arith.subf %562, %604 : vector<8x128xf32>
    %606 = vector.broadcast %602 : vector<1x128xf32> to vector<8x128xf32>
    %607 = arith.mulf %606, %591 : vector<8x128xf32>
    %608 = vector.broadcast %57 : vector<8x1xf32> to vector<8x128xf32>
    %609 = arith.subf %608, %607 : vector<8x128xf32>
    %610 = vector.extract_strided_slice %565 {offsets = [0, 0], sizes = [1, 128], strides = [1, 1]} : vector<8x128xf32> to vector<1x128xf32>
    %611 = vector.broadcast %610 : vector<1x128xf32> to vector<8x128xf32>
    %612 = arith.mulf %611, %588 : vector<8x128xf32>
    %613 = arith.subf %565, %612 : vector<8x128xf32>
    %614 = vector.broadcast %610 : vector<1x128xf32> to vector<8x128xf32>
    %615 = arith.mulf %614, %591 : vector<8x128xf32>
    %616 = vector.broadcast %61 : vector<8x1xf32> to vector<8x128xf32>
    %617 = arith.subf %616, %615 : vector<8x128xf32>
    %618 = vector.extract_strided_slice %568 {offsets = [0, 0], sizes = [1, 128], strides = [1, 1]} : vector<8x128xf32> to vector<1x128xf32>
    %619 = vector.broadcast %618 : vector<1x128xf32> to vector<8x128xf32>
    %620 = arith.mulf %619, %588 : vector<8x128xf32>
    %621 = arith.subf %568, %620 : vector<8x128xf32>
    %622 = vector.broadcast %618 : vector<1x128xf32> to vector<8x128xf32>
    %623 = arith.mulf %622, %591 : vector<8x128xf32>
    %624 = vector.broadcast %65 : vector<8x1xf32> to vector<8x128xf32>
    %625 = arith.subf %624, %623 : vector<8x128xf32>
    %626 = vector.extract_strided_slice %571 {offsets = [0, 0], sizes = [1, 128], strides = [1, 1]} : vector<8x128xf32> to vector<1x128xf32>
    %627 = vector.broadcast %626 : vector<1x128xf32> to vector<8x128xf32>
    %628 = arith.mulf %627, %588 : vector<8x128xf32>
    %629 = arith.subf %571, %628 : vector<8x128xf32>
    %630 = vector.broadcast %626 : vector<1x128xf32> to vector<8x128xf32>
    %631 = arith.mulf %630, %591 : vector<8x128xf32>
    %632 = vector.broadcast %69 : vector<8x1xf32> to vector<8x128xf32>
    %633 = arith.subf %632, %631 : vector<8x128xf32>
    %634 = vector.extract_strided_slice %574 {offsets = [0, 0], sizes = [1, 128], strides = [1, 1]} : vector<8x128xf32> to vector<1x128xf32>
    %635 = vector.broadcast %634 : vector<1x128xf32> to vector<8x128xf32>
    %636 = arith.mulf %635, %588 : vector<8x128xf32>
    %637 = arith.subf %574, %636 : vector<8x128xf32>
    %638 = vector.broadcast %634 : vector<1x128xf32> to vector<8x128xf32>
    %639 = arith.mulf %638, %591 : vector<8x128xf32>
    %640 = vector.broadcast %73 : vector<8x1xf32> to vector<8x128xf32>
    %641 = arith.subf %640, %639 : vector<8x128xf32>
    %642 = vector.extract_strided_slice %577 {offsets = [0, 0], sizes = [1, 128], strides = [1, 1]} : vector<8x128xf32> to vector<1x128xf32>
    %643 = vector.broadcast %642 : vector<1x128xf32> to vector<8x128xf32>
    %644 = arith.mulf %643, %588 : vector<8x128xf32>
    %645 = arith.subf %577, %644 : vector<8x128xf32>
    %646 = vector.broadcast %642 : vector<1x128xf32> to vector<8x128xf32>
    %647 = arith.mulf %646, %591 : vector<8x128xf32>
    %648 = vector.broadcast %77 : vector<8x1xf32> to vector<8x128xf32>
    %649 = arith.subf %648, %647 : vector<8x128xf32>
    %650 = vector.extract_strided_slice %580 {offsets = [0, 0], sizes = [1, 128], strides = [1, 1]} : vector<8x128xf32> to vector<1x128xf32>
    %651 = vector.broadcast %650 : vector<1x128xf32> to vector<8x128xf32>
    %652 = arith.mulf %651, %588 : vector<8x128xf32>
    %653 = arith.subf %580, %652 : vector<8x128xf32>
    %654 = vector.broadcast %650 : vector<1x128xf32> to vector<8x128xf32>
    %655 = arith.mulf %654, %591 : vector<8x128xf32>
    %656 = vector.broadcast %81 : vector<8x1xf32> to vector<8x128xf32>
    %657 = arith.subf %656, %655 : vector<8x128xf32>
    %658 = vector.extract_strided_slice %605 {offsets = [1, 0], sizes = [1, 128], strides = [1, 1]} : vector<8x128xf32> to vector<1x128xf32>
    %659 = tpu.reciprocal %658 {approx = true} : vector<1x128xf32> -> vector<1x128xf32>
    %660 = arith.mulf %658, %659 : vector<1x128xf32>
    %cst_70 = arith.constant 2.000000e+00 : f32
    %661 = vector.broadcast %cst_70 : f32 to vector<1x128xf32>
    %662 = arith.subf %661, %660 : vector<1x128xf32>
    %663 = arith.mulf %659, %662 : vector<1x128xf32>
    %664 = vector.broadcast %663 : vector<1x128xf32> to vector<8x128xf32>
    %665 = arith.mulf %605, %664 : vector<8x128xf32>
    %666 = vector.broadcast %663 : vector<1x128xf32> to vector<8x128xf32>
    %667 = arith.mulf %609, %666 : vector<8x128xf32>
    %668 = vector.extract_strided_slice %597 {offsets = [1, 0], sizes = [1, 128], strides = [1, 1]} : vector<8x128xf32> to vector<1x128xf32>
    %669 = vector.broadcast %668 : vector<1x128xf32> to vector<8x128xf32>
    %670 = arith.mulf %669, %665 : vector<8x128xf32>
    %671 = arith.subf %597, %670 : vector<8x128xf32>
    %672 = vector.broadcast %668 : vector<1x128xf32> to vector<8x128xf32>
    %673 = arith.mulf %672, %667 : vector<8x128xf32>
    %674 = arith.subf %601, %673 : vector<8x128xf32>
    %675 = vector.extract_strided_slice %605 {offsets = [1, 0], sizes = [1, 128], strides = [1, 1]} : vector<8x128xf32> to vector<1x128xf32>
    %cst_71 = arith.constant 1.000000e+00 : f32
    %676 = vector.broadcast %cst_71 : f32 to vector<1x128xf32>
    %677 = arith.subf %675, %676 : vector<1x128xf32>
    %678 = vector.broadcast %677 : vector<1x128xf32> to vector<8x128xf32>
    %679 = arith.mulf %678, %665 : vector<8x128xf32>
    %680 = arith.subf %605, %679 : vector<8x128xf32>
    %681 = vector.broadcast %677 : vector<1x128xf32> to vector<8x128xf32>
    %682 = arith.mulf %681, %667 : vector<8x128xf32>
    %683 = arith.subf %609, %682 : vector<8x128xf32>
    %684 = vector.extract_strided_slice %613 {offsets = [1, 0], sizes = [1, 128], strides = [1, 1]} : vector<8x128xf32> to vector<1x128xf32>
    %685 = vector.broadcast %684 : vector<1x128xf32> to vector<8x128xf32>
    %686 = arith.mulf %685, %665 : vector<8x128xf32>
    %687 = arith.subf %613, %686 : vector<8x128xf32>
    %688 = vector.broadcast %684 : vector<1x128xf32> to vector<8x128xf32>
    %689 = arith.mulf %688, %667 : vector<8x128xf32>
    %690 = arith.subf %617, %689 : vector<8x128xf32>
    %691 = vector.extract_strided_slice %621 {offsets = [1, 0], sizes = [1, 128], strides = [1, 1]} : vector<8x128xf32> to vector<1x128xf32>
    %692 = vector.broadcast %691 : vector<1x128xf32> to vector<8x128xf32>
    %693 = arith.mulf %692, %665 : vector<8x128xf32>
    %694 = arith.subf %621, %693 : vector<8x128xf32>
    %695 = vector.broadcast %691 : vector<1x128xf32> to vector<8x128xf32>
    %696 = arith.mulf %695, %667 : vector<8x128xf32>
    %697 = arith.subf %625, %696 : vector<8x128xf32>
    %698 = vector.extract_strided_slice %629 {offsets = [1, 0], sizes = [1, 128], strides = [1, 1]} : vector<8x128xf32> to vector<1x128xf32>
    %699 = vector.broadcast %698 : vector<1x128xf32> to vector<8x128xf32>
    %700 = arith.mulf %699, %665 : vector<8x128xf32>
    %701 = arith.subf %629, %700 : vector<8x128xf32>
    %702 = vector.broadcast %698 : vector<1x128xf32> to vector<8x128xf32>
    %703 = arith.mulf %702, %667 : vector<8x128xf32>
    %704 = arith.subf %633, %703 : vector<8x128xf32>
    %705 = vector.extract_strided_slice %637 {offsets = [1, 0], sizes = [1, 128], strides = [1, 1]} : vector<8x128xf32> to vector<1x128xf32>
    %706 = vector.broadcast %705 : vector<1x128xf32> to vector<8x128xf32>
    %707 = arith.mulf %706, %665 : vector<8x128xf32>
    %708 = arith.subf %637, %707 : vector<8x128xf32>
    %709 = vector.broadcast %705 : vector<1x128xf32> to vector<8x128xf32>
    %710 = arith.mulf %709, %667 : vector<8x128xf32>
    %711 = arith.subf %641, %710 : vector<8x128xf32>
    %712 = vector.extract_strided_slice %645 {offsets = [1, 0], sizes = [1, 128], strides = [1, 1]} : vector<8x128xf32> to vector<1x128xf32>
    %713 = vector.broadcast %712 : vector<1x128xf32> to vector<8x128xf32>
    %714 = arith.mulf %713, %665 : vector<8x128xf32>
    %715 = arith.subf %645, %714 : vector<8x128xf32>
    %716 = vector.broadcast %712 : vector<1x128xf32> to vector<8x128xf32>
    %717 = arith.mulf %716, %667 : vector<8x128xf32>
    %718 = arith.subf %649, %717 : vector<8x128xf32>
    %719 = vector.extract_strided_slice %653 {offsets = [1, 0], sizes = [1, 128], strides = [1, 1]} : vector<8x128xf32> to vector<1x128xf32>
    %720 = vector.broadcast %719 : vector<1x128xf32> to vector<8x128xf32>
    %721 = arith.mulf %720, %665 : vector<8x128xf32>
    %722 = arith.subf %653, %721 : vector<8x128xf32>
    %723 = vector.broadcast %719 : vector<1x128xf32> to vector<8x128xf32>
    %724 = arith.mulf %723, %667 : vector<8x128xf32>
    %725 = arith.subf %657, %724 : vector<8x128xf32>
    %726 = vector.extract_strided_slice %687 {offsets = [2, 0], sizes = [1, 128], strides = [1, 1]} : vector<8x128xf32> to vector<1x128xf32>
    %727 = tpu.reciprocal %726 {approx = true} : vector<1x128xf32> -> vector<1x128xf32>
    %728 = arith.mulf %726, %727 : vector<1x128xf32>
    %cst_72 = arith.constant 2.000000e+00 : f32
    %729 = vector.broadcast %cst_72 : f32 to vector<1x128xf32>
    %730 = arith.subf %729, %728 : vector<1x128xf32>
    %731 = arith.mulf %727, %730 : vector<1x128xf32>
    %732 = vector.broadcast %731 : vector<1x128xf32> to vector<8x128xf32>
    %733 = arith.mulf %687, %732 : vector<8x128xf32>
    %734 = vector.broadcast %731 : vector<1x128xf32> to vector<8x128xf32>
    %735 = arith.mulf %690, %734 : vector<8x128xf32>
    %736 = vector.extract_strided_slice %671 {offsets = [2, 0], sizes = [1, 128], strides = [1, 1]} : vector<8x128xf32> to vector<1x128xf32>
    %737 = vector.broadcast %736 : vector<1x128xf32> to vector<8x128xf32>
    %738 = arith.mulf %737, %733 : vector<8x128xf32>
    %739 = arith.subf %671, %738 : vector<8x128xf32>
    %740 = vector.broadcast %736 : vector<1x128xf32> to vector<8x128xf32>
    %741 = arith.mulf %740, %735 : vector<8x128xf32>
    %742 = arith.subf %674, %741 : vector<8x128xf32>
    %743 = vector.extract_strided_slice %680 {offsets = [2, 0], sizes = [1, 128], strides = [1, 1]} : vector<8x128xf32> to vector<1x128xf32>
    %744 = vector.broadcast %743 : vector<1x128xf32> to vector<8x128xf32>
    %745 = arith.mulf %744, %733 : vector<8x128xf32>
    %746 = arith.subf %680, %745 : vector<8x128xf32>
    %747 = vector.broadcast %743 : vector<1x128xf32> to vector<8x128xf32>
    %748 = arith.mulf %747, %735 : vector<8x128xf32>
    %749 = arith.subf %683, %748 : vector<8x128xf32>
    %750 = vector.extract_strided_slice %687 {offsets = [2, 0], sizes = [1, 128], strides = [1, 1]} : vector<8x128xf32> to vector<1x128xf32>
    %cst_73 = arith.constant 1.000000e+00 : f32
    %751 = vector.broadcast %cst_73 : f32 to vector<1x128xf32>
    %752 = arith.subf %750, %751 : vector<1x128xf32>
    %753 = vector.broadcast %752 : vector<1x128xf32> to vector<8x128xf32>
    %754 = arith.mulf %753, %733 : vector<8x128xf32>
    %755 = arith.subf %687, %754 : vector<8x128xf32>
    %756 = vector.broadcast %752 : vector<1x128xf32> to vector<8x128xf32>
    %757 = arith.mulf %756, %735 : vector<8x128xf32>
    %758 = arith.subf %690, %757 : vector<8x128xf32>
    %759 = vector.extract_strided_slice %694 {offsets = [2, 0], sizes = [1, 128], strides = [1, 1]} : vector<8x128xf32> to vector<1x128xf32>
    %760 = vector.broadcast %759 : vector<1x128xf32> to vector<8x128xf32>
    %761 = arith.mulf %760, %733 : vector<8x128xf32>
    %762 = arith.subf %694, %761 : vector<8x128xf32>
    %763 = vector.broadcast %759 : vector<1x128xf32> to vector<8x128xf32>
    %764 = arith.mulf %763, %735 : vector<8x128xf32>
    %765 = arith.subf %697, %764 : vector<8x128xf32>
    %766 = vector.extract_strided_slice %701 {offsets = [2, 0], sizes = [1, 128], strides = [1, 1]} : vector<8x128xf32> to vector<1x128xf32>
    %767 = vector.broadcast %766 : vector<1x128xf32> to vector<8x128xf32>
    %768 = arith.mulf %767, %733 : vector<8x128xf32>
    %769 = arith.subf %701, %768 : vector<8x128xf32>
    %770 = vector.broadcast %766 : vector<1x128xf32> to vector<8x128xf32>
    %771 = arith.mulf %770, %735 : vector<8x128xf32>
    %772 = arith.subf %704, %771 : vector<8x128xf32>
    %773 = vector.extract_strided_slice %708 {offsets = [2, 0], sizes = [1, 128], strides = [1, 1]} : vector<8x128xf32> to vector<1x128xf32>
    %774 = vector.broadcast %773 : vector<1x128xf32> to vector<8x128xf32>
    %775 = arith.mulf %774, %733 : vector<8x128xf32>
    %776 = arith.subf %708, %775 : vector<8x128xf32>
    %777 = vector.broadcast %773 : vector<1x128xf32> to vector<8x128xf32>
    %778 = arith.mulf %777, %735 : vector<8x128xf32>
    %779 = arith.subf %711, %778 : vector<8x128xf32>
    %780 = vector.extract_strided_slice %715 {offsets = [2, 0], sizes = [1, 128], strides = [1, 1]} : vector<8x128xf32> to vector<1x128xf32>
    %781 = vector.broadcast %780 : vector<1x128xf32> to vector<8x128xf32>
    %782 = arith.mulf %781, %733 : vector<8x128xf32>
    %783 = arith.subf %715, %782 : vector<8x128xf32>
    %784 = vector.broadcast %780 : vector<1x128xf32> to vector<8x128xf32>
    %785 = arith.mulf %784, %735 : vector<8x128xf32>
    %786 = arith.subf %718, %785 : vector<8x128xf32>
    %787 = vector.extract_strided_slice %722 {offsets = [2, 0], sizes = [1, 128], strides = [1, 1]} : vector<8x128xf32> to vector<1x128xf32>
    %788 = vector.broadcast %787 : vector<1x128xf32> to vector<8x128xf32>
    %789 = arith.mulf %788, %733 : vector<8x128xf32>
    %790 = arith.subf %722, %789 : vector<8x128xf32>
    %791 = vector.broadcast %787 : vector<1x128xf32> to vector<8x128xf32>
    %792 = arith.mulf %791, %735 : vector<8x128xf32>
    %793 = arith.subf %725, %792 : vector<8x128xf32>
    %794 = vector.extract_strided_slice %762 {offsets = [3, 0], sizes = [1, 128], strides = [1, 1]} : vector<8x128xf32> to vector<1x128xf32>
    %795 = tpu.reciprocal %794 {approx = true} : vector<1x128xf32> -> vector<1x128xf32>
    %796 = arith.mulf %794, %795 : vector<1x128xf32>
    %cst_74 = arith.constant 2.000000e+00 : f32
    %797 = vector.broadcast %cst_74 : f32 to vector<1x128xf32>
    %798 = arith.subf %797, %796 : vector<1x128xf32>
    %799 = arith.mulf %795, %798 : vector<1x128xf32>
    %800 = vector.broadcast %799 : vector<1x128xf32> to vector<8x128xf32>
    %801 = arith.mulf %762, %800 : vector<8x128xf32>
    %802 = vector.broadcast %799 : vector<1x128xf32> to vector<8x128xf32>
    %803 = arith.mulf %765, %802 : vector<8x128xf32>
    %804 = vector.extract_strided_slice %739 {offsets = [3, 0], sizes = [1, 128], strides = [1, 1]} : vector<8x128xf32> to vector<1x128xf32>
    %805 = vector.broadcast %804 : vector<1x128xf32> to vector<8x128xf32>
    %806 = arith.mulf %805, %801 : vector<8x128xf32>
    %807 = arith.subf %739, %806 : vector<8x128xf32>
    %808 = vector.broadcast %804 : vector<1x128xf32> to vector<8x128xf32>
    %809 = arith.mulf %808, %803 : vector<8x128xf32>
    %810 = arith.subf %742, %809 : vector<8x128xf32>
    %811 = vector.extract_strided_slice %746 {offsets = [3, 0], sizes = [1, 128], strides = [1, 1]} : vector<8x128xf32> to vector<1x128xf32>
    %812 = vector.broadcast %811 : vector<1x128xf32> to vector<8x128xf32>
    %813 = arith.mulf %812, %801 : vector<8x128xf32>
    %814 = arith.subf %746, %813 : vector<8x128xf32>
    %815 = vector.broadcast %811 : vector<1x128xf32> to vector<8x128xf32>
    %816 = arith.mulf %815, %803 : vector<8x128xf32>
    %817 = arith.subf %749, %816 : vector<8x128xf32>
    %818 = vector.extract_strided_slice %755 {offsets = [3, 0], sizes = [1, 128], strides = [1, 1]} : vector<8x128xf32> to vector<1x128xf32>
    %819 = vector.broadcast %818 : vector<1x128xf32> to vector<8x128xf32>
    %820 = arith.mulf %819, %801 : vector<8x128xf32>
    %821 = arith.subf %755, %820 : vector<8x128xf32>
    %822 = vector.broadcast %818 : vector<1x128xf32> to vector<8x128xf32>
    %823 = arith.mulf %822, %803 : vector<8x128xf32>
    %824 = arith.subf %758, %823 : vector<8x128xf32>
    %825 = vector.extract_strided_slice %762 {offsets = [3, 0], sizes = [1, 128], strides = [1, 1]} : vector<8x128xf32> to vector<1x128xf32>
    %cst_75 = arith.constant 1.000000e+00 : f32
    %826 = vector.broadcast %cst_75 : f32 to vector<1x128xf32>
    %827 = arith.subf %825, %826 : vector<1x128xf32>
    %828 = vector.broadcast %827 : vector<1x128xf32> to vector<8x128xf32>
    %829 = arith.mulf %828, %801 : vector<8x128xf32>
    %830 = arith.subf %762, %829 : vector<8x128xf32>
    %831 = vector.broadcast %827 : vector<1x128xf32> to vector<8x128xf32>
    %832 = arith.mulf %831, %803 : vector<8x128xf32>
    %833 = arith.subf %765, %832 : vector<8x128xf32>
    %834 = vector.extract_strided_slice %769 {offsets = [3, 0], sizes = [1, 128], strides = [1, 1]} : vector<8x128xf32> to vector<1x128xf32>
    %835 = vector.broadcast %834 : vector<1x128xf32> to vector<8x128xf32>
    %836 = arith.mulf %835, %801 : vector<8x128xf32>
    %837 = arith.subf %769, %836 : vector<8x128xf32>
    %838 = vector.broadcast %834 : vector<1x128xf32> to vector<8x128xf32>
    %839 = arith.mulf %838, %803 : vector<8x128xf32>
    %840 = arith.subf %772, %839 : vector<8x128xf32>
    %841 = vector.extract_strided_slice %776 {offsets = [3, 0], sizes = [1, 128], strides = [1, 1]} : vector<8x128xf32> to vector<1x128xf32>
    %842 = vector.broadcast %841 : vector<1x128xf32> to vector<8x128xf32>
    %843 = arith.mulf %842, %801 : vector<8x128xf32>
    %844 = arith.subf %776, %843 : vector<8x128xf32>
    %845 = vector.broadcast %841 : vector<1x128xf32> to vector<8x128xf32>
    %846 = arith.mulf %845, %803 : vector<8x128xf32>
    %847 = arith.subf %779, %846 : vector<8x128xf32>
    %848 = vector.extract_strided_slice %783 {offsets = [3, 0], sizes = [1, 128], strides = [1, 1]} : vector<8x128xf32> to vector<1x128xf32>
    %849 = vector.broadcast %848 : vector<1x128xf32> to vector<8x128xf32>
    %850 = arith.mulf %849, %801 : vector<8x128xf32>
    %851 = arith.subf %783, %850 : vector<8x128xf32>
    %852 = vector.broadcast %848 : vector<1x128xf32> to vector<8x128xf32>
    %853 = arith.mulf %852, %803 : vector<8x128xf32>
    %854 = arith.subf %786, %853 : vector<8x128xf32>
    %855 = vector.extract_strided_slice %790 {offsets = [3, 0], sizes = [1, 128], strides = [1, 1]} : vector<8x128xf32> to vector<1x128xf32>
    %856 = vector.broadcast %855 : vector<1x128xf32> to vector<8x128xf32>
    %857 = arith.mulf %856, %801 : vector<8x128xf32>
    %858 = arith.subf %790, %857 : vector<8x128xf32>
    %859 = vector.broadcast %855 : vector<1x128xf32> to vector<8x128xf32>
    %860 = arith.mulf %859, %803 : vector<8x128xf32>
    %861 = arith.subf %793, %860 : vector<8x128xf32>
    %862 = vector.extract_strided_slice %837 {offsets = [4, 0], sizes = [1, 128], strides = [1, 1]} : vector<8x128xf32> to vector<1x128xf32>
    %863 = tpu.reciprocal %862 {approx = true} : vector<1x128xf32> -> vector<1x128xf32>
    %864 = arith.mulf %862, %863 : vector<1x128xf32>
    %cst_76 = arith.constant 2.000000e+00 : f32
    %865 = vector.broadcast %cst_76 : f32 to vector<1x128xf32>
    %866 = arith.subf %865, %864 : vector<1x128xf32>
    %867 = arith.mulf %863, %866 : vector<1x128xf32>
    %868 = vector.broadcast %867 : vector<1x128xf32> to vector<8x128xf32>
    %869 = arith.mulf %837, %868 : vector<8x128xf32>
    %870 = vector.broadcast %867 : vector<1x128xf32> to vector<8x128xf32>
    %871 = arith.mulf %840, %870 : vector<8x128xf32>
    %872 = vector.extract_strided_slice %807 {offsets = [4, 0], sizes = [1, 128], strides = [1, 1]} : vector<8x128xf32> to vector<1x128xf32>
    %873 = vector.broadcast %872 : vector<1x128xf32> to vector<8x128xf32>
    %874 = arith.mulf %873, %869 : vector<8x128xf32>
    %875 = arith.subf %807, %874 : vector<8x128xf32>
    %876 = vector.broadcast %872 : vector<1x128xf32> to vector<8x128xf32>
    %877 = arith.mulf %876, %871 : vector<8x128xf32>
    %878 = arith.subf %810, %877 : vector<8x128xf32>
    %879 = vector.extract_strided_slice %814 {offsets = [4, 0], sizes = [1, 128], strides = [1, 1]} : vector<8x128xf32> to vector<1x128xf32>
    %880 = vector.broadcast %879 : vector<1x128xf32> to vector<8x128xf32>
    %881 = arith.mulf %880, %869 : vector<8x128xf32>
    %882 = arith.subf %814, %881 : vector<8x128xf32>
    %883 = vector.broadcast %879 : vector<1x128xf32> to vector<8x128xf32>
    %884 = arith.mulf %883, %871 : vector<8x128xf32>
    %885 = arith.subf %817, %884 : vector<8x128xf32>
    %886 = vector.extract_strided_slice %821 {offsets = [4, 0], sizes = [1, 128], strides = [1, 1]} : vector<8x128xf32> to vector<1x128xf32>
    %887 = vector.broadcast %886 : vector<1x128xf32> to vector<8x128xf32>
    %888 = arith.mulf %887, %869 : vector<8x128xf32>
    %889 = arith.subf %821, %888 : vector<8x128xf32>
    %890 = vector.broadcast %886 : vector<1x128xf32> to vector<8x128xf32>
    %891 = arith.mulf %890, %871 : vector<8x128xf32>
    %892 = arith.subf %824, %891 : vector<8x128xf32>
    %893 = vector.extract_strided_slice %830 {offsets = [4, 0], sizes = [1, 128], strides = [1, 1]} : vector<8x128xf32> to vector<1x128xf32>
    %894 = vector.broadcast %893 : vector<1x128xf32> to vector<8x128xf32>
    %895 = arith.mulf %894, %869 : vector<8x128xf32>
    %896 = arith.subf %830, %895 : vector<8x128xf32>
    %897 = vector.broadcast %893 : vector<1x128xf32> to vector<8x128xf32>
    %898 = arith.mulf %897, %871 : vector<8x128xf32>
    %899 = arith.subf %833, %898 : vector<8x128xf32>
    %900 = vector.extract_strided_slice %837 {offsets = [4, 0], sizes = [1, 128], strides = [1, 1]} : vector<8x128xf32> to vector<1x128xf32>
    %cst_77 = arith.constant 1.000000e+00 : f32
    %901 = vector.broadcast %cst_77 : f32 to vector<1x128xf32>
    %902 = arith.subf %900, %901 : vector<1x128xf32>
    %903 = vector.broadcast %902 : vector<1x128xf32> to vector<8x128xf32>
    %904 = arith.mulf %903, %869 : vector<8x128xf32>
    %905 = arith.subf %837, %904 : vector<8x128xf32>
    %906 = vector.broadcast %902 : vector<1x128xf32> to vector<8x128xf32>
    %907 = arith.mulf %906, %871 : vector<8x128xf32>
    %908 = arith.subf %840, %907 : vector<8x128xf32>
    %909 = vector.extract_strided_slice %844 {offsets = [4, 0], sizes = [1, 128], strides = [1, 1]} : vector<8x128xf32> to vector<1x128xf32>
    %910 = vector.broadcast %909 : vector<1x128xf32> to vector<8x128xf32>
    %911 = arith.mulf %910, %869 : vector<8x128xf32>
    %912 = arith.subf %844, %911 : vector<8x128xf32>
    %913 = vector.broadcast %909 : vector<1x128xf32> to vector<8x128xf32>
    %914 = arith.mulf %913, %871 : vector<8x128xf32>
    %915 = arith.subf %847, %914 : vector<8x128xf32>
    %916 = vector.extract_strided_slice %851 {offsets = [4, 0], sizes = [1, 128], strides = [1, 1]} : vector<8x128xf32> to vector<1x128xf32>
    %917 = vector.broadcast %916 : vector<1x128xf32> to vector<8x128xf32>
    %918 = arith.mulf %917, %869 : vector<8x128xf32>
    %919 = arith.subf %851, %918 : vector<8x128xf32>
    %920 = vector.broadcast %916 : vector<1x128xf32> to vector<8x128xf32>
    %921 = arith.mulf %920, %871 : vector<8x128xf32>
    %922 = arith.subf %854, %921 : vector<8x128xf32>
    %923 = vector.extract_strided_slice %858 {offsets = [4, 0], sizes = [1, 128], strides = [1, 1]} : vector<8x128xf32> to vector<1x128xf32>
    %924 = vector.broadcast %923 : vector<1x128xf32> to vector<8x128xf32>
    %925 = arith.mulf %924, %869 : vector<8x128xf32>
    %926 = arith.subf %858, %925 : vector<8x128xf32>
    %927 = vector.broadcast %923 : vector<1x128xf32> to vector<8x128xf32>
    %928 = arith.mulf %927, %871 : vector<8x128xf32>
    %929 = arith.subf %861, %928 : vector<8x128xf32>
    %930 = vector.extract_strided_slice %912 {offsets = [5, 0], sizes = [1, 128], strides = [1, 1]} : vector<8x128xf32> to vector<1x128xf32>
    %931 = tpu.reciprocal %930 {approx = true} : vector<1x128xf32> -> vector<1x128xf32>
    %932 = arith.mulf %930, %931 : vector<1x128xf32>
    %cst_78 = arith.constant 2.000000e+00 : f32
    %933 = vector.broadcast %cst_78 : f32 to vector<1x128xf32>
    %934 = arith.subf %933, %932 : vector<1x128xf32>
    %935 = arith.mulf %931, %934 : vector<1x128xf32>
    %936 = vector.broadcast %935 : vector<1x128xf32> to vector<8x128xf32>
    %937 = arith.mulf %912, %936 : vector<8x128xf32>
    %938 = vector.broadcast %935 : vector<1x128xf32> to vector<8x128xf32>
    %939 = arith.mulf %915, %938 : vector<8x128xf32>
    %940 = vector.extract_strided_slice %875 {offsets = [5, 0], sizes = [1, 128], strides = [1, 1]} : vector<8x128xf32> to vector<1x128xf32>
    %941 = vector.broadcast %940 : vector<1x128xf32> to vector<8x128xf32>
    %942 = arith.mulf %941, %937 : vector<8x128xf32>
    %943 = arith.subf %875, %942 : vector<8x128xf32>
    %944 = vector.broadcast %940 : vector<1x128xf32> to vector<8x128xf32>
    %945 = arith.mulf %944, %939 : vector<8x128xf32>
    %946 = arith.subf %878, %945 : vector<8x128xf32>
    %947 = vector.extract_strided_slice %882 {offsets = [5, 0], sizes = [1, 128], strides = [1, 1]} : vector<8x128xf32> to vector<1x128xf32>
    %948 = vector.broadcast %947 : vector<1x128xf32> to vector<8x128xf32>
    %949 = arith.mulf %948, %937 : vector<8x128xf32>
    %950 = arith.subf %882, %949 : vector<8x128xf32>
    %951 = vector.broadcast %947 : vector<1x128xf32> to vector<8x128xf32>
    %952 = arith.mulf %951, %939 : vector<8x128xf32>
    %953 = arith.subf %885, %952 : vector<8x128xf32>
    %954 = vector.extract_strided_slice %889 {offsets = [5, 0], sizes = [1, 128], strides = [1, 1]} : vector<8x128xf32> to vector<1x128xf32>
    %955 = vector.broadcast %954 : vector<1x128xf32> to vector<8x128xf32>
    %956 = arith.mulf %955, %937 : vector<8x128xf32>
    %957 = arith.subf %889, %956 : vector<8x128xf32>
    %958 = vector.broadcast %954 : vector<1x128xf32> to vector<8x128xf32>
    %959 = arith.mulf %958, %939 : vector<8x128xf32>
    %960 = arith.subf %892, %959 : vector<8x128xf32>
    %961 = vector.extract_strided_slice %896 {offsets = [5, 0], sizes = [1, 128], strides = [1, 1]} : vector<8x128xf32> to vector<1x128xf32>
    %962 = vector.broadcast %961 : vector<1x128xf32> to vector<8x128xf32>
    %963 = arith.mulf %962, %937 : vector<8x128xf32>
    %964 = arith.subf %896, %963 : vector<8x128xf32>
    %965 = vector.broadcast %961 : vector<1x128xf32> to vector<8x128xf32>
    %966 = arith.mulf %965, %939 : vector<8x128xf32>
    %967 = arith.subf %899, %966 : vector<8x128xf32>
    %968 = vector.extract_strided_slice %905 {offsets = [5, 0], sizes = [1, 128], strides = [1, 1]} : vector<8x128xf32> to vector<1x128xf32>
    %969 = vector.broadcast %968 : vector<1x128xf32> to vector<8x128xf32>
    %970 = arith.mulf %969, %937 : vector<8x128xf32>
    %971 = arith.subf %905, %970 : vector<8x128xf32>
    %972 = vector.broadcast %968 : vector<1x128xf32> to vector<8x128xf32>
    %973 = arith.mulf %972, %939 : vector<8x128xf32>
    %974 = arith.subf %908, %973 : vector<8x128xf32>
    %975 = vector.extract_strided_slice %912 {offsets = [5, 0], sizes = [1, 128], strides = [1, 1]} : vector<8x128xf32> to vector<1x128xf32>
    %cst_79 = arith.constant 1.000000e+00 : f32
    %976 = vector.broadcast %cst_79 : f32 to vector<1x128xf32>
    %977 = arith.subf %975, %976 : vector<1x128xf32>
    %978 = vector.broadcast %977 : vector<1x128xf32> to vector<8x128xf32>
    %979 = arith.mulf %978, %937 : vector<8x128xf32>
    %980 = arith.subf %912, %979 : vector<8x128xf32>
    %981 = vector.broadcast %977 : vector<1x128xf32> to vector<8x128xf32>
    %982 = arith.mulf %981, %939 : vector<8x128xf32>
    %983 = arith.subf %915, %982 : vector<8x128xf32>
    %984 = vector.extract_strided_slice %919 {offsets = [5, 0], sizes = [1, 128], strides = [1, 1]} : vector<8x128xf32> to vector<1x128xf32>
    %985 = vector.broadcast %984 : vector<1x128xf32> to vector<8x128xf32>
    %986 = arith.mulf %985, %937 : vector<8x128xf32>
    %987 = arith.subf %919, %986 : vector<8x128xf32>
    %988 = vector.broadcast %984 : vector<1x128xf32> to vector<8x128xf32>
    %989 = arith.mulf %988, %939 : vector<8x128xf32>
    %990 = arith.subf %922, %989 : vector<8x128xf32>
    %991 = vector.extract_strided_slice %926 {offsets = [5, 0], sizes = [1, 128], strides = [1, 1]} : vector<8x128xf32> to vector<1x128xf32>
    %992 = vector.broadcast %991 : vector<1x128xf32> to vector<8x128xf32>
    %993 = arith.mulf %992, %937 : vector<8x128xf32>
    %994 = arith.subf %926, %993 : vector<8x128xf32>
    %995 = vector.broadcast %991 : vector<1x128xf32> to vector<8x128xf32>
    %996 = arith.mulf %995, %939 : vector<8x128xf32>
    %997 = arith.subf %929, %996 : vector<8x128xf32>
    %998 = vector.extract_strided_slice %987 {offsets = [6, 0], sizes = [1, 128], strides = [1, 1]} : vector<8x128xf32> to vector<1x128xf32>
    %999 = tpu.reciprocal %998 {approx = true} : vector<1x128xf32> -> vector<1x128xf32>
    %1000 = arith.mulf %998, %999 : vector<1x128xf32>
    %cst_80 = arith.constant 2.000000e+00 : f32
    %1001 = vector.broadcast %cst_80 : f32 to vector<1x128xf32>
    %1002 = arith.subf %1001, %1000 : vector<1x128xf32>
    %1003 = arith.mulf %999, %1002 : vector<1x128xf32>
    %1004 = vector.broadcast %1003 : vector<1x128xf32> to vector<8x128xf32>
    %1005 = arith.mulf %987, %1004 : vector<8x128xf32>
    %1006 = vector.broadcast %1003 : vector<1x128xf32> to vector<8x128xf32>
    %1007 = arith.mulf %990, %1006 : vector<8x128xf32>
    %1008 = vector.extract_strided_slice %943 {offsets = [6, 0], sizes = [1, 128], strides = [1, 1]} : vector<8x128xf32> to vector<1x128xf32>
    %1009 = vector.broadcast %1008 : vector<1x128xf32> to vector<8x128xf32>
    %1010 = arith.mulf %1009, %1005 : vector<8x128xf32>
    %1011 = arith.subf %943, %1010 : vector<8x128xf32>
    %1012 = vector.broadcast %1008 : vector<1x128xf32> to vector<8x128xf32>
    %1013 = arith.mulf %1012, %1007 : vector<8x128xf32>
    %1014 = arith.subf %946, %1013 : vector<8x128xf32>
    %1015 = vector.extract_strided_slice %950 {offsets = [6, 0], sizes = [1, 128], strides = [1, 1]} : vector<8x128xf32> to vector<1x128xf32>
    %1016 = vector.broadcast %1015 : vector<1x128xf32> to vector<8x128xf32>
    %1017 = arith.mulf %1016, %1005 : vector<8x128xf32>
    %1018 = arith.subf %950, %1017 : vector<8x128xf32>
    %1019 = vector.broadcast %1015 : vector<1x128xf32> to vector<8x128xf32>
    %1020 = arith.mulf %1019, %1007 : vector<8x128xf32>
    %1021 = arith.subf %953, %1020 : vector<8x128xf32>
    %1022 = vector.extract_strided_slice %957 {offsets = [6, 0], sizes = [1, 128], strides = [1, 1]} : vector<8x128xf32> to vector<1x128xf32>
    %1023 = vector.broadcast %1022 : vector<1x128xf32> to vector<8x128xf32>
    %1024 = arith.mulf %1023, %1005 : vector<8x128xf32>
    %1025 = arith.subf %957, %1024 : vector<8x128xf32>
    %1026 = vector.broadcast %1022 : vector<1x128xf32> to vector<8x128xf32>
    %1027 = arith.mulf %1026, %1007 : vector<8x128xf32>
    %1028 = arith.subf %960, %1027 : vector<8x128xf32>
    %1029 = vector.extract_strided_slice %964 {offsets = [6, 0], sizes = [1, 128], strides = [1, 1]} : vector<8x128xf32> to vector<1x128xf32>
    %1030 = vector.broadcast %1029 : vector<1x128xf32> to vector<8x128xf32>
    %1031 = arith.mulf %1030, %1005 : vector<8x128xf32>
    %1032 = arith.subf %964, %1031 : vector<8x128xf32>
    %1033 = vector.broadcast %1029 : vector<1x128xf32> to vector<8x128xf32>
    %1034 = arith.mulf %1033, %1007 : vector<8x128xf32>
    %1035 = arith.subf %967, %1034 : vector<8x128xf32>
    %1036 = vector.extract_strided_slice %971 {offsets = [6, 0], sizes = [1, 128], strides = [1, 1]} : vector<8x128xf32> to vector<1x128xf32>
    %1037 = vector.broadcast %1036 : vector<1x128xf32> to vector<8x128xf32>
    %1038 = arith.mulf %1037, %1005 : vector<8x128xf32>
    %1039 = arith.subf %971, %1038 : vector<8x128xf32>
    %1040 = vector.broadcast %1036 : vector<1x128xf32> to vector<8x128xf32>
    %1041 = arith.mulf %1040, %1007 : vector<8x128xf32>
    %1042 = arith.subf %974, %1041 : vector<8x128xf32>
    %1043 = vector.extract_strided_slice %980 {offsets = [6, 0], sizes = [1, 128], strides = [1, 1]} : vector<8x128xf32> to vector<1x128xf32>
    %1044 = vector.broadcast %1043 : vector<1x128xf32> to vector<8x128xf32>
    %1045 = arith.mulf %1044, %1005 : vector<8x128xf32>
    %1046 = arith.subf %980, %1045 : vector<8x128xf32>
    %1047 = vector.broadcast %1043 : vector<1x128xf32> to vector<8x128xf32>
    %1048 = arith.mulf %1047, %1007 : vector<8x128xf32>
    %1049 = arith.subf %983, %1048 : vector<8x128xf32>
    %1050 = vector.extract_strided_slice %987 {offsets = [6, 0], sizes = [1, 128], strides = [1, 1]} : vector<8x128xf32> to vector<1x128xf32>
    %cst_81 = arith.constant 1.000000e+00 : f32
    %1051 = vector.broadcast %cst_81 : f32 to vector<1x128xf32>
    %1052 = arith.subf %1050, %1051 : vector<1x128xf32>
    %1053 = vector.broadcast %1052 : vector<1x128xf32> to vector<8x128xf32>
    %1054 = arith.mulf %1053, %1005 : vector<8x128xf32>
    %1055 = arith.subf %987, %1054 : vector<8x128xf32>
    %1056 = vector.broadcast %1052 : vector<1x128xf32> to vector<8x128xf32>
    %1057 = arith.mulf %1056, %1007 : vector<8x128xf32>
    %1058 = arith.subf %990, %1057 : vector<8x128xf32>
    %1059 = vector.extract_strided_slice %994 {offsets = [6, 0], sizes = [1, 128], strides = [1, 1]} : vector<8x128xf32> to vector<1x128xf32>
    %1060 = vector.broadcast %1059 : vector<1x128xf32> to vector<8x128xf32>
    %1061 = arith.mulf %1060, %1005 : vector<8x128xf32>
    %1062 = arith.subf %994, %1061 : vector<8x128xf32>
    %1063 = vector.broadcast %1059 : vector<1x128xf32> to vector<8x128xf32>
    %1064 = arith.mulf %1063, %1007 : vector<8x128xf32>
    %1065 = arith.subf %997, %1064 : vector<8x128xf32>
    %1066 = vector.extract_strided_slice %1062 {offsets = [7, 0], sizes = [1, 128], strides = [1, 1]} : vector<8x128xf32> to vector<1x128xf32>
    %1067 = tpu.reciprocal %1066 {approx = true} : vector<1x128xf32> -> vector<1x128xf32>
    %1068 = arith.mulf %1066, %1067 : vector<1x128xf32>
    %cst_82 = arith.constant 2.000000e+00 : f32
    %1069 = vector.broadcast %cst_82 : f32 to vector<1x128xf32>
    %1070 = arith.subf %1069, %1068 : vector<1x128xf32>
    %1071 = arith.mulf %1067, %1070 : vector<1x128xf32>
    %1072 = vector.broadcast %1071 : vector<1x128xf32> to vector<8x128xf32>
    %1073 = arith.mulf %1065, %1072 : vector<8x128xf32>
    %1074 = vector.extract_strided_slice %1011 {offsets = [7, 0], sizes = [1, 128], strides = [1, 1]} : vector<8x128xf32> to vector<1x128xf32>
    %1075 = vector.broadcast %1074 : vector<1x128xf32> to vector<8x128xf32>
    %1076 = arith.mulf %1075, %1073 : vector<8x128xf32>
    %1077 = arith.subf %1014, %1076 : vector<8x128xf32>
    %1078 = vector.extract_strided_slice %1018 {offsets = [7, 0], sizes = [1, 128], strides = [1, 1]} : vector<8x128xf32> to vector<1x128xf32>
    %1079 = vector.broadcast %1078 : vector<1x128xf32> to vector<8x128xf32>
    %1080 = arith.mulf %1079, %1073 : vector<8x128xf32>
    %1081 = arith.subf %1021, %1080 : vector<8x128xf32>
    %1082 = vector.extract_strided_slice %1025 {offsets = [7, 0], sizes = [1, 128], strides = [1, 1]} : vector<8x128xf32> to vector<1x128xf32>
    %1083 = vector.broadcast %1082 : vector<1x128xf32> to vector<8x128xf32>
    %1084 = arith.mulf %1083, %1073 : vector<8x128xf32>
    %1085 = arith.subf %1028, %1084 : vector<8x128xf32>
    %1086 = vector.extract_strided_slice %1032 {offsets = [7, 0], sizes = [1, 128], strides = [1, 1]} : vector<8x128xf32> to vector<1x128xf32>
    %1087 = vector.broadcast %1086 : vector<1x128xf32> to vector<8x128xf32>
    %1088 = arith.mulf %1087, %1073 : vector<8x128xf32>
    %1089 = arith.subf %1035, %1088 : vector<8x128xf32>
    %1090 = vector.extract_strided_slice %1039 {offsets = [7, 0], sizes = [1, 128], strides = [1, 1]} : vector<8x128xf32> to vector<1x128xf32>
    %1091 = vector.broadcast %1090 : vector<1x128xf32> to vector<8x128xf32>
    %1092 = arith.mulf %1091, %1073 : vector<8x128xf32>
    %1093 = arith.subf %1042, %1092 : vector<8x128xf32>
    %1094 = vector.extract_strided_slice %1046 {offsets = [7, 0], sizes = [1, 128], strides = [1, 1]} : vector<8x128xf32> to vector<1x128xf32>
    %1095 = vector.broadcast %1094 : vector<1x128xf32> to vector<8x128xf32>
    %1096 = arith.mulf %1095, %1073 : vector<8x128xf32>
    %1097 = arith.subf %1049, %1096 : vector<8x128xf32>
    %1098 = vector.extract_strided_slice %1055 {offsets = [7, 0], sizes = [1, 128], strides = [1, 1]} : vector<8x128xf32> to vector<1x128xf32>
    %1099 = vector.broadcast %1098 : vector<1x128xf32> to vector<8x128xf32>
    %1100 = arith.mulf %1099, %1073 : vector<8x128xf32>
    %1101 = arith.subf %1058, %1100 : vector<8x128xf32>
    %1102 = vector.extract_strided_slice %1062 {offsets = [7, 0], sizes = [1, 128], strides = [1, 1]} : vector<8x128xf32> to vector<1x128xf32>
    %cst_83 = arith.constant 1.000000e+00 : f32
    %1103 = vector.broadcast %cst_83 : f32 to vector<1x128xf32>
    %1104 = arith.subf %1102, %1103 : vector<1x128xf32>
    %1105 = vector.broadcast %1104 : vector<1x128xf32> to vector<8x128xf32>
    %1106 = arith.mulf %1105, %1073 : vector<8x128xf32>
    %1107 = arith.subf %1065, %1106 : vector<8x128xf32>
    %1108 = vector.extract_strided_slice %1077 {offsets = [0, 0], sizes = [1, 128], strides = [1, 1]} : vector<8x128xf32> to vector<1x128xf32>
    %1109 = vector.broadcast %53 : vector<8x1xf32> to vector<8x128xf32>
    %1110 = vector.broadcast %1108 : vector<1x128xf32> to vector<8x128xf32>
    %1111 = arith.mulf %1109, %1110 : vector<8x128xf32>
    %1112 = vector.extract_strided_slice %1081 {offsets = [1, 0], sizes = [1, 128], strides = [1, 1]} : vector<8x128xf32> to vector<1x128xf32>
    %1113 = vector.broadcast %57 : vector<8x1xf32> to vector<8x128xf32>
    %1114 = vector.broadcast %1112 : vector<1x128xf32> to vector<8x128xf32>
    %1115 = arith.mulf %1113, %1114 : vector<8x128xf32>
    %1116 = arith.addf %1111, %1115 : vector<8x128xf32>
    %1117 = vector.extract_strided_slice %1085 {offsets = [2, 0], sizes = [1, 128], strides = [1, 1]} : vector<8x128xf32> to vector<1x128xf32>
    %1118 = vector.broadcast %61 : vector<8x1xf32> to vector<8x128xf32>
    %1119 = vector.broadcast %1117 : vector<1x128xf32> to vector<8x128xf32>
    %1120 = arith.mulf %1118, %1119 : vector<8x128xf32>
    %1121 = arith.addf %1116, %1120 : vector<8x128xf32>
    %1122 = vector.extract_strided_slice %1089 {offsets = [3, 0], sizes = [1, 128], strides = [1, 1]} : vector<8x128xf32> to vector<1x128xf32>
    %1123 = vector.broadcast %65 : vector<8x1xf32> to vector<8x128xf32>
    %1124 = vector.broadcast %1122 : vector<1x128xf32> to vector<8x128xf32>
    %1125 = arith.mulf %1123, %1124 : vector<8x128xf32>
    %1126 = arith.addf %1121, %1125 : vector<8x128xf32>
    %1127 = vector.extract_strided_slice %1093 {offsets = [4, 0], sizes = [1, 128], strides = [1, 1]} : vector<8x128xf32> to vector<1x128xf32>
    %1128 = vector.broadcast %69 : vector<8x1xf32> to vector<8x128xf32>
    %1129 = vector.broadcast %1127 : vector<1x128xf32> to vector<8x128xf32>
    %1130 = arith.mulf %1128, %1129 : vector<8x128xf32>
    %1131 = arith.addf %1126, %1130 : vector<8x128xf32>
    %1132 = vector.extract_strided_slice %1097 {offsets = [5, 0], sizes = [1, 128], strides = [1, 1]} : vector<8x128xf32> to vector<1x128xf32>
    %1133 = vector.broadcast %73 : vector<8x1xf32> to vector<8x128xf32>
    %1134 = vector.broadcast %1132 : vector<1x128xf32> to vector<8x128xf32>
    %1135 = arith.mulf %1133, %1134 : vector<8x128xf32>
    %1136 = arith.addf %1131, %1135 : vector<8x128xf32>
    %1137 = vector.extract_strided_slice %1101 {offsets = [6, 0], sizes = [1, 128], strides = [1, 1]} : vector<8x128xf32> to vector<1x128xf32>
    %1138 = vector.broadcast %77 : vector<8x1xf32> to vector<8x128xf32>
    %1139 = vector.broadcast %1137 : vector<1x128xf32> to vector<8x128xf32>
    %1140 = arith.mulf %1138, %1139 : vector<8x128xf32>
    %1141 = arith.addf %1136, %1140 : vector<8x128xf32>
    %1142 = vector.extract_strided_slice %1107 {offsets = [7, 0], sizes = [1, 128], strides = [1, 1]} : vector<8x128xf32> to vector<1x128xf32>
    %1143 = vector.broadcast %81 : vector<8x1xf32> to vector<8x128xf32>
    %1144 = vector.broadcast %1142 : vector<1x128xf32> to vector<8x128xf32>
    %1145 = arith.mulf %1143, %1144 : vector<8x128xf32>
    %1146 = arith.addf %1141, %1145 : vector<8x128xf32>
    %cst_84 = arith.constant 1.000000e+00 : f32
    %1147 = vector.broadcast %cst_84 : f32 to vector<8x1xf32>
    %1148 = arith.subf %1147, %53 : vector<8x1xf32>
    %cst_85 = arith.constant 0.000000e+00 : f32
    %1149 = vector.broadcast %cst_85 : f32 to vector<8x1xf32>
    %1150 = arith.subf %1149, %53 : vector<8x1xf32>
    %1151 = arith.mulf %1146, %136 : vector<8x128xf32>
    %1152 = vector.broadcast %1148 : vector<8x1xf32> to vector<8x128xf32>
    %1153 = arith.mulf %1152, %1151 : vector<8x128xf32>
    %1154 = arith.mulf %1146, %191 : vector<8x128xf32>
    %1155 = vector.broadcast %1150 : vector<8x1xf32> to vector<8x128xf32>
    %1156 = arith.mulf %1155, %1154 : vector<8x128xf32>
    %1157 = arith.mulf %1146, %246 : vector<8x128xf32>
    %1158 = vector.broadcast %1150 : vector<8x1xf32> to vector<8x128xf32>
    %1159 = arith.mulf %1158, %1157 : vector<8x128xf32>
    %1160 = arith.mulf %1146, %301 : vector<8x128xf32>
    %1161 = vector.broadcast %1150 : vector<8x1xf32> to vector<8x128xf32>
    %1162 = arith.mulf %1161, %1160 : vector<8x128xf32>
    %1163 = arith.mulf %1146, %356 : vector<8x128xf32>
    %1164 = vector.broadcast %1150 : vector<8x1xf32> to vector<8x128xf32>
    %1165 = arith.mulf %1164, %1163 : vector<8x128xf32>
    %1166 = arith.mulf %1146, %411 : vector<8x128xf32>
    %1167 = vector.broadcast %1150 : vector<8x1xf32> to vector<8x128xf32>
    %1168 = arith.mulf %1167, %1166 : vector<8x128xf32>
    %1169 = arith.mulf %1146, %466 : vector<8x128xf32>
    %1170 = vector.broadcast %1150 : vector<8x1xf32> to vector<8x128xf32>
    %1171 = arith.mulf %1170, %1169 : vector<8x128xf32>
    %1172 = arith.mulf %1146, %521 : vector<8x128xf32>
    %1173 = vector.broadcast %1150 : vector<8x1xf32> to vector<8x128xf32>
    %1174 = arith.mulf %1173, %1172 : vector<8x128xf32>
    %c0_86 = arith.constant 0 : index
    %c0_87 = arith.constant 0 : index
    %1175 = vector.load %arg9[%c0_86, %c0_87] : memref<16x1xf32, #tpu.memory_space<vmem>>, vector<16x1xf32>
    %1176 = vector.extract_strided_slice %1077 {offsets = [0, 0], sizes = [1, 128], strides = [1, 1]} : vector<8x128xf32> to vector<1x128xf32>
    %1177 = arith.mulf %33, %1176 : vector<1x128xf32>
    %1178 = vector.broadcast %1175 : vector<16x1xf32> to vector<16x128xf32>
    %1179 = vector.broadcast %1177 : vector<1x128xf32> to vector<16x128xf32>
    %1180 = arith.mulf %1178, %1179 : vector<16x128xf32>
    %1181 = vector.extract_strided_slice %1153 {offsets = [0, 0], sizes = [1, 128], strides = [1, 1]} : vector<8x128xf32> to vector<1x128xf32>
    %1182 = vector.broadcast %1181 : vector<1x128xf32> to vector<16x128xf32>
    %1183 = arith.mulf %41, %1182 : vector<16x128xf32>
    %1184 = arith.addf %1180, %1183 : vector<16x128xf32>
    %1185 = vector.extract_strided_slice %1156 {offsets = [0, 0], sizes = [1, 128], strides = [1, 1]} : vector<8x128xf32> to vector<1x128xf32>
    %1186 = vector.broadcast %1185 : vector<1x128xf32> to vector<16x128xf32>
    %1187 = arith.mulf %42, %1186 : vector<16x128xf32>
    %1188 = arith.addf %1184, %1187 : vector<16x128xf32>
    %1189 = vector.extract_strided_slice %1159 {offsets = [0, 0], sizes = [1, 128], strides = [1, 1]} : vector<8x128xf32> to vector<1x128xf32>
    %1190 = vector.broadcast %1189 : vector<1x128xf32> to vector<16x128xf32>
    %1191 = arith.mulf %43, %1190 : vector<16x128xf32>
    %1192 = arith.addf %1188, %1191 : vector<16x128xf32>
    %1193 = vector.extract_strided_slice %1162 {offsets = [0, 0], sizes = [1, 128], strides = [1, 1]} : vector<8x128xf32> to vector<1x128xf32>
    %1194 = vector.broadcast %1193 : vector<1x128xf32> to vector<16x128xf32>
    %1195 = arith.mulf %44, %1194 : vector<16x128xf32>
    %1196 = arith.addf %1192, %1195 : vector<16x128xf32>
    %1197 = vector.extract_strided_slice %1165 {offsets = [0, 0], sizes = [1, 128], strides = [1, 1]} : vector<8x128xf32> to vector<1x128xf32>
    %1198 = vector.broadcast %1197 : vector<1x128xf32> to vector<16x128xf32>
    %1199 = arith.mulf %45, %1198 : vector<16x128xf32>
    %1200 = arith.addf %1196, %1199 : vector<16x128xf32>
    %1201 = vector.extract_strided_slice %1168 {offsets = [0, 0], sizes = [1, 128], strides = [1, 1]} : vector<8x128xf32> to vector<1x128xf32>
    %1202 = vector.broadcast %1201 : vector<1x128xf32> to vector<16x128xf32>
    %1203 = arith.mulf %46, %1202 : vector<16x128xf32>
    %1204 = arith.addf %1200, %1203 : vector<16x128xf32>
    %1205 = vector.extract_strided_slice %1171 {offsets = [0, 0], sizes = [1, 128], strides = [1, 1]} : vector<8x128xf32> to vector<1x128xf32>
    %1206 = vector.broadcast %1205 : vector<1x128xf32> to vector<16x128xf32>
    %1207 = arith.mulf %47, %1206 : vector<16x128xf32>
    %1208 = arith.addf %1204, %1207 : vector<16x128xf32>
    %1209 = vector.extract_strided_slice %1174 {offsets = [0, 0], sizes = [1, 128], strides = [1, 1]} : vector<8x128xf32> to vector<1x128xf32>
    %1210 = vector.broadcast %1209 : vector<1x128xf32> to vector<16x128xf32>
    %1211 = arith.mulf %48, %1210 : vector<16x128xf32>
    %1212 = arith.addf %1208, %1211 : vector<16x128xf32>
    %1213 = vector.extract_strided_slice %1081 {offsets = [0, 0], sizes = [1, 128], strides = [1, 1]} : vector<8x128xf32> to vector<1x128xf32>
    %1214 = arith.mulf %34, %1213 : vector<1x128xf32>
    %1215 = vector.broadcast %1175 : vector<16x1xf32> to vector<16x128xf32>
    %1216 = vector.broadcast %1214 : vector<1x128xf32> to vector<16x128xf32>
    %1217 = arith.mulf %1215, %1216 : vector<16x128xf32>
    %1218 = vector.extract_strided_slice %1153 {offsets = [1, 0], sizes = [1, 128], strides = [1, 1]} : vector<8x128xf32> to vector<1x128xf32>
    %1219 = vector.broadcast %1218 : vector<1x128xf32> to vector<16x128xf32>
    %1220 = arith.mulf %41, %1219 : vector<16x128xf32>
    %1221 = arith.addf %1217, %1220 : vector<16x128xf32>
    %1222 = vector.extract_strided_slice %1156 {offsets = [1, 0], sizes = [1, 128], strides = [1, 1]} : vector<8x128xf32> to vector<1x128xf32>
    %1223 = vector.broadcast %1222 : vector<1x128xf32> to vector<16x128xf32>
    %1224 = arith.mulf %42, %1223 : vector<16x128xf32>
    %1225 = arith.addf %1221, %1224 : vector<16x128xf32>
    %1226 = vector.extract_strided_slice %1159 {offsets = [1, 0], sizes = [1, 128], strides = [1, 1]} : vector<8x128xf32> to vector<1x128xf32>
    %1227 = vector.broadcast %1226 : vector<1x128xf32> to vector<16x128xf32>
    %1228 = arith.mulf %43, %1227 : vector<16x128xf32>
    %1229 = arith.addf %1225, %1228 : vector<16x128xf32>
    %1230 = vector.extract_strided_slice %1162 {offsets = [1, 0], sizes = [1, 128], strides = [1, 1]} : vector<8x128xf32> to vector<1x128xf32>
    %1231 = vector.broadcast %1230 : vector<1x128xf32> to vector<16x128xf32>
    %1232 = arith.mulf %44, %1231 : vector<16x128xf32>
    %1233 = arith.addf %1229, %1232 : vector<16x128xf32>
    %1234 = vector.extract_strided_slice %1165 {offsets = [1, 0], sizes = [1, 128], strides = [1, 1]} : vector<8x128xf32> to vector<1x128xf32>
    %1235 = vector.broadcast %1234 : vector<1x128xf32> to vector<16x128xf32>
    %1236 = arith.mulf %45, %1235 : vector<16x128xf32>
    %1237 = arith.addf %1233, %1236 : vector<16x128xf32>
    %1238 = vector.extract_strided_slice %1168 {offsets = [1, 0], sizes = [1, 128], strides = [1, 1]} : vector<8x128xf32> to vector<1x128xf32>
    %1239 = vector.broadcast %1238 : vector<1x128xf32> to vector<16x128xf32>
    %1240 = arith.mulf %46, %1239 : vector<16x128xf32>
    %1241 = arith.addf %1237, %1240 : vector<16x128xf32>
    %1242 = vector.extract_strided_slice %1171 {offsets = [1, 0], sizes = [1, 128], strides = [1, 1]} : vector<8x128xf32> to vector<1x128xf32>
    %1243 = vector.broadcast %1242 : vector<1x128xf32> to vector<16x128xf32>
    %1244 = arith.mulf %47, %1243 : vector<16x128xf32>
    %1245 = arith.addf %1241, %1244 : vector<16x128xf32>
    %1246 = vector.extract_strided_slice %1174 {offsets = [1, 0], sizes = [1, 128], strides = [1, 1]} : vector<8x128xf32> to vector<1x128xf32>
    %1247 = vector.broadcast %1246 : vector<1x128xf32> to vector<16x128xf32>
    %1248 = arith.mulf %48, %1247 : vector<16x128xf32>
    %1249 = arith.addf %1245, %1248 : vector<16x128xf32>
    %1250 = vector.extract_strided_slice %1085 {offsets = [0, 0], sizes = [1, 128], strides = [1, 1]} : vector<8x128xf32> to vector<1x128xf32>
    %1251 = arith.mulf %35, %1250 : vector<1x128xf32>
    %1252 = vector.broadcast %1175 : vector<16x1xf32> to vector<16x128xf32>
    %1253 = vector.broadcast %1251 : vector<1x128xf32> to vector<16x128xf32>
    %1254 = arith.mulf %1252, %1253 : vector<16x128xf32>
    %1255 = vector.extract_strided_slice %1153 {offsets = [2, 0], sizes = [1, 128], strides = [1, 1]} : vector<8x128xf32> to vector<1x128xf32>
    %1256 = vector.broadcast %1255 : vector<1x128xf32> to vector<16x128xf32>
    %1257 = arith.mulf %41, %1256 : vector<16x128xf32>
    %1258 = arith.addf %1254, %1257 : vector<16x128xf32>
    %1259 = vector.extract_strided_slice %1156 {offsets = [2, 0], sizes = [1, 128], strides = [1, 1]} : vector<8x128xf32> to vector<1x128xf32>
    %1260 = vector.broadcast %1259 : vector<1x128xf32> to vector<16x128xf32>
    %1261 = arith.mulf %42, %1260 : vector<16x128xf32>
    %1262 = arith.addf %1258, %1261 : vector<16x128xf32>
    %1263 = vector.extract_strided_slice %1159 {offsets = [2, 0], sizes = [1, 128], strides = [1, 1]} : vector<8x128xf32> to vector<1x128xf32>
    %1264 = vector.broadcast %1263 : vector<1x128xf32> to vector<16x128xf32>
    %1265 = arith.mulf %43, %1264 : vector<16x128xf32>
    %1266 = arith.addf %1262, %1265 : vector<16x128xf32>
    %1267 = vector.extract_strided_slice %1162 {offsets = [2, 0], sizes = [1, 128], strides = [1, 1]} : vector<8x128xf32> to vector<1x128xf32>
    %1268 = vector.broadcast %1267 : vector<1x128xf32> to vector<16x128xf32>
    %1269 = arith.mulf %44, %1268 : vector<16x128xf32>
    %1270 = arith.addf %1266, %1269 : vector<16x128xf32>
    %1271 = vector.extract_strided_slice %1165 {offsets = [2, 0], sizes = [1, 128], strides = [1, 1]} : vector<8x128xf32> to vector<1x128xf32>
    %1272 = vector.broadcast %1271 : vector<1x128xf32> to vector<16x128xf32>
    %1273 = arith.mulf %45, %1272 : vector<16x128xf32>
    %1274 = arith.addf %1270, %1273 : vector<16x128xf32>
    %1275 = vector.extract_strided_slice %1168 {offsets = [2, 0], sizes = [1, 128], strides = [1, 1]} : vector<8x128xf32> to vector<1x128xf32>
    %1276 = vector.broadcast %1275 : vector<1x128xf32> to vector<16x128xf32>
    %1277 = arith.mulf %46, %1276 : vector<16x128xf32>
    %1278 = arith.addf %1274, %1277 : vector<16x128xf32>
    %1279 = vector.extract_strided_slice %1171 {offsets = [2, 0], sizes = [1, 128], strides = [1, 1]} : vector<8x128xf32> to vector<1x128xf32>
    %1280 = vector.broadcast %1279 : vector<1x128xf32> to vector<16x128xf32>
    %1281 = arith.mulf %47, %1280 : vector<16x128xf32>
    %1282 = arith.addf %1278, %1281 : vector<16x128xf32>
    %1283 = vector.extract_strided_slice %1174 {offsets = [2, 0], sizes = [1, 128], strides = [1, 1]} : vector<8x128xf32> to vector<1x128xf32>
    %1284 = vector.broadcast %1283 : vector<1x128xf32> to vector<16x128xf32>
    %1285 = arith.mulf %48, %1284 : vector<16x128xf32>
    %1286 = arith.addf %1282, %1285 : vector<16x128xf32>
    %1287 = vector.extract_strided_slice %1089 {offsets = [0, 0], sizes = [1, 128], strides = [1, 1]} : vector<8x128xf32> to vector<1x128xf32>
    %1288 = arith.mulf %36, %1287 : vector<1x128xf32>
    %1289 = vector.broadcast %1175 : vector<16x1xf32> to vector<16x128xf32>
    %1290 = vector.broadcast %1288 : vector<1x128xf32> to vector<16x128xf32>
    %1291 = arith.mulf %1289, %1290 : vector<16x128xf32>
    %1292 = vector.extract_strided_slice %1153 {offsets = [3, 0], sizes = [1, 128], strides = [1, 1]} : vector<8x128xf32> to vector<1x128xf32>
    %1293 = vector.broadcast %1292 : vector<1x128xf32> to vector<16x128xf32>
    %1294 = arith.mulf %41, %1293 : vector<16x128xf32>
    %1295 = arith.addf %1291, %1294 : vector<16x128xf32>
    %1296 = vector.extract_strided_slice %1156 {offsets = [3, 0], sizes = [1, 128], strides = [1, 1]} : vector<8x128xf32> to vector<1x128xf32>
    %1297 = vector.broadcast %1296 : vector<1x128xf32> to vector<16x128xf32>
    %1298 = arith.mulf %42, %1297 : vector<16x128xf32>
    %1299 = arith.addf %1295, %1298 : vector<16x128xf32>
    %1300 = vector.extract_strided_slice %1159 {offsets = [3, 0], sizes = [1, 128], strides = [1, 1]} : vector<8x128xf32> to vector<1x128xf32>
    %1301 = vector.broadcast %1300 : vector<1x128xf32> to vector<16x128xf32>
    %1302 = arith.mulf %43, %1301 : vector<16x128xf32>
    %1303 = arith.addf %1299, %1302 : vector<16x128xf32>
    %1304 = vector.extract_strided_slice %1162 {offsets = [3, 0], sizes = [1, 128], strides = [1, 1]} : vector<8x128xf32> to vector<1x128xf32>
    %1305 = vector.broadcast %1304 : vector<1x128xf32> to vector<16x128xf32>
    %1306 = arith.mulf %44, %1305 : vector<16x128xf32>
    %1307 = arith.addf %1303, %1306 : vector<16x128xf32>
    %1308 = vector.extract_strided_slice %1165 {offsets = [3, 0], sizes = [1, 128], strides = [1, 1]} : vector<8x128xf32> to vector<1x128xf32>
    %1309 = vector.broadcast %1308 : vector<1x128xf32> to vector<16x128xf32>
    %1310 = arith.mulf %45, %1309 : vector<16x128xf32>
    %1311 = arith.addf %1307, %1310 : vector<16x128xf32>
    %1312 = vector.extract_strided_slice %1168 {offsets = [3, 0], sizes = [1, 128], strides = [1, 1]} : vector<8x128xf32> to vector<1x128xf32>
    %1313 = vector.broadcast %1312 : vector<1x128xf32> to vector<16x128xf32>
    %1314 = arith.mulf %46, %1313 : vector<16x128xf32>
    %1315 = arith.addf %1311, %1314 : vector<16x128xf32>
    %1316 = vector.extract_strided_slice %1171 {offsets = [3, 0], sizes = [1, 128], strides = [1, 1]} : vector<8x128xf32> to vector<1x128xf32>
    %1317 = vector.broadcast %1316 : vector<1x128xf32> to vector<16x128xf32>
    %1318 = arith.mulf %47, %1317 : vector<16x128xf32>
    %1319 = arith.addf %1315, %1318 : vector<16x128xf32>
    %1320 = vector.extract_strided_slice %1174 {offsets = [3, 0], sizes = [1, 128], strides = [1, 1]} : vector<8x128xf32> to vector<1x128xf32>
    %1321 = vector.broadcast %1320 : vector<1x128xf32> to vector<16x128xf32>
    %1322 = arith.mulf %48, %1321 : vector<16x128xf32>
    %1323 = arith.addf %1319, %1322 : vector<16x128xf32>
    %1324 = vector.extract_strided_slice %1093 {offsets = [0, 0], sizes = [1, 128], strides = [1, 1]} : vector<8x128xf32> to vector<1x128xf32>
    %1325 = arith.mulf %37, %1324 : vector<1x128xf32>
    %1326 = vector.broadcast %1175 : vector<16x1xf32> to vector<16x128xf32>
    %1327 = vector.broadcast %1325 : vector<1x128xf32> to vector<16x128xf32>
    %1328 = arith.mulf %1326, %1327 : vector<16x128xf32>
    %1329 = vector.extract_strided_slice %1153 {offsets = [4, 0], sizes = [1, 128], strides = [1, 1]} : vector<8x128xf32> to vector<1x128xf32>
    %1330 = vector.broadcast %1329 : vector<1x128xf32> to vector<16x128xf32>
    %1331 = arith.mulf %41, %1330 : vector<16x128xf32>
    %1332 = arith.addf %1328, %1331 : vector<16x128xf32>
    %1333 = vector.extract_strided_slice %1156 {offsets = [4, 0], sizes = [1, 128], strides = [1, 1]} : vector<8x128xf32> to vector<1x128xf32>
    %1334 = vector.broadcast %1333 : vector<1x128xf32> to vector<16x128xf32>
    %1335 = arith.mulf %42, %1334 : vector<16x128xf32>
    %1336 = arith.addf %1332, %1335 : vector<16x128xf32>
    %1337 = vector.extract_strided_slice %1159 {offsets = [4, 0], sizes = [1, 128], strides = [1, 1]} : vector<8x128xf32> to vector<1x128xf32>
    %1338 = vector.broadcast %1337 : vector<1x128xf32> to vector<16x128xf32>
    %1339 = arith.mulf %43, %1338 : vector<16x128xf32>
    %1340 = arith.addf %1336, %1339 : vector<16x128xf32>
    %1341 = vector.extract_strided_slice %1162 {offsets = [4, 0], sizes = [1, 128], strides = [1, 1]} : vector<8x128xf32> to vector<1x128xf32>
    %1342 = vector.broadcast %1341 : vector<1x128xf32> to vector<16x128xf32>
    %1343 = arith.mulf %44, %1342 : vector<16x128xf32>
    %1344 = arith.addf %1340, %1343 : vector<16x128xf32>
    %1345 = vector.extract_strided_slice %1165 {offsets = [4, 0], sizes = [1, 128], strides = [1, 1]} : vector<8x128xf32> to vector<1x128xf32>
    %1346 = vector.broadcast %1345 : vector<1x128xf32> to vector<16x128xf32>
    %1347 = arith.mulf %45, %1346 : vector<16x128xf32>
    %1348 = arith.addf %1344, %1347 : vector<16x128xf32>
    %1349 = vector.extract_strided_slice %1168 {offsets = [4, 0], sizes = [1, 128], strides = [1, 1]} : vector<8x128xf32> to vector<1x128xf32>
    %1350 = vector.broadcast %1349 : vector<1x128xf32> to vector<16x128xf32>
    %1351 = arith.mulf %46, %1350 : vector<16x128xf32>
    %1352 = arith.addf %1348, %1351 : vector<16x128xf32>
    %1353 = vector.extract_strided_slice %1171 {offsets = [4, 0], sizes = [1, 128], strides = [1, 1]} : vector<8x128xf32> to vector<1x128xf32>
    %1354 = vector.broadcast %1353 : vector<1x128xf32> to vector<16x128xf32>
    %1355 = arith.mulf %47, %1354 : vector<16x128xf32>
    %1356 = arith.addf %1352, %1355 : vector<16x128xf32>
    %1357 = vector.extract_strided_slice %1174 {offsets = [4, 0], sizes = [1, 128], strides = [1, 1]} : vector<8x128xf32> to vector<1x128xf32>
    %1358 = vector.broadcast %1357 : vector<1x128xf32> to vector<16x128xf32>
    %1359 = arith.mulf %48, %1358 : vector<16x128xf32>
    %1360 = arith.addf %1356, %1359 : vector<16x128xf32>
    %1361 = vector.extract_strided_slice %1097 {offsets = [0, 0], sizes = [1, 128], strides = [1, 1]} : vector<8x128xf32> to vector<1x128xf32>
    %1362 = arith.mulf %38, %1361 : vector<1x128xf32>
    %1363 = vector.broadcast %1175 : vector<16x1xf32> to vector<16x128xf32>
    %1364 = vector.broadcast %1362 : vector<1x128xf32> to vector<16x128xf32>
    %1365 = arith.mulf %1363, %1364 : vector<16x128xf32>
    %1366 = vector.extract_strided_slice %1153 {offsets = [5, 0], sizes = [1, 128], strides = [1, 1]} : vector<8x128xf32> to vector<1x128xf32>
    %1367 = vector.broadcast %1366 : vector<1x128xf32> to vector<16x128xf32>
    %1368 = arith.mulf %41, %1367 : vector<16x128xf32>
    %1369 = arith.addf %1365, %1368 : vector<16x128xf32>
    %1370 = vector.extract_strided_slice %1156 {offsets = [5, 0], sizes = [1, 128], strides = [1, 1]} : vector<8x128xf32> to vector<1x128xf32>
    %1371 = vector.broadcast %1370 : vector<1x128xf32> to vector<16x128xf32>
    %1372 = arith.mulf %42, %1371 : vector<16x128xf32>
    %1373 = arith.addf %1369, %1372 : vector<16x128xf32>
    %1374 = vector.extract_strided_slice %1159 {offsets = [5, 0], sizes = [1, 128], strides = [1, 1]} : vector<8x128xf32> to vector<1x128xf32>
    %1375 = vector.broadcast %1374 : vector<1x128xf32> to vector<16x128xf32>
    %1376 = arith.mulf %43, %1375 : vector<16x128xf32>
    %1377 = arith.addf %1373, %1376 : vector<16x128xf32>
    %1378 = vector.extract_strided_slice %1162 {offsets = [5, 0], sizes = [1, 128], strides = [1, 1]} : vector<8x128xf32> to vector<1x128xf32>
    %1379 = vector.broadcast %1378 : vector<1x128xf32> to vector<16x128xf32>
    %1380 = arith.mulf %44, %1379 : vector<16x128xf32>
    %1381 = arith.addf %1377, %1380 : vector<16x128xf32>
    %1382 = vector.extract_strided_slice %1165 {offsets = [5, 0], sizes = [1, 128], strides = [1, 1]} : vector<8x128xf32> to vector<1x128xf32>
    %1383 = vector.broadcast %1382 : vector<1x128xf32> to vector<16x128xf32>
    %1384 = arith.mulf %45, %1383 : vector<16x128xf32>
    %1385 = arith.addf %1381, %1384 : vector<16x128xf32>
    %1386 = vector.extract_strided_slice %1168 {offsets = [5, 0], sizes = [1, 128], strides = [1, 1]} : vector<8x128xf32> to vector<1x128xf32>
    %1387 = vector.broadcast %1386 : vector<1x128xf32> to vector<16x128xf32>
    %1388 = arith.mulf %46, %1387 : vector<16x128xf32>
    %1389 = arith.addf %1385, %1388 : vector<16x128xf32>
    %1390 = vector.extract_strided_slice %1171 {offsets = [5, 0], sizes = [1, 128], strides = [1, 1]} : vector<8x128xf32> to vector<1x128xf32>
    %1391 = vector.broadcast %1390 : vector<1x128xf32> to vector<16x128xf32>
    %1392 = arith.mulf %47, %1391 : vector<16x128xf32>
    %1393 = arith.addf %1389, %1392 : vector<16x128xf32>
    %1394 = vector.extract_strided_slice %1174 {offsets = [5, 0], sizes = [1, 128], strides = [1, 1]} : vector<8x128xf32> to vector<1x128xf32>
    %1395 = vector.broadcast %1394 : vector<1x128xf32> to vector<16x128xf32>
    %1396 = arith.mulf %48, %1395 : vector<16x128xf32>
    %1397 = arith.addf %1393, %1396 : vector<16x128xf32>
    %1398 = vector.extract_strided_slice %1101 {offsets = [0, 0], sizes = [1, 128], strides = [1, 1]} : vector<8x128xf32> to vector<1x128xf32>
    %1399 = arith.mulf %39, %1398 : vector<1x128xf32>
    %1400 = vector.broadcast %1175 : vector<16x1xf32> to vector<16x128xf32>
    %1401 = vector.broadcast %1399 : vector<1x128xf32> to vector<16x128xf32>
    %1402 = arith.mulf %1400, %1401 : vector<16x128xf32>
    %1403 = vector.extract_strided_slice %1153 {offsets = [6, 0], sizes = [1, 128], strides = [1, 1]} : vector<8x128xf32> to vector<1x128xf32>
    %1404 = vector.broadcast %1403 : vector<1x128xf32> to vector<16x128xf32>
    %1405 = arith.mulf %41, %1404 : vector<16x128xf32>
    %1406 = arith.addf %1402, %1405 : vector<16x128xf32>
    %1407 = vector.extract_strided_slice %1156 {offsets = [6, 0], sizes = [1, 128], strides = [1, 1]} : vector<8x128xf32> to vector<1x128xf32>
    %1408 = vector.broadcast %1407 : vector<1x128xf32> to vector<16x128xf32>
    %1409 = arith.mulf %42, %1408 : vector<16x128xf32>
    %1410 = arith.addf %1406, %1409 : vector<16x128xf32>
    %1411 = vector.extract_strided_slice %1159 {offsets = [6, 0], sizes = [1, 128], strides = [1, 1]} : vector<8x128xf32> to vector<1x128xf32>
    %1412 = vector.broadcast %1411 : vector<1x128xf32> to vector<16x128xf32>
    %1413 = arith.mulf %43, %1412 : vector<16x128xf32>
    %1414 = arith.addf %1410, %1413 : vector<16x128xf32>
    %1415 = vector.extract_strided_slice %1162 {offsets = [6, 0], sizes = [1, 128], strides = [1, 1]} : vector<8x128xf32> to vector<1x128xf32>
    %1416 = vector.broadcast %1415 : vector<1x128xf32> to vector<16x128xf32>
    %1417 = arith.mulf %44, %1416 : vector<16x128xf32>
    %1418 = arith.addf %1414, %1417 : vector<16x128xf32>
    %1419 = vector.extract_strided_slice %1165 {offsets = [6, 0], sizes = [1, 128], strides = [1, 1]} : vector<8x128xf32> to vector<1x128xf32>
    %1420 = vector.broadcast %1419 : vector<1x128xf32> to vector<16x128xf32>
    %1421 = arith.mulf %45, %1420 : vector<16x128xf32>
    %1422 = arith.addf %1418, %1421 : vector<16x128xf32>
    %1423 = vector.extract_strided_slice %1168 {offsets = [6, 0], sizes = [1, 128], strides = [1, 1]} : vector<8x128xf32> to vector<1x128xf32>
    %1424 = vector.broadcast %1423 : vector<1x128xf32> to vector<16x128xf32>
    %1425 = arith.mulf %46, %1424 : vector<16x128xf32>
    %1426 = arith.addf %1422, %1425 : vector<16x128xf32>
    %1427 = vector.extract_strided_slice %1171 {offsets = [6, 0], sizes = [1, 128], strides = [1, 1]} : vector<8x128xf32> to vector<1x128xf32>
    %1428 = vector.broadcast %1427 : vector<1x128xf32> to vector<16x128xf32>
    %1429 = arith.mulf %47, %1428 : vector<16x128xf32>
    %1430 = arith.addf %1426, %1429 : vector<16x128xf32>
    %1431 = vector.extract_strided_slice %1174 {offsets = [6, 0], sizes = [1, 128], strides = [1, 1]} : vector<8x128xf32> to vector<1x128xf32>
    %1432 = vector.broadcast %1431 : vector<1x128xf32> to vector<16x128xf32>
    %1433 = arith.mulf %48, %1432 : vector<16x128xf32>
    %1434 = arith.addf %1430, %1433 : vector<16x128xf32>
    %1435 = vector.extract_strided_slice %1107 {offsets = [0, 0], sizes = [1, 128], strides = [1, 1]} : vector<8x128xf32> to vector<1x128xf32>
    %1436 = arith.mulf %40, %1435 : vector<1x128xf32>
    %1437 = vector.broadcast %1175 : vector<16x1xf32> to vector<16x128xf32>
    %1438 = vector.broadcast %1436 : vector<1x128xf32> to vector<16x128xf32>
    %1439 = arith.mulf %1437, %1438 : vector<16x128xf32>
    %1440 = vector.extract_strided_slice %1153 {offsets = [7, 0], sizes = [1, 128], strides = [1, 1]} : vector<8x128xf32> to vector<1x128xf32>
    %1441 = vector.broadcast %1440 : vector<1x128xf32> to vector<16x128xf32>
    %1442 = arith.mulf %41, %1441 : vector<16x128xf32>
    %1443 = arith.addf %1439, %1442 : vector<16x128xf32>
    %1444 = vector.extract_strided_slice %1156 {offsets = [7, 0], sizes = [1, 128], strides = [1, 1]} : vector<8x128xf32> to vector<1x128xf32>
    %1445 = vector.broadcast %1444 : vector<1x128xf32> to vector<16x128xf32>
    %1446 = arith.mulf %42, %1445 : vector<16x128xf32>
    %1447 = arith.addf %1443, %1446 : vector<16x128xf32>
    %1448 = vector.extract_strided_slice %1159 {offsets = [7, 0], sizes = [1, 128], strides = [1, 1]} : vector<8x128xf32> to vector<1x128xf32>
    %1449 = vector.broadcast %1448 : vector<1x128xf32> to vector<16x128xf32>
    %1450 = arith.mulf %43, %1449 : vector<16x128xf32>
    %1451 = arith.addf %1447, %1450 : vector<16x128xf32>
    %1452 = vector.extract_strided_slice %1162 {offsets = [7, 0], sizes = [1, 128], strides = [1, 1]} : vector<8x128xf32> to vector<1x128xf32>
    %1453 = vector.broadcast %1452 : vector<1x128xf32> to vector<16x128xf32>
    %1454 = arith.mulf %44, %1453 : vector<16x128xf32>
    %1455 = arith.addf %1451, %1454 : vector<16x128xf32>
    %1456 = vector.extract_strided_slice %1165 {offsets = [7, 0], sizes = [1, 128], strides = [1, 1]} : vector<8x128xf32> to vector<1x128xf32>
    %1457 = vector.broadcast %1456 : vector<1x128xf32> to vector<16x128xf32>
    %1458 = arith.mulf %45, %1457 : vector<16x128xf32>
    %1459 = arith.addf %1455, %1458 : vector<16x128xf32>
    %1460 = vector.extract_strided_slice %1168 {offsets = [7, 0], sizes = [1, 128], strides = [1, 1]} : vector<8x128xf32> to vector<1x128xf32>
    %1461 = vector.broadcast %1460 : vector<1x128xf32> to vector<16x128xf32>
    %1462 = arith.mulf %46, %1461 : vector<16x128xf32>
    %1463 = arith.addf %1459, %1462 : vector<16x128xf32>
    %1464 = vector.extract_strided_slice %1171 {offsets = [7, 0], sizes = [1, 128], strides = [1, 1]} : vector<8x128xf32> to vector<1x128xf32>
    %1465 = vector.broadcast %1464 : vector<1x128xf32> to vector<16x128xf32>
    %1466 = arith.mulf %47, %1465 : vector<16x128xf32>
    %1467 = arith.addf %1463, %1466 : vector<16x128xf32>
    %1468 = vector.extract_strided_slice %1174 {offsets = [7, 0], sizes = [1, 128], strides = [1, 1]} : vector<8x128xf32> to vector<1x128xf32>
    %1469 = vector.broadcast %1468 : vector<1x128xf32> to vector<16x128xf32>
    %1470 = arith.mulf %48, %1469 : vector<16x128xf32>
    %1471 = arith.addf %1467, %1470 : vector<16x128xf32>
    %1472 = tpu.concatenate %1212, %1249, %1286, %1323, %1360, %1397, %1434, %1471 in 1 : vector<16x128xf32>, vector<16x128xf32>, vector<16x128xf32>, vector<16x128xf32>, vector<16x128xf32>, vector<16x128xf32>, vector<16x128xf32>, vector<16x128xf32> -> vector<16x1024xf32>
    %c0_88 = arith.constant 0 : index
    %c0_89 = arith.constant 0 : index
    %1473 = vector.load %arg6[%c0_88, %c0_89] : memref<16x16xf32, #tpu.memory_space<vmem>>, vector<16x16xf32>
    %cst_90 = arith.constant dense<0.000000e+00> : vector<16x1024xf32>
    %1474 = tpu.matmul %1473, %3, %cst_90 {dimension_numbers = #tpu.dot_dimension_numbers<[1], [0], [0], [1], [0, 0, 1, 1], [], []>} : vector<16x16xf32>, vector<16x1024xf32>, vector<16x1024xf32> -> vector<16x1024xf32>
    %c0_91 = arith.constant 0 : index
    %c0_92 = arith.constant 0 : index
    %1475 = vector.load %arg7[%c0_91, %c0_92] : memref<16x16xf32, #tpu.memory_space<vmem>>, vector<16x16xf32>
    %cst_93 = arith.constant dense<0.000000e+00> : vector<16x1024xf32>
    %1476 = tpu.matmul %1475, %1472, %cst_93 {dimension_numbers = #tpu.dot_dimension_numbers<[1], [0], [0], [1], [0, 0, 1, 1], [], []>} : vector<16x16xf32>, vector<16x1024xf32>, vector<16x1024xf32> -> vector<16x1024xf32>
    %1477 = arith.addf %1474, %1476 : vector<16x1024xf32>
    %c0_94 = arith.constant 0 : index
    %c0_95 = arith.constant 0 : index
    %1478 = vector.load %arg8[%c0_94, %c0_95] : memref<16x1xf32, #tpu.memory_space<vmem>>, vector<16x1xf32>
    %1479 = vector.broadcast %1478 : vector<16x1xf32> to vector<16x1024xf32>
    %1480 = arith.addf %1477, %1479 : vector<16x1024xf32>
    %cst_96 = arith.constant 0.000000e+00 : f32
    %1481 = vector.broadcast %cst_96 : f32 to vector<16x1024xf32>
    %1482 = arith.maximumf %1480, %1481 : vector<16x1024xf32>
    %c0_97 = arith.constant 0 : index
    %c0_98 = arith.constant 0 : index
    %c0_99 = arith.constant 0 : index
    %1483 = vector.load %arg10[%c0_97, %c0_98, %c0_99] : memref<1x16x1024xf32, #tpu.memory_space<vmem>>, vector<1x16x1024xf32>
    %1484 = vector.shape_cast %1483 : vector<1x16x1024xf32> to vector<16x1024xf32>
    %1485 = vector.shape_cast %1482 : vector<16x1024xf32> to vector<1x16x1024xf32>
    tpu.vector_store %arg10[%c0_97, %c0_98, %c0_99], %1485 {strides = array<i32>} : memref<1x16x1024xf32, #tpu.memory_space<vmem>>, vector<1x16x1024xf32>,
    return
  }
  func.func @transform_0(%arg0: i32) -> (i32, i32, i32) {
    %c0_i32 = arith.constant 0 : i32
    %c0_i32_0 = arith.constant 0 : i32
    %c0_i32_1 = arith.constant 0 : i32
    return %arg0, %c0_i32, %c0_i32_0 : i32, i32, i32
  }
  func.func @transform_1(%arg0: i32) -> (i32, i32, i32) {
    %c0_i32 = arith.constant 0 : i32
    %c0_i32_0 = arith.constant 0 : i32
    %c0_i32_1 = arith.constant 0 : i32
    return %arg0, %c0_i32, %c0_i32_0 : i32, i32, i32
  }
  func.func @transform_2(%arg0: i32) -> (i32, i32) {
    %c0_i32 = arith.constant 0 : i32
    %c0_i32_0 = arith.constant 0 : i32
    %c0_i32_1 = arith.constant 0 : i32
    return %c0_i32, %c0_i32_0 : i32, i32
  }
  func.func @transform_3(%arg0: i32) -> (i32, i32) {
    %c0_i32 = arith.constant 0 : i32
    %c0_i32_0 = arith.constant 0 : i32
    %c0_i32_1 = arith.constant 0 : i32
    return %c0_i32, %c0_i32_0 : i32, i32
  }
  func.func @transform_4(%arg0: i32) -> (i32, i32) {
    %c0_i32 = arith.constant 0 : i32
    %c0_i32_0 = arith.constant 0 : i32
    %c0_i32_1 = arith.constant 0 : i32
    return %c0_i32, %c0_i32_0 : i32, i32
  }
  func.func @transform_5(%arg0: i32) -> (i32, i32) {
    %c0_i32 = arith.constant 0 : i32
    %c0_i32_0 = arith.constant 0 : i32
    %c0_i32_1 = arith.constant 0 : i32
    return %c0_i32, %c0_i32_0 : i32, i32
  }
  func.func @transform_6(%arg0: i32) -> (i32, i32) {
    %c0_i32 = arith.constant 0 : i32
    %c0_i32_0 = arith.constant 0 : i32
    %c0_i32_1 = arith.constant 0 : i32
    return %c0_i32, %c0_i32_0 : i32, i32
  }
  func.func @transform_7(%arg0: i32) -> (i32, i32) {
    %c0_i32 = arith.constant 0 : i32
    %c0_i32_0 = arith.constant 0 : i32
    %c0_i32_1 = arith.constant 0 : i32
    return %c0_i32, %c0_i32_0 : i32, i32
  }
  func.func @transform_8(%arg0: i32) -> (i32, i32) {
    %c0_i32 = arith.constant 0 : i32
    %c0_i32_0 = arith.constant 0 : i32
    %c0_i32_1 = arith.constant 0 : i32
    return %c0_i32, %c0_i32_0 : i32, i32
  }
  func.func @transform_9(%arg0: i32) -> (i32, i32, i32) {
    %c0_i32 = arith.constant 0 : i32
    %c0_i32_0 = arith.constant 0 : i32
    %c0_i32_1 = arith.constant 0 : i32
    return %arg0, %c0_i32, %c0_i32_0 : i32, i32, i32
  }
}

</mosaic_0001>

<llo_original>
// kernel: tpu_custom_call.1
$region0: #{tpu_custom_call.1}
  #allocation0 [shape = 'u32[]', space=smem, size = 0x4, offset = 0x4, fixed_abs, tag = 'smem constant byte address 0x4 - core index']
  #allocation1 [shape = 'u32[144,128]{1,0:T(1,128)}', space=vmem, size = 0x12000, scoped, tag = 'internal scratch']
  %s0 = inlined_call_operand.vmem [shape: f32[1,16,1024], index: 0, kind: input, shape index: {}]
  %s1 = inlined_call_operand.hbm [shape: f32[1,16,1024], index: 1, kind: input, shape index: {}]
  %s2 = inlined_call_operand.vmem [shape: f32[33,16], index: 2, kind: input, shape index: {}]
  %s3 = inlined_call_operand.vmem [shape: f32[33,1], index: 3, kind: input, shape index: {}]
  %s4 = inlined_call_operand.vmem [shape: f32[16,16], index: 4, kind: input, shape index: {}]
  %s5 = inlined_call_operand.hbm [shape: f32[16,16], index: 5, kind: input, shape index: {}]
  %s6 = inlined_call_operand.hbm [shape: f32[16,16], index: 6, kind: input, shape index: {}]
  %s7 = inlined_call_operand.vmem [shape: f32[16,1], index: 7, kind: input, shape index: {}]
  %s8 = inlined_call_operand.vmem [shape: f32[16,1], index: 8, kind: input, shape index: {}]
  %s9 = inlined_call_operand.hbm [shape: f32[1,16,1024], index: 9, kind: output, shape index: {}]
  %s10 = sld [smem:[#allocation0]]
  $region58: #{tpu_custom_call.1} parent=0
    _
  %s12 = ssub.s32 1, %s10
  %s13 = scalar_select 0, %s12, %s10
  $region1: #{tpu_custom_call.1} parent=0
    #allocation2 [shape = 'u8[65536]{0}', space=vmem, size = 0x10000, scoped, tag = 'input window, operand 1, single buffered']
    #allocation3 [shape = 's32[1]{0}', space=sflag, size = 0x4, scoped, tag = 'scoped memory for tpu_custom_call.1']
    #allocation4 [shape = 's32[1]{0}', space=sflag, size = 0x4, scoped, tag = 'scoped memory for tpu_custom_call.1']
    #allocation5 [shape = 'u8[8192]{0}', space=vmem, size = 0x2000, scoped, tag = 'input window, operand 5, single buffered']
    #allocation6 [shape = 's32[1]{0}', space=sflag, size = 0x4, scoped, tag = 'scoped memory for tpu_custom_call.1']
    #allocation7 [shape = 'u8[8192]{0}', space=vmem, size = 0x2000, scoped, tag = 'input window, operand 6, single buffered']
    #allocation8 [shape = 'u8[65536]{0}', space=vmem, size = 0x10000, scoped, tag = 'output window, operand 0, single buffered']
    %14 = vsyncpa [#allocation3], 0
    %15 = vsyncpa [#allocation6], 0
    %16 = vsyncpa [#allocation4], 0
    // Predicated region
    $region2: #{tpu_custom_call.1} parent=1 // pred_check
      _
    $region3: #{tpu_custom_call.1} parent=1 // pred_check_branch
      %18 = sbr.rel (0) target = $region5
    $region4: #{tpu_custom_call.1} parent=1 // pred_region
      _
    $region5: #{tpu_custom_call.1} parent=1 // pred_fallthru
      _
    // Predicated region
    $region6: #{tpu_custom_call.1} parent=1 // pred_check
      _
    $region7: #{tpu_custom_call.1} parent=1 // pred_check_branch
      %20 = sbr.rel (0) target = $region9
    $region8: #{tpu_custom_call.1} parent=1 // pred_region
      %s22 = ssub.s32 2048, 2048
      %23 = vsyncadd [#allocation3], %s22
      %s24 = sshll.u32 [#allocation2], 4
      %s25 = int_to_ptr.vmem [resolvable:$true] %s24
      %30 = dma.hbm_to_vmem [thread:$0]  %s1, 2048, %s25, [#allocation3], 1024, 1024, 64
    $region9: #{tpu_custom_call.1} parent=1 // pred_fallthru
      _
    // Predicated region
    $region10: #{tpu_custom_call.1} parent=1 // pred_check
      _
    $region11: #{tpu_custom_call.1} parent=1 // pred_check_branch
      %32 = sbr.rel (0) target = $region13
    $region12: #{tpu_custom_call.1} parent=1 // pred_region
      _
    $region13: #{tpu_custom_call.1} parent=1 // pred_fallthru
      _
    // Predicated region
    $region14: #{tpu_custom_call.1} parent=1 // pred_check
      _
    $region15: #{tpu_custom_call.1} parent=1 // pred_check_branch
      %34 = sbr.rel (0) target = $region17
    $region16: #{tpu_custom_call.1} parent=1 // pred_region
      _
    $region17: #{tpu_custom_call.1} parent=1 // pred_fallthru
      _
    // Predicated region
    $region18: #{tpu_custom_call.1} parent=1 // pred_check
      _
    $region19: #{tpu_custom_call.1} parent=1 // pred_check_branch
      %36 = sbr.rel (0) target = $region21
    $region20: #{tpu_custom_call.1} parent=1 // pred_region
      _
    $region21: #{tpu_custom_call.1} parent=1 // pred_fallthru
      _
    // Predicated region
    $region22: #{tpu_custom_call.1} parent=1 // pred_check
      _
    $region23: #{tpu_custom_call.1} parent=1 // pred_check_branch
      %38 = sbr.rel (0) target = $region25
    $region24: #{tpu_custom_call.1} parent=1 // pred_region
      %s40 = ssub.s32 256, 256
      %41 = vsyncadd [#allocation6], %s40
      %s42 = sshll.u32 [#allocation5], 4
      %s43 = int_to_ptr.vmem [resolvable:$true] %s42
      %48 = dma.hbm_to_vmem [thread:$0]  %s5, 256, %s43, [#allocation6], 128, 128, 8
    $region25: #{tpu_custom_call.1} parent=1 // pred_fallthru
      _
    // Predicated region
    $region26: #{tpu_custom_call.1} parent=1 // pred_check
      _
    $region27: #{tpu_custom_call.1} parent=1 // pred_check_branch
      %50 = sbr.rel (0) target = $region29
    $region28: #{tpu_custom_call.1} parent=1 // pred_region
      %s52 = ssub.s32 256, 256
      %53 = vsyncadd [#allocation6], %s52
      %s54 = sshll.u32 [#allocation7], 4
      %s55 = int_to_ptr.vmem [resolvable:$true] %s54
      %60 = dma.hbm_to_vmem [thread:$0]  %s6, 256, %s55, [#allocation6], 128, 128, 8
    $region29: #{tpu_custom_call.1} parent=1 // pred_fallthru
      _
    // Predicated region
    $region30: #{tpu_custom_call.1} parent=1 // pred_check
      _
    $region31: #{tpu_custom_call.1} parent=1 // pred_check_branch
      %62 = sbr.rel (0) target = $region33
    $region32: #{tpu_custom_call.1} parent=1 // pred_region
      _
    $region33: #{tpu_custom_call.1} parent=1 // pred_fallthru
      _
    // Predicated region
    $region34: #{tpu_custom_call.1} parent=1 // pred_check
      _
    $region35: #{tpu_custom_call.1} parent=1 // pred_check_branch
      %64 = sbr.rel (0) target = $region37
    $region36: #{tpu_custom_call.1} parent=1 // pred_region
      _
    $region37: #{tpu_custom_call.1} parent=1 // pred_fallthru
      _
    // Predicated region
    $region38: #{tpu_custom_call.1} parent=1 // pred_check
      _
    $region39: #{tpu_custom_call.1} parent=1 // pred_check_branch
      %66 = sbr.rel (0) target = $region41
    $region40: #{tpu_custom_call.1} parent=1 // pred_region
      %67 = dma.done [#allocation3], 2048
    $region41: #{tpu_custom_call.1} parent=1 // pred_fallthru
      _
    // Predicated region
    $region42: #{tpu_custom_call.1} parent=1 // pred_check
      _
    $region43: #{tpu_custom_call.1} parent=1 // pred_check_branch
      %69 = sbr.rel (0) target = $region45
    $region44: #{tpu_custom_call.1} parent=1 // pred_region
      %70 = dma.done [#allocation6], 256
    $region45: #{tpu_custom_call.1} parent=1 // pred_fallthru
      _
    // Predicated region
    $region46: #{tpu_custom_call.1} parent=1 // pred_check
      _
    $region47: #{tpu_custom_call.1} parent=1 // pred_check_branch
      %72 = sbr.rel (0) target = $region49
    $region48: #{tpu_custom_call.1} parent=1 // pred_region
      %73 = dma.done [#allocation6], 256
    $region49: #{tpu_custom_call.1} parent=1 // pred_fallthru
      _
    %v74 = vld [vmem:[%s0] sm:$0xff]
    %v75 = vld [vmem:[%s0 + $0x8] sm:$0xff]
    %v76 = vld [vmem:[%s0 + $0x10] sm:$0xff]
    %v77 = vld [vmem:[%s0 + $0x18] sm:$0xff]
    %v78 = vld [vmem:[%s0 + $0x20] sm:$0xff]
    %v79 = vld [vmem:[%s0 + $0x28] sm:$0xff]
    %v80 = vld [vmem:[%s0 + $0x30] sm:$0xff]
    %v81 = vld [vmem:[%s0 + $0x38] sm:$0xff]
    %v82 = vld [vmem:[%s0 + $0x40] sm:$0xff]
    %v83 = vld [vmem:[%s0 + $0x48] sm:$0xff]
    %v84 = vld [vmem:[%s0 + $0x50] sm:$0xff]
    %v85 = vld [vmem:[%s0 + $0x58] sm:$0xff]
    %v86 = vld [vmem:[%s0 + $0x60] sm:$0xff]
    %v87 = vld [vmem:[%s0 + $0x68] sm:$0xff]
    %v88 = vld [vmem:[%s0 + $0x70] sm:$0xff]
    %v89 = vld [vmem:[%s0 + $0x78] sm:$0xff]
    %v90 = vld [vmem:[#allocation2] sm:$0xff]
    %v91 = vld [vmem:[#allocation2 + $0x8] sm:$0xff]
    %v92 = vld [vmem:[#allocation2 + $0x10] sm:$0xff]
    %v93 = vld [vmem:[#allocation2 + $0x18] sm:$0xff]
    %v94 = vld [vmem:[#allocation2 + $0x20] sm:$0xff]
    %v95 = vld [vmem:[#allocation2 + $0x28] sm:$0xff]
    %v96 = vld [vmem:[#allocation2 + $0x30] sm:$0xff]
    %v97 = vld [vmem:[#allocation2 + $0x38] sm:$0xff]
    %v98 = vld [vmem:[#allocation2 + $0x40] sm:$0xff]
    %v99 = vld [vmem:[#allocation2 + $0x48] sm:$0xff]
    %v100 = vld [vmem:[#allocation2 + $0x50] sm:$0xff]
    %v101 = vld [vmem:[#allocation2 + $0x58] sm:$0xff]
    %v102 = vld [vmem:[#allocation2 + $0x60] sm:$0xff]
    %v103 = vld [vmem:[#allocation2 + $0x68] sm:$0xff]
    %v104 = vld [vmem:[#allocation2 + $0x70] sm:$0xff]
    %v105 = vld [vmem:[#allocation2 + $0x78] sm:$0xff]
    %v106 = vld [vmem:[%s2] sm:$0xff]
    %v107 = vld [vmem:[%s2 + $0x8] sm:$0xff]
    %v108 = vld [vmem:[%s2 + $0x10] sm:$0xff]
    %v109 = vld [vmem:[%s2 + $0x18] sm:$0xff]
    %v110 = vld [vmem:[%s2 + $0x20] sm:$0x1]
    %v111 = vld [vmem:[%s3] sm:$0xff]
    %v112 = vld [vmem:[%s3 + $0x8] sm:$0xff]
    %v113 = vld [vmem:[%s3 + $0x10] sm:$0xff]
    %v114 = vld [vmem:[%s3 + $0x18] sm:$0xff]
    %v115 = vld [vmem:[%s3 + $0x20] sm:$0x1]
    %117 = vset.pattern.permute.xlu0 0
    %118 = vperm.xlu0 %117, %v111
    %v119 = vpop.permute.xlu0 %118
    %122 = vset.pattern.permute.xlu0 0
    %123 = vperm.xlu0 %122, %v112
    %v124 = vpop.permute.xlu0 %123
    %127 = vset.pattern.permute.xlu0 0
    %128 = vperm.xlu0 %127, %v113
    %v129 = vpop.permute.xlu0 %128
    %132 = vset.pattern.permute.xlu0 0
    %133 = vperm.xlu0 %132, %v114
    %v134 = vpop.permute.xlu0 %133
    %137 = vset.pattern.permute.xlu0 0
    %138 = vperm.xlu0 %137, %v115
    %v139 = vpop.permute.xlu0 %138
    %vm141 = vcmask 130048
    %v143 = vsel %vm141, %v106, 0
    %v146 = vsel %vm141, %v107, 0
    %v149 = vsel %vm141, %v108, 0
    %v152 = vsel %vm141, %v109, 0
    %v155 = vsel %vm141, %v110, 0
    %157 = vmatprep.subr.mxu0 %v75
    %158 = vmatpush1.msra.mxu0 %v74
    %159 = vmatprep.subr.mxu0 %v83
    %160 = vmatpush1.msra.mxu0 %v82
    %161 = vmatprep.subr.mxu0 0.0
    %162 = vmatpush1.msra.mxu0 0.0
    %163 = vmatprep.subr.mxu0 0.0
    %164 = vmatpush1.msra.mxu0 0.0
    %165 = vmatprep.subr.mxu0 0.0
    %166 = vmatpush1.msra.mxu0 0.0
    %167 = vmatprep.subr.mxu0 0.0
    %168 = vmatpush1.msra.mxu0 0.0
    %169 = vmatprep.subr.mxu0 0.0
    %170 = vmatpush1.msra.mxu0 0.0
    %171 = vmatprep.subr.mxu0 0.0
    %172 = vmatpush1.msra.mxu0 0.0
    %173 = vmatprep.subr.mxu0 0.0
    %174 = vmatpush1.msra.mxu0 0.0
    %175 = vmatprep.subr.mxu0 0.0
    %176 = vmatpush1.msra.mxu0 0.0
    %177 = vmatprep.subr.mxu0 0.0
    %178 = vmatpush1.msra.mxu0 0.0
    %179 = vmatprep.subr.mxu0 0.0
    %180 = vmatpush1.msra.mxu0 0.0
    %181 = vmatprep.subr.mxu0 0.0
    %182 = vmatpush1.msra.mxu0 0.0
    %183 = vmatprep.subr.mxu0 0.0
    %184 = vmatpush1.msra.mxu0 0.0
    %185 = vmatprep.subr.mxu0 0.0
    %186 = vmatpush1.msra.mxu0 0.0
    %187 = vmatprep.subr.mxu0 0.0
    %188 = vmatpush1.msra.mxu0 0.0
    %189 = vmatprep.subr.mxu0 0.0
    %190 = vmatpush1.msra.mxu0 0.0
    %191 = vmatprep.subr.mxu0 0.0
    %192 = vmatpush1.msra.mxu0 0.0
    %193 = vmatprep.subr.mxu0 0.0
    %194 = vmatpush1.msra.mxu0 0.0
    %195 = vmatprep.subr.mxu0 0.0
    %196 = vmatpush1.msra.mxu0 0.0
    %197 = vmatprep.subr.mxu0 0.0
    %198 = vmatpush1.msra.mxu0 0.0
    %199 = vmatprep.subr.mxu0 0.0
    %200 = vmatpush1.msra.mxu0 0.0
    %201 = vmatprep.subr.mxu0 0.0
    %202 = vmatpush1.msra.mxu0 0.0
    %203 = vmatprep.subr.mxu0 0.0
    %204 = vmatpush1.msra.mxu0 0.0
    %205 = vmatprep.subr.mxu0 0.0
    %206 = vmatpush1.msra.mxu0 0.0
    %207 = vmatprep.subr.mxu0 0.0
    %208 = vmatpush1.msra.mxu0 0.0
    %209 = vmatprep.subr.mxu0 0.0
    %210 = vmatpush1.msra.mxu0 0.0
    %211 = vmatprep.subr.mxu0 0.0
    %212 = vmatpush1.msra.mxu0 0.0
    %213 = vmatprep.subr.mxu0 0.0
    %214 = vmatpush1.msra.mxu0 0.0
    %215 = vmatprep.subr.mxu0 0.0
    %216 = vmatpush1.msra.mxu0 0.0
    %217 = vmatprep.subr.mxu0 0.0
    %218 = vmatpush1.msra.mxu0 0.0
    %219 = vmatprep.subr.mxu0 0.0
    %220 = vmatpush1.msra.mxu0 0.0
    %221 = vmatprep.mubr.f32.mxu0 0.0
    %222 = vmatmul.mubr.f32.gmra.mrb[0].mxu0 %v143
    %v223 = vpop.f32.mrb[0].mxu0
    %v224 = vadd.f32 %v119, %v223
    %v225 = vpop.f32.mrb[0].mxu0
    %v226 = vadd.f32 %v119, %v225
    %227 = vmatprep.mubr.f32.mxu0 0.0
    %228 = vmatmul.mubr.f32.gmra.mrb[0].mxu0 %v146
    %v229 = vpop.f32.mrb[0].mxu0
    %v230 = vadd.f32 %v124, %v229
    %v231 = vpop.f32.mrb[0].mxu0
    %v232 = vadd.f32 %v124, %v231
    %233 = vmatprep.mubr.f32.mxu0 0.0
    %234 = vmatmul.mubr.f32.gmra.mrb[0].mxu0 %v149
    %v235 = vpop.f32.mrb[0].mxu0
    %v236 = vadd.f32 %v129, %v235
    %v237 = vpop.f32.mrb[0].mxu0
    %v238 = vadd.f32 %v129, %v237
    %239 = vmatprep.mubr.f32.mxu0 0.0
    %240 = vmatmul.mubr.f32.gmra.mrb[0].mxu0 %v152
    %v241 = vpop.f32.mrb[0].mxu0
    %v242 = vadd.f32 %v134, %v241
    %v243 = vpop.f32.mrb[0].mxu0
    %v244 = vadd.f32 %v134, %v243
    %245 = vmatprep.mubr.f32.mxu0 0.0
    %246 = vmatmul.mubr.f32.gmra.mrb[0].mxu0 %v155
    %v247 = vpop.f32.mrb[0].mxu0
    %v248 = vadd.f32 %v139, %v247
    %v249 = vpop.f32.mrb[0].mxu0
    %v250 = vadd.f32 %v139, %v249
    %251 = vdwg.mxu0
    %252 = vmatprep.subr.mxu0 %v77
    %253 = vmatpush1.msra.mxu0 %v76
    %254 = vmatprep.subr.mxu0 %v85
    %255 = vmatpush1.msra.mxu0 %v84
    %256 = vmatprep.subr.mxu0 0.0
    %257 = vmatpush1.msra.mxu0 0.0
    %258 = vmatprep.subr.mxu0 0.0
    %259 = vmatpush1.msra.mxu0 0.0
    %260 = vmatprep.subr.mxu0 0.0
    %261 = vmatpush1.msra.mxu0 0.0
    %262 = vmatprep.subr.mxu0 0.0
    %263 = vmatpush1.msra.mxu0 0.0
    %264 = vmatprep.subr.mxu0 0.0
    %265 = vmatpush1.msra.mxu0 0.0
    %266 = vmatprep.subr.mxu0 0.0
    %267 = vmatpush1.msra.mxu0 0.0
    %268 = vmatprep.subr.mxu0 0.0
    %269 = vmatpush1.msra.mxu0 0.0
    %270 = vmatprep.subr.mxu0 0.0
    %271 = vmatpush1.msra.mxu0 0.0
    %272 = vmatprep.subr.mxu0 0.0
    %273 = vmatpush1.msra.mxu0 0.0
    %274 = vmatprep.subr.mxu0 0.0
    %275 = vmatpush1.msra.mxu0 0.0
    %276 = vmatprep.subr.mxu0 0.0
    %277 = vmatpush1.msra.mxu0 0.0
    %278 = vmatprep.subr.mxu0 0.0
    %279 = vmatpush1.msra.mxu0 0.0
    %280 = vmatprep.subr.mxu0 0.0
    %281 = vmatpush1.msra.mxu0 0.0
    %282 = vmatprep.subr.mxu0 0.0
    %283 = vmatpush1.msra.mxu0 0.0
    %284 = vmatprep.subr.mxu0 0.0
    %285 = vmatpush1.msra.mxu0 0.0
    %286 = vmatprep.subr.mxu0 0.0
    %287 = vmatpush1.msra.mxu0 0.0
    %288 = vmatprep.subr.mxu0 0.0
    %289 = vmatpush1.msra.mxu0 0.0
    %290 = vmatprep.subr.mxu0 0.0
    %291 = vmatpush1.msra.mxu0 0.0
    %292 = vmatprep.subr.mxu0 0.0
    %293 = vmatpush1.msra.mxu0 0.0
    %294 = vmatprep.subr.mxu0 0.0
    %295 = vmatpush1.msra.mxu0 0.0
    %296 = vmatprep.subr.mxu0 0.0
    %297 = vmatpush1.msra.mxu0 0.0
    %298 = vmatprep.subr.mxu0 0.0
    %299 = vmatpush1.msra.mxu0 0.0
    %300 = vmatprep.subr.mxu0 0.0
    %301 = vmatpush1.msra.mxu0 0.0
    %302 = vmatprep.subr.mxu0 0.0
    %303 = vmatpush1.msra.mxu0 0.0
    %304 = vmatprep.subr.mxu0 0.0
    %305 = vmatpush1.msra.mxu0 0.0
    %306 = vmatprep.subr.mxu0 0.0
    %307 = vmatpush1.msra.mxu0 0.0
    %308 = vmatprep.subr.mxu0 0.0
    %309 = vmatpush1.msra.mxu0 0.0
    %310 = vmatprep.subr.mxu0 0.0
    %311 = vmatpush1.msra.mxu0 0.0
    %312 = vmatprep.subr.mxu0 0.0
    %313 = vmatpush1.msra.mxu0 0.0
    %314 = vmatprep.subr.mxu0 0.0
    %315 = vmatpush1.msra.mxu0 0.0
    %316 = vmatprep.mubr.f32.mxu0 0.0
    %317 = vmatmul.mubr.f32.gmra.mrb[0].mxu0 %v143
    %v318 = vpop.f32.mrb[0].mxu0
    %v319 = vadd.f32 %v119, %v318
    %v320 = vpop.f32.mrb[0].mxu0
    %v321 = vadd.f32 %v119, %v320
    %322 = vmatprep.mubr.f32.mxu0 0.0
    %323 = vmatmul.mubr.f32.gmra.mrb[0].mxu0 %v146
    %v324 = vpop.f32.mrb[0].mxu0
    %v325 = vadd.f32 %v124, %v324
    %v326 = vpop.f32.mrb[0].mxu0
    %v327 = vadd.f32 %v124, %v326
    %328 = vmatprep.mubr.f32.mxu0 0.0
    %329 = vmatmul.mubr.f32.gmra.mrb[0].mxu0 %v149
    %v330 = vpop.f32.mrb[0].mxu0
    %v331 = vadd.f32 %v129, %v330
    %v332 = vpop.f32.mrb[0].mxu0
    %v333 = vadd.f32 %v129, %v332
    %334 = vmatprep.mubr.f32.mxu0 0.0
    %335 = vmatmul.mubr.f32.gmra.mrb[0].mxu0 %v152
    %v336 = vpop.f32.mrb[0].mxu0
    %v337 = vadd.f32 %v134, %v336
    %v338 = vpop.f32.mrb[0].mxu0
    %v339 = vadd.f32 %v134, %v338
    %340 = vmatprep.mubr.f32.mxu0 0.0
    %341 = vmatmul.mubr.f32.gmra.mrb[0].mxu0 %v155
    %v342 = vpop.f32.mrb[0].mxu0
    %v343 = vadd.f32 %v139, %v342
    %v344 = vpop.f32.mrb[0].mxu0
    %v345 = vadd.f32 %v139, %v344
    %346 = vdwg.mxu0
    %347 = vmatprep.subr.mxu0 %v79
    %348 = vmatpush1.msra.mxu0 %v78
    %349 = vmatprep.subr.mxu0 %v87
    %350 = vmatpush1.msra.mxu0 %v86
    %351 = vmatprep.subr.mxu0 0.0
    %352 = vmatpush1.msra.mxu0 0.0
    %353 = vmatprep.subr.mxu0 0.0
    %354 = vmatpush1.msra.mxu0 0.0
    %355 = vmatprep.subr.mxu0 0.0
    %356 = vmatpush1.msra.mxu0 0.0
    %357 = vmatprep.subr.mxu0 0.0
    %358 = vmatpush1.msra.mxu0 0.0
    %359 = vmatprep.subr.mxu0 0.0
    %360 = vmatpush1.msra.mxu0 0.0
    %361 = vmatprep.subr.mxu0 0.0
    %362 = vmatpush1.msra.mxu0 0.0
    %363 = vmatprep.subr.mxu0 0.0
    %364 = vmatpush1.msra.mxu0 0.0
    %365 = vmatprep.subr.mxu0 0.0
    %366 = vmatpush1.msra.mxu0 0.0
    %367 = vmatprep.subr.mxu0 0.0
    %368 = vmatpush1.msra.mxu0 0.0
    %369 = vmatprep.subr.mxu0 0.0
    %370 = vmatpush1.msra.mxu0 0.0
    %371 = vmatprep.subr.mxu0 0.0
    %372 = vmatpush1.msra.mxu0 0.0
    %373 = vmatprep.subr.mxu0 0.0
    %374 = vmatpush1.msra.mxu0 0.0
    %375 = vmatprep.subr.mxu0 0.0
    %376 = vmatpush1.msra.mxu0 0.0
    %377 = vmatprep.subr.mxu0 0.0
    %378 = vmatpush1.msra.mxu0 0.0
    %379 = vmatprep.subr.mxu0 0.0
    %380 = vmatpush1.msra.mxu0 0.0
    %381 = vmatprep.subr.mxu0 0.0
    %382 = vmatpush1.msra.mxu0 0.0
    %383 = vmatprep.subr.mxu0 0.0
    %384 = vmatpush1.msra.mxu0 0.0
    %385 = vmatprep.subr.mxu0 0.0
    %386 = vmatpush1.msra.mxu0 0.0
    %387 = vmatprep.subr.mxu0 0.0
    %388 = vmatpush1.msra.mxu0 0.0
    %389 = vmatprep.subr.mxu0 0.0
    %390 = vmatpush1.msra.mxu0 0.0
    %391 = vmatprep.subr.mxu0 0.0
    %392 = vmatpush1.msra.mxu0 0.0
    %393 = vmatprep.subr.mxu0 0.0
    %394 = vmatpush1.msra.mxu0 0.0
    %395 = vmatprep.subr.mxu0 0.0
    %396 = vmatpush1.msra.mxu0 0.0
    %397 = vmatprep.subr.mxu0 0.0
    %398 = vmatpush1.msra.mxu0 0.0
    %399 = vmatprep.subr.mxu0 0.0
    %400 = vmatpush1.msra.mxu0 0.0
    %401 = vmatprep.subr.mxu0 0.0
    %402 = vmatpush1.msra.mxu0 0.0
    %403 = vmatprep.subr.mxu0 0.0
    %404 = vmatpush1.msra.mxu0 0.0
    %405 = vmatprep.subr.mxu0 0.0
    %406 = vmatpush1.msra.mxu0 0.0
    %407 = vmatprep.subr.mxu0 0.0
    %408 = vmatpush1.msra.mxu0 0.0
    %409 = vmatprep.subr.mxu0 0.0
    %410 = vmatpush1.msra.mxu0 0.0
    %411 = vmatprep.mubr.f32.mxu0 0.0
    %412 = vmatmul.mubr.f32.gmra.mrb[0].mxu0 %v143
    %v413 = vpop.f32.mrb[0].mxu0
    %v414 = vadd.f32 %v119, %v413
    %v415 = vpop.f32.mrb[0].mxu0
    %v416 = vadd.f32 %v119, %v415
    %417 = vmatprep.mubr.f32.mxu0 0.0
    %418 = vmatmul.mubr.f32.gmra.mrb[0].mxu0 %v146
    %v419 = vpop.f32.mrb[0].mxu0
    %v420 = vadd.f32 %v124, %v419
    %v421 = vpop.f32.mrb[0].mxu0
    %v422 = vadd.f32 %v124, %v421
    %423 = vmatprep.mubr.f32.mxu0 0.0
    %424 = vmatmul.mubr.f32.gmra.mrb[0].mxu0 %v149
    %v425 = vpop.f32.mrb[0].mxu0
    %v426 = vadd.f32 %v129, %v425
    %v427 = vpop.f32.mrb[0].mxu0
    %v428 = vadd.f32 %v129, %v427
    %429 = vmatprep.mubr.f32.mxu0 0.0
    %430 = vmatmul.mubr.f32.gmra.mrb[0].mxu0 %v152
    %v431 = vpop.f32.mrb[0].mxu0
    %v432 = vadd.f32 %v134, %v431
    %v433 = vpop.f32.mrb[0].mxu0
    %v434 = vadd.f32 %v134, %v433
    %435 = vmatprep.mubr.f32.mxu0 0.0
    %436 = vmatmul.mubr.f32.gmra.mrb[0].mxu0 %v155
    %v437 = vpop.f32.mrb[0].mxu0
    %v438 = vadd.f32 %v139, %v437
    %v439 = vpop.f32.mrb[0].mxu0
    %v440 = vadd.f32 %v139, %v439
    %441 = vdwg.mxu0
    %442 = vmatprep.subr.mxu0 %v81
    %443 = vmatpush1.msra.mxu0 %v80
    %444 = vmatprep.subr.mxu0 %v89
    %445 = vmatpush1.msra.mxu0 %v88
    %446 = vmatprep.subr.mxu0 0.0
    %447 = vmatpush1.msra.mxu0 0.0
    %448 = vmatprep.subr.mxu0 0.0
    %449 = vmatpush1.msra.mxu0 0.0
    %450 = vmatprep.subr.mxu0 0.0
    %451 = vmatpush1.msra.mxu0 0.0
    %452 = vmatprep.subr.mxu0 0.0
    %453 = vmatpush1.msra.mxu0 0.0
    %454 = vmatprep.subr.mxu0 0.0
    %455 = vmatpush1.msra.mxu0 0.0
    %456 = vmatprep.subr.mxu0 0.0
    %457 = vmatpush1.msra.mxu0 0.0
    %458 = vmatprep.subr.mxu0 0.0
    %459 = vmatpush1.msra.mxu0 0.0
    %460 = vmatprep.subr.mxu0 0.0
    %461 = vmatpush1.msra.mxu0 0.0
    %462 = vmatprep.subr.mxu0 0.0
    %463 = vmatpush1.msra.mxu0 0.0
    %464 = vmatprep.subr.mxu0 0.0
    %465 = vmatpush1.msra.mxu0 0.0
    %466 = vmatprep.subr.mxu0 0.0
    %467 = vmatpush1.msra.mxu0 0.0
    %468 = vmatprep.subr.mxu0 0.0
    %469 = vmatpush1.msra.mxu0 0.0
    %470 = vmatprep.subr.mxu0 0.0
    %471 = vmatpush1.msra.mxu0 0.0
    %472 = vmatprep.subr.mxu0 0.0
    %473 = vmatpush1.msra.mxu0 0.0
    %474 = vmatprep.subr.mxu0 0.0
    %475 = vmatpush1.msra.mxu0 0.0
    %476 = vmatprep.subr.mxu0 0.0
    %477 = vmatpush1.msra.mxu0 0.0
    %478 = vmatprep.subr.mxu0 0.0
    %479 = vmatpush1.msra.mxu0 0.0
    %480 = vmatprep.subr.mxu0 0.0
    %481 = vmatpush1.msra.mxu0 0.0
    %482 = vmatprep.subr.mxu0 0.0
    %483 = vmatpush1.msra.mxu0 0.0
    %484 = vmatprep.subr.mxu0 0.0
    %485 = vmatpush1.msra.mxu0 0.0
    %486 = vmatprep.subr.mxu0 0.0
    %487 = vmatpush1.msra.mxu0 0.0
    %488 = vmatprep.subr.mxu0 0.0
    %489 = vmatpush1.msra.mxu0 0.0
    %490 = vmatprep.subr.mxu0 0.0
    %491 = vmatpush1.msra.mxu0 0.0
    %492 = vmatprep.subr.mxu0 0.0
    %493 = vmatpush1.msra.mxu0 0.0
    %494 = vmatprep.subr.mxu0 0.0
    %495 = vmatpush1.msra.mxu0 0.0
    %496 = vmatprep.subr.mxu0 0.0
    %497 = vmatpush1.msra.mxu0 0.0
    %498 = vmatprep.subr.mxu0 0.0
    %499 = vmatpush1.msra.mxu0 0.0
    %500 = vmatprep.subr.mxu0 0.0
    %501 = vmatpush1.msra.mxu0 0.0
    %502 = vmatprep.subr.mxu0 0.0
    %503 = vmatpush1.msra.mxu0 0.0
    %504 = vmatprep.subr.mxu0 0.0
    %505 = vmatpush1.msra.mxu0 0.0
    %506 = vmatprep.mubr.f32.mxu0 0.0
    %507 = vmatmul.mubr.f32.gmra.mrb[0].mxu0 %v143
    %v508 = vpop.f32.mrb[0].mxu0
    %v509 = vadd.f32 %v119, %v508
    %v510 = vpop.f32.mrb[0].mxu0
    %v511 = vadd.f32 %v119, %v510
    %512 = vmatprep.mubr.f32.mxu0 0.0
    %513 = vmatmul.mubr.f32.gmra.mrb[0].mxu0 %v146
    %v514 = vpop.f32.mrb[0].mxu0
    %v515 = vadd.f32 %v124, %v514
    %v516 = vpop.f32.mrb[0].mxu0
    %v517 = vadd.f32 %v124, %v516
    %518 = vmatprep.mubr.f32.mxu0 0.0
    %519 = vmatmul.mubr.f32.gmra.mrb[0].mxu0 %v149
    %v520 = vpop.f32.mrb[0].mxu0
    %v521 = vadd.f32 %v129, %v520
    %v522 = vpop.f32.mrb[0].mxu0
    %v523 = vadd.f32 %v129, %v522
    %524 = vmatprep.mubr.f32.mxu0 0.0
    %525 = vmatmul.mubr.f32.gmra.mrb[0].mxu0 %v152
    %v526 = vpop.f32.mrb[0].mxu0
    %v527 = vadd.f32 %v134, %v526
    %v528 = vpop.f32.mrb[0].mxu0
    %v529 = vadd.f32 %v134, %v528
    %530 = vmatprep.mubr.f32.mxu0 0.0
    %531 = vmatmul.mubr.f32.gmra.mrb[0].mxu0 %v155
    %v532 = vpop.f32.mrb[0].mxu0
    %v533 = vadd.f32 %v139, %v532
    %v534 = vpop.f32.mrb[0].mxu0
    %v535 = vadd.f32 %v139, %v534
    %536 = vdwg.mxu0
    %v537 = vtanh.pop %v224
    %v538 = vtanh.pop %v226
    %v539 = vtanh.pop %v319
    %v540 = vtanh.pop %v321
    %v541 = vtanh.pop %v414
    %v542 = vtanh.pop %v416
    %v543 = vtanh.pop %v509
    %v544 = vtanh.pop %v511
    %v545 = vtanh.pop %v230
    %v546 = vtanh.pop %v232
    %v547 = vtanh.pop %v325
    %v548 = vtanh.pop %v327
    %v549 = vtanh.pop %v420
    %v550 = vtanh.pop %v422
    %v551 = vtanh.pop %v515
    %v552 = vtanh.pop %v517
    %v553 = vtanh.pop %v236
    %v554 = vtanh.pop %v238
    %v555 = vtanh.pop %v331
    %v556 = vtanh.pop %v333
    %v557 = vtanh.pop %v426
    %v558 = vtanh.pop %v428
    %v559 = vtanh.pop %v521
    %v560 = vtanh.pop %v523
    %v561 = vtanh.pop %v242
    %v562 = vtanh.pop %v244
    %v563 = vtanh.pop %v337
    %v564 = vtanh.pop %v339
    %v565 = vtanh.pop %v432
    %v566 = vtanh.pop %v434
    %v567 = vtanh.pop %v527
    %v568 = vtanh.pop %v529
    %v569 = vmul.f32 %v248, 1.442695
    %v570 = vpow.pop %v569
    %v571 = vmul.f32 %v250, 1.442695
    %v572 = vpow.pop %v571
    %v573 = vmul.f32 %v343, 1.442695
    %v574 = vpow.pop %v573
    %v575 = vmul.f32 %v345, 1.442695
    %v576 = vpow.pop %v575
    %v577 = vmul.f32 %v438, 1.442695
    %v578 = vpow.pop %v577
    %v579 = vmul.f32 %v440, 1.442695
    %v580 = vpow.pop %v579
    %v581 = vmul.f32 %v533, 1.442695
    %v582 = vpow.pop %v581
    %v583 = vmul.f32 %v535, 1.442695
    %v584 = vpow.pop %v583
    %v585 = vld [vmem:[%s4] sm:$0xff]
    %v586 = vld [vmem:[%s4 + $0x8] sm:$0xff]
    %v588 = vsel %vm141, %v585, 0
    %v591 = vsel %vm141, %v586, 0
    %593 = vmatprep.subr.mxu0 %v538
    %594 = vmatpush1.msra.mxu0 %v537
    %595 = vmatprep.subr.mxu0 %v546
    %596 = vmatpush1.msra.mxu0 %v545
    %597 = vmatprep.subr.mxu0 0.0
    %598 = vmatpush1.msra.mxu0 0.0
    %599 = vmatprep.subr.mxu0 0.0
    %600 = vmatpush1.msra.mxu0 0.0
    %601 = vmatprep.subr.mxu0 0.0
    %602 = vmatpush1.msra.mxu0 0.0
    %603 = vmatprep.subr.mxu0 0.0
    %604 = vmatpush1.msra.mxu0 0.0
    %605 = vmatprep.subr.mxu0 0.0
    %606 = vmatpush1.msra.mxu0 0.0
    %607 = vmatprep.subr.mxu0 0.0
    %608 = vmatpush1.msra.mxu0 0.0
    %609 = vmatprep.subr.mxu0 0.0
    %610 = vmatpush1.msra.mxu0 0.0
    %611 = vmatprep.subr.mxu0 0.0
    %612 = vmatpush1.msra.mxu0 0.0
    %613 = vmatprep.subr.mxu0 0.0
    %614 = vmatpush1.msra.mxu0 0.0
    %615 = vmatprep.subr.mxu0 0.0
    %616 = vmatpush1.msra.mxu0 0.0
    %617 = vmatprep.subr.mxu0 0.0
    %618 = vmatpush1.msra.mxu0 0.0
    %619 = vmatprep.subr.mxu0 0.0
    %620 = vmatpush1.msra.mxu0 0.0
    %621 = vmatprep.subr.mxu0 0.0
    %622 = vmatpush1.msra.mxu0 0.0
    %623 = vmatprep.subr.mxu0 0.0
    %624 = vmatpush1.msra.mxu0 0.0
    %625 = vmatprep.subr.mxu0 0.0
    %626 = vmatpush1.msra.mxu0 0.0
    %627 = vmatprep.subr.mxu0 0.0
    %628 = vmatpush1.msra.mxu0 0.0
    %629 = vmatprep.subr.mxu0 0.0
    %630 = vmatpush1.msra.mxu0 0.0
    %631 = vmatprep.subr.mxu0 0.0
    %632 = vmatpush1.msra.mxu0 0.0
    %633 = vmatprep.subr.mxu0 0.0
    %634 = vmatpush1.msra.mxu0 0.0
    %635 = vmatprep.subr.mxu0 0.0
    %636 = vmatpush1.msra.mxu0 0.0
    %637 = vmatprep.subr.mxu0 0.0
    %638 = vmatpush1.msra.mxu0 0.0
    %639 = vmatprep.subr.mxu0 0.0
    %640 = vmatpush1.msra.mxu0 0.0
    %641 = vmatprep.subr.mxu0 0.0
    %642 = vmatpush1.msra.mxu0 0.0
    %643 = vmatprep.subr.mxu0 0.0
    %644 = vmatpush1.msra.mxu0 0.0
    %645 = vmatprep.subr.mxu0 0.0
    %646 = vmatpush1.msra.mxu0 0.0
    %647 = vmatprep.subr.mxu0 0.0
    %648 = vmatpush1.msra.mxu0 0.0
    %649 = vmatprep.subr.mxu0 0.0
    %650 = vmatpush1.msra.mxu0 0.0
    %651 = vmatprep.subr.mxu0 0.0
    %652 = vmatpush1.msra.mxu0 0.0
    %653 = vmatprep.subr.mxu0 0.0
    %654 = vmatpush1.msra.mxu0 0.0
    %655 = vmatprep.subr.mxu0 0.0
    %656 = vmatpush1.msra.mxu0 0.0
    %657 = vmatprep.mubr.f32.mxu0 0.0
    %658 = vmatmul.mubr.f32.gmra.mrb[0].mxu0 %v588
    %v659 = vpop.f32.mrb[0].mxu0
    %v660 = vadd.f32 0.0, %v659
    %v661 = vpop.f32.mrb[0].mxu0
    %v662 = vadd.f32 0.0, %v661
    %663 = vmatprep.mubr.f32.mxu0 0.0
    %664 = vmatmul.mubr.f32.gmra.mrb[0].mxu0 %v591
    %v665 = vpop.f32.mrb[0].mxu0
    %v666 = vadd.f32 0.0, %v665
    %v667 = vpop.f32.mrb[0].mxu0
    %v668 = vadd.f32 0.0, %v667
    %669 = vdwg.mxu0
    %670 = vmatprep.subr.mxu0 %v540
    %671 = vmatpush1.msra.mxu0 %v539
    %672 = vmatprep.subr.mxu0 %v548
    %673 = vmatpush1.msra.mxu0 %v547
    %674 = vmatprep.subr.mxu0 0.0
    %675 = vmatpush1.msra.mxu0 0.0
    %676 = vmatprep.subr.mxu0 0.0
    %677 = vmatpush1.msra.mxu0 0.0
    %678 = vmatprep.subr.mxu0 0.0
    %679 = vmatpush1.msra.mxu0 0.0
    %680 = vmatprep.subr.mxu0 0.0
    %681 = vmatpush1.msra.mxu0 0.0
    %682 = vmatprep.subr.mxu0 0.0
    %683 = vmatpush1.msra.mxu0 0.0
    %684 = vmatprep.subr.mxu0 0.0
    %685 = vmatpush1.msra.mxu0 0.0
    %686 = vmatprep.subr.mxu0 0.0
    %687 = vmatpush1.msra.mxu0 0.0
    %688 = vmatprep.subr.mxu0 0.0
    %689 = vmatpush1.msra.mxu0 0.0
    %690 = vmatprep.subr.mxu0 0.0
    %691 = vmatpush1.msra.mxu0 0.0
    %692 = vmatprep.subr.mxu0 0.0
    %693 = vmatpush1.msra.mxu0 0.0
    %694 = vmatprep.subr.mxu0 0.0
    %695 = vmatpush1.msra.mxu0 0.0
    %696 = vmatprep.subr.mxu0 0.0
    %697 = vmatpush1.msra.mxu0 0.0
    %698 = vmatprep.subr.mxu0 0.0
    %699 = vmatpush1.msra.mxu0 0.0
    %700 = vmatprep.subr.mxu0 0.0
    %701 = vmatpush1.msra.mxu0 0.0
    %702 = vmatprep.subr.mxu0 0.0
    %703 = vmatpush1.msra.mxu0 0.0
    %704 = vmatprep.subr.mxu0 0.0
    %705 = vmatpush1.msra.mxu0 0.0
    %706 = vmatprep.subr.mxu0 0.0
    %707 = vmatpush1.msra.mxu0 0.0
    %708 = vmatprep.subr.mxu0 0.0
    %709 = vmatpush1.msra.mxu0 0.0
    %710 = vmatprep.subr.mxu0 0.0
    %711 = vmatpush1.msra.mxu0 0.0
    %712 = vmatprep.subr.mxu0 0.0
    %713 = vmatpush1.msra.mxu0 0.0
    %714 = vmatprep.subr.mxu0 0.0
    %715 = vmatpush1.msra.mxu0 0.0
    %716 = vmatprep.subr.mxu0 0.0
    %717 = vmatpush1.msra.mxu0 0.0
    %718 = vmatprep.subr.mxu0 0.0
    %719 = vmatpush1.msra.mxu0 0.0
    %720 = vmatprep.subr.mxu0 0.0
    %721 = vmatpush1.msra.mxu0 0.0
    %722 = vmatprep.subr.mxu0 0.0
    %723 = vmatpush1.msra.mxu0 0.0
    %724 = vmatprep.subr.mxu0 0.0
    %725 = vmatpush1.msra.mxu0 0.0
    %726 = vmatprep.subr.mxu0 0.0
    %727 = vmatpush1.msra.mxu0 0.0
    %728 = vmatprep.subr.mxu0 0.0
    %729 = vmatpush1.msra.mxu0 0.0
    %730 = vmatprep.subr.mxu0 0.0
    %731 = vmatpush1.msra.mxu0 0.0
    %732 = vmatprep.subr.mxu0 0.0
    %733 = vmatpush1.msra.mxu0 0.0
    %734 = vmatprep.mubr.f32.mxu0 0.0
    %735 = vmatmul.mubr.f32.gmra.mrb[0].mxu0 %v588
    %v736 = vpop.f32.mrb[0].mxu0
    %v737 = vadd.f32 0.0, %v736
    %v738 = vpop.f32.mrb[0].mxu0
    %v739 = vadd.f32 0.0, %v738
    %740 = vmatprep.mubr.f32.mxu0 0.0
    %741 = vmatmul.mubr.f32.gmra.mrb[0].mxu0 %v591
    %v742 = vpop.f32.mrb[0].mxu0
    %v743 = vadd.f32 0.0, %v742
    %v744 = vpop.f32.mrb[0].mxu0
    %v745 = vadd.f32 0.0, %v744
    %746 = vdwg.mxu0
    %747 = vmatprep.subr.mxu0 %v542
    %748 = vmatpush1.msra.mxu0 %v541
    %749 = vmatprep.subr.mxu0 %v550
    %750 = vmatpush1.msra.mxu0 %v549
    %751 = vmatprep.subr.mxu0 0.0
    %752 = vmatpush1.msra.mxu0 0.0
    %753 = vmatprep.subr.mxu0 0.0
    %754 = vmatpush1.msra.mxu0 0.0
    %755 = vmatprep.subr.mxu0 0.0
    %756 = vmatpush1.msra.mxu0 0.0
    %757 = vmatprep.subr.mxu0 0.0
    %758 = vmatpush1.msra.mxu0 0.0
    %759 = vmatprep.subr.mxu0 0.0
    %760 = vmatpush1.msra.mxu0 0.0
    %761 = vmatprep.subr.mxu0 0.0
    %762 = vmatpush1.msra.mxu0 0.0
    %763 = vmatprep.subr.mxu0 0.0
    %764 = vmatpush1.msra.mxu0 0.0
    %765 = vmatprep.subr.mxu0 0.0
    %766 = vmatpush1.msra.mxu0 0.0
    %767 = vmatprep.subr.mxu0 0.0
    %768 = vmatpush1.msra.mxu0 0.0
    %769 = vmatprep.subr.mxu0 0.0
    %770 = vmatpush1.msra.mxu0 0.0
    %771 = vmatprep.subr.mxu0 0.0
    %772 = vmatpush1.msra.mxu0 0.0
    %773 = vmatprep.subr.mxu0 0.0
    %774 = vmatpush1.msra.mxu0 0.0
    %775 = vmatprep.subr.mxu0 0.0
    %776 = vmatpush1.msra.mxu0 0.0
    %777 = vmatprep.subr.mxu0 0.0
    %778 = vmatpush1.msra.mxu0 0.0
    %779 = vmatprep.subr.mxu0 0.0
    %780 = vmatpush1.msra.mxu0 0.0
    %781 = vmatprep.subr.mxu0 0.0
    %782 = vmatpush1.msra.mxu0 0.0
    %783 = vmatprep.subr.mxu0 0.0
    %784 = vmatpush1.msra.mxu0 0.0
    %785 = vmatprep.subr.mxu0 0.0
    %786 = vmatpush1.msra.mxu0 0.0
    %787 = vmatprep.subr.mxu0 0.0
    %788 = vmatpush1.msra.mxu0 0.0
    %789 = vmatprep.subr.mxu0 0.0
    %790 = vmatpush1.msra.mxu0 0.0
    %791 = vmatprep.subr.mxu0 0.0
    %792 = vmatpush1.msra.mxu0 0.0
    %793 = vmatprep.subr.mxu0 0.0
    %794 = vmatpush1.msra.mxu0 0.0
    %795 = vmatprep.subr.mxu0 0.0
    %796 = vmatpush1.msra.mxu0 0.0
    %797 = vmatprep.subr.mxu0 0.0
    %798 = vmatpush1.msra.mxu0 0.0
    %799 = vmatprep.subr.mxu0 0.0
    %800 = vmatpush1.msra.mxu0 0.0
    %801 = vmatprep.subr.mxu0 0.0
    %802 = vmatpush1.msra.mxu0 0.0
    %803 = vmatprep.subr.mxu0 0.0
    %804 = vmatpush1.msra.mxu0 0.0
    %805 = vmatprep.subr.mxu0 0.0
    %806 = vmatpush1.msra.mxu0 0.0
    %807 = vmatprep.subr.mxu0 0.0
    %808 = vmatpush1.msra.mxu0 0.0
    %809 = vmatprep.subr.mxu0 0.0
    %810 = vmatpush1.msra.mxu0 0.0
    %811 = vmatprep.mubr.f32.mxu0 0.0
    %812 = vmatmul.mubr.f32.gmra.mrb[0].mxu0 %v588
    %v813 = vpop.f32.mrb[0].mxu0
    %v814 = vadd.f32 0.0, %v813
    %v815 = vpop.f32.mrb[0].mxu0
    %v816 = vadd.f32 0.0, %v815
    %817 = vmatprep.mubr.f32.mxu0 0.0
    %818 = vmatmul.mubr.f32.gmra.mrb[0].mxu0 %v591
    %v819 = vpop.f32.mrb[0].mxu0
    %v820 = vadd.f32 0.0, %v819
    %v821 = vpop.f32.mrb[0].mxu0
    %v822 = vadd.f32 0.0, %v821
    %823 = vdwg.mxu0
    %824 = vmatprep.subr.mxu0 %v544
    %825 = vmatpush1.msra.mxu0 %v543
    %826 = vmatprep.subr.mxu0 %v552
    %827 = vmatpush1.msra.mxu0 %v551
    %828 = vmatprep.subr.mxu0 0.0
    %829 = vmatpush1.msra.mxu0 0.0
    %830 = vmatprep.subr.mxu0 0.0
    %831 = vmatpush1.msra.mxu0 0.0
    %832 = vmatprep.subr.mxu0 0.0
    %833 = vmatpush1.msra.mxu0 0.0
    %834 = vmatprep.subr.mxu0 0.0
    %835 = vmatpush1.msra.mxu0 0.0
    %836 = vmatprep.subr.mxu0 0.0
    %837 = vmatpush1.msra.mxu0 0.0
    %838 = vmatprep.subr.mxu0 0.0
    %839 = vmatpush1.msra.mxu0 0.0
    %840 = vmatprep.subr.mxu0 0.0
    %841 = vmatpush1.msra.mxu0 0.0
    %842 = vmatprep.subr.mxu0 0.0
    %843 = vmatpush1.msra.mxu0 0.0
    %844 = vmatprep.subr.mxu0 0.0
    %845 = vmatpush1.msra.mxu0 0.0
    %846 = vmatprep.subr.mxu0 0.0
    %847 = vmatpush1.msra.mxu0 0.0
    %848 = vmatprep.subr.mxu0 0.0
    %849 = vmatpush1.msra.mxu0 0.0
    %850 = vmatprep.subr.mxu0 0.0
    %851 = vmatpush1.msra.mxu0 0.0
    %852 = vmatprep.subr.mxu0 0.0
    %853 = vmatpush1.msra.mxu0 0.0
    %854 = vmatprep.subr.mxu0 0.0
    %855 = vmatpush1.msra.mxu0 0.0
    %856 = vmatprep.subr.mxu0 0.0
    %857 = vmatpush1.msra.mxu0 0.0
    %858 = vmatprep.subr.mxu0 0.0
    %859 = vmatpush1.msra.mxu0 0.0
    %860 = vmatprep.subr.mxu0 0.0
    %861 = vmatpush1.msra.mxu0 0.0
    %862 = vmatprep.subr.mxu0 0.0
    %863 = vmatpush1.msra.mxu0 0.0
    %864 = vmatprep.subr.mxu0 0.0
    %865 = vmatpush1.msra.mxu0 0.0
    %866 = vmatprep.subr.mxu0 0.0
    %867 = vmatpush1.msra.mxu0 0.0
    %868 = vmatprep.subr.mxu0 0.0
    %869 = vmatpush1.msra.mxu0 0.0
    %870 = vmatprep.subr.mxu0 0.0
    %871 = vmatpush1.msra.mxu0 0.0
    %872 = vmatprep.subr.mxu0 0.0
    %873 = vmatpush1.msra.mxu0 0.0
    %874 = vmatprep.subr.mxu0 0.0
    %875 = vmatpush1.msra.mxu0 0.0
    %876 = vmatprep.subr.mxu0 0.0
    %877 = vmatpush1.msra.mxu0 0.0
    %878 = vmatprep.subr.mxu0 0.0
    %879 = vmatpush1.msra.mxu0 0.0
    %880 = vmatprep.subr.mxu0 0.0
    %881 = vmatpush1.msra.mxu0 0.0
    %882 = vmatprep.subr.mxu0 0.0
    %883 = vmatpush1.msra.mxu0 0.0
    %884 = vmatprep.subr.mxu0 0.0
    %885 = vmatpush1.msra.mxu0 0.0
    %886 = vmatprep.subr.mxu0 0.0
    %887 = vmatpush1.msra.mxu0 0.0
    %888 = vmatprep.mubr.f32.mxu0 0.0
    %889 = vmatmul.mubr.f32.gmra.mrb[0].mxu0 %v588
    %v890 = vpop.f32.mrb[0].mxu0
    %v891 = vadd.f32 0.0, %v890
    %v892 = vpop.f32.mrb[0].mxu0
    %v893 = vadd.f32 0.0, %v892
    %894 = vmatprep.mubr.f32.mxu0 0.0
    %895 = vmatmul.mubr.f32.gmra.mrb[0].mxu0 %v591
    %v896 = vpop.f32.mrb[0].mxu0
    %v897 = vadd.f32 0.0, %v896
    %v898 = vpop.f32.mrb[0].mxu0
    %v899 = vadd.f32 0.0, %v898
    %900 = vdwg.mxu0
    %v901 = vlaneseq
    %v902 = vshrl.u32 %v901, 7
    %vm903 = vcmp.eq.s32.totalorder %v902, 0
    %v904 = vsel %vm903, 1, 0
    %v905 = vcvt.s32.f32 %v904
    %vm906 = vcmp.eq.s32.totalorder %v902, 1
    %v907 = vsel %vm906, 1, 0
    %v908 = vcvt.s32.f32 %v907
    %vm909 = vcmp.eq.s32.totalorder %v902, 2
    %v910 = vsel %vm909, 1, 0
    %v911 = vcvt.s32.f32 %v910
    %vm912 = vcmp.eq.s32.totalorder %v902, 3
    %v913 = vsel %vm912, 1, 0
    %v914 = vcvt.s32.f32 %v913
    %vm915 = vcmp.eq.s32.totalorder %v902, 4
    %v916 = vsel %vm915, 1, 0
    %v917 = vcvt.s32.f32 %v916
    %vm918 = vcmp.eq.s32.totalorder %v902, 5
    %v919 = vsel %vm918, 1, 0
    %v920 = vcvt.s32.f32 %v919
    %vm921 = vcmp.eq.s32.totalorder %v902, 6
    %v922 = vsel %vm921, 1, 0
    %v923 = vcvt.s32.f32 %v922
    %vm924 = vcmp.eq.s32.totalorder %v902, 7
    %v925 = vsel %vm924, 1, 0
    %v926 = vcvt.s32.f32 %v925
    %v927 = vmul.f32 %v660, %v554
    %v928 = vmul.f32 %v666, %v562
    %v929 = vadd.f32 %v927, %v928
    %v930 = vrot.slane %v929, 4
    %v931 = vadd.f32 %v929, %v930
    %v932 = vrot.slane %v931, 2
    %v933 = vadd.f32 %v931, %v932
    %v934 = vrot.slane %v933, 1
    %v935 = vadd.f32 %v933, %v934
    %v936 = vmul.f32 %v935, 1.442695
    %v937 = vpow.pop %v936
    %v938 = vmul.f32 %v908, %v937
    %v939 = vmul.f32 %v660, %v555
    %v940 = vmul.f32 %v666, %v563
    %v941 = vadd.f32 %v939, %v940
    %v942 = vrot.slane %v941, 4
    %v943 = vadd.f32 %v941, %v942
    %v944 = vrot.slane %v943, 2
    %v945 = vadd.f32 %v943, %v944
    %v946 = vrot.slane %v945, 1
    %v947 = vadd.f32 %v945, %v946
    %v948 = vmul.f32 %v947, 1.442695
    %v949 = vpow.pop %v948
    %v950 = vmul.f32 %v911, %v949
    %v951 = vadd.f32 %v938, %v950
    %v952 = vmul.f32 %v660, %v556
    %v953 = vmul.f32 %v666, %v564
    %v954 = vadd.f32 %v952, %v953
    %v955 = vrot.slane %v954, 4
    %v956 = vadd.f32 %v954, %v955
    %v957 = vrot.slane %v956, 2
    %v958 = vadd.f32 %v956, %v957
    %v959 = vrot.slane %v958, 1
    %v960 = vadd.f32 %v958, %v959
    %v961 = vmul.f32 %v960, 1.442695
    %v962 = vpow.pop %v961
    %v963 = vmul.f32 %v914, %v962
    %v964 = vadd.f32 %v951, %v963
    %v965 = vmul.f32 %v660, %v557
    %v966 = vmul.f32 %v666, %v565
    %v967 = vadd.f32 %v965, %v966
    %v968 = vrot.slane %v967, 4
    %v969 = vadd.f32 %v967, %v968
    %v970 = vrot.slane %v969, 2
    %v971 = vadd.f32 %v969, %v970
    %v972 = vrot.slane %v971, 1
    %v973 = vadd.f32 %v971, %v972
    %v974 = vmul.f32 %v973, 1.442695
    %v975 = vpow.pop %v974
    %v976 = vmul.f32 %v917, %v975
    %v977 = vadd.f32 %v964, %v976
    %v978 = vmul.f32 %v660, %v558
    %v979 = vmul.f32 %v666, %v566
    %v980 = vadd.f32 %v978, %v979
    %v981 = vrot.slane %v980, 4
    %v982 = vadd.f32 %v980, %v981
    %v983 = vrot.slane %v982, 2
    %v984 = vadd.f32 %v982, %v983
    %v985 = vrot.slane %v984, 1
    %v986 = vadd.f32 %v984, %v985
    %v987 = vmul.f32 %v986, 1.442695
    %v988 = vpow.pop %v987
    %v989 = vmul.f32 %v920, %v988
    %v990 = vadd.f32 %v977, %v989
    %v991 = vmul.f32 %v660, %v559
    %v992 = vmul.f32 %v666, %v567
    %v993 = vadd.f32 %v991, %v992
    %v994 = vrot.slane %v993, 4
    %v995 = vadd.f32 %v993, %v994
    %v996 = vrot.slane %v995, 2
    %v997 = vadd.f32 %v995, %v996
    %v998 = vrot.slane %v997, 1
    %v999 = vadd.f32 %v997, %v998
    %v1000 = vmul.f32 %v999, 1.442695
    %v1001 = vpow.pop %v1000
    %v1002 = vmul.f32 %v923, %v1001
    %v1003 = vadd.f32 %v990, %v1002
    %v1004 = vmul.f32 %v660, %v560
    %v1005 = vmul.f32 %v666, %v568
    %v1006 = vadd.f32 %v1004, %v1005
    %v1007 = vrot.slane %v1006, 4
    %v1008 = vadd.f32 %v1006, %v1007
    %v1009 = vrot.slane %v1008, 2
    %v1010 = vadd.f32 %v1008, %v1009
    %v1011 = vrot.slane %v1010, 1
    %v1012 = vadd.f32 %v1010, %v1011
    %v1013 = vmul.f32 %v1012, 1.442695
    %v1014 = vpow.pop %v1013
    %v1015 = vmul.f32 %v926, %v1014
    %v1016 = vadd.f32 %v1003, %v1015
    %v1017 = vmul.f32 %v662, %v553
    %v1018 = vmul.f32 %v668, %v561
    %v1019 = vadd.f32 %v1017, %v1018
    %v1020 = vrot.slane %v1019, 4
    %v1021 = vadd.f32 %v1019, %v1020
    %v1022 = vrot.slane %v1021, 2
    %v1023 = vadd.f32 %v1021, %v1022
    %v1024 = vrot.slane %v1023, 1
    %v1025 = vadd.f32 %v1023, %v1024
    %v1026 = vmul.f32 %v1025, 1.442695
    %v1027 = vpow.pop %v1026
    %v1028 = vmul.f32 %v905, %v1027
    %v1029 = vmul.f32 %v662, %v555
    %v1030 = vmul.f32 %v668, %v563
    %v1031 = vadd.f32 %v1029, %v1030
    %v1032 = vrot.slane %v1031, 4
    %v1033 = vadd.f32 %v1031, %v1032
    %v1034 = vrot.slane %v1033, 2
    %v1035 = vadd.f32 %v1033, %v1034
    %v1036 = vrot.slane %v1035, 1
    %v1037 = vadd.f32 %v1035, %v1036
    %v1038 = vmul.f32 %v1037, 1.442695
    %v1039 = vpow.pop %v1038
    %v1040 = vmul.f32 %v911, %v1039
    %v1041 = vadd.f32 %v1028, %v1040
    %v1042 = vmul.f32 %v662, %v556
    %v1043 = vmul.f32 %v668, %v564
    %v1044 = vadd.f32 %v1042, %v1043
    %v1045 = vrot.slane %v1044, 4
    %v1046 = vadd.f32 %v1044, %v1045
    %v1047 = vrot.slane %v1046, 2
    %v1048 = vadd.f32 %v1046, %v1047
    %v1049 = vrot.slane %v1048, 1
    %v1050 = vadd.f32 %v1048, %v1049
    %v1051 = vmul.f32 %v1050, 1.442695
    %v1052 = vpow.pop %v1051
    %v1053 = vmul.f32 %v914, %v1052
    %v1054 = vadd.f32 %v1041, %v1053
    %v1055 = vmul.f32 %v662, %v557
    %v1056 = vmul.f32 %v668, %v565
    %v1057 = vadd.f32 %v1055, %v1056
    %v1058 = vrot.slane %v1057, 4
    %v1059 = vadd.f32 %v1057, %v1058
    %v1060 = vrot.slane %v1059, 2
    %v1061 = vadd.f32 %v1059, %v1060
    %v1062 = vrot.slane %v1061, 1
    %v1063 = vadd.f32 %v1061, %v1062
    %v1064 = vmul.f32 %v1063, 1.442695
    %v1065 = vpow.pop %v1064
    %v1066 = vmul.f32 %v917, %v1065
    %v1067 = vadd.f32 %v1054, %v1066
    %v1068 = vmul.f32 %v662, %v558
    %v1069 = vmul.f32 %v668, %v566
    %v1070 = vadd.f32 %v1068, %v1069
    %v1071 = vrot.slane %v1070, 4
    %v1072 = vadd.f32 %v1070, %v1071
    %v1073 = vrot.slane %v1072, 2
    %v1074 = vadd.f32 %v1072, %v1073
    %v1075 = vrot.slane %v1074, 1
    %v1076 = vadd.f32 %v1074, %v1075
    %v1077 = vmul.f32 %v1076, 1.442695
    %v1078 = vpow.pop %v1077
    %v1079 = vmul.f32 %v920, %v1078
    %v1080 = vadd.f32 %v1067, %v1079
    %v1081 = vmul.f32 %v662, %v559
    %v1082 = vmul.f32 %v668, %v567
    %v1083 = vadd.f32 %v1081, %v1082
    %v1084 = vrot.slane %v1083, 4
    %v1085 = vadd.f32 %v1083, %v1084
    %v1086 = vrot.slane %v1085, 2
    %v1087 = vadd.f32 %v1085, %v1086
    %v1088 = vrot.slane %v1087, 1
    %v1089 = vadd.f32 %v1087, %v1088
    %v1090 = vmul.f32 %v1089, 1.442695
    %v1091 = vpow.pop %v1090
    %v1092 = vmul.f32 %v923, %v1091
    %v1093 = vadd.f32 %v1080, %v1092
    %v1094 = vmul.f32 %v662, %v560
    %v1095 = vmul.f32 %v668, %v568
    %v1096 = vadd.f32 %v1094, %v1095
    %v1097 = vrot.slane %v1096, 4
    %v1098 = vadd.f32 %v1096, %v1097
    %v1099 = vrot.slane %v1098, 2
    %v1100 = vadd.f32 %v1098, %v1099
    %v1101 = vrot.slane %v1100, 1
    %v1102 = vadd.f32 %v1100, %v1101
    %v1103 = vmul.f32 %v1102, 1.442695
    %v1104 = vpow.pop %v1103
    %v1105 = vmul.f32 %v926, %v1104
    %v1106 = vadd.f32 %v1093, %v1105
    %v1107 = vmul.f32 %v737, %v553
    %v1108 = vmul.f32 %v743, %v561
    %v1109 = vadd.f32 %v1107, %v1108
    %v1110 = vrot.slane %v1109, 4
    %v1111 = vadd.f32 %v1109, %v1110
    %v1112 = vrot.slane %v1111, 2
    %v1113 = vadd.f32 %v1111, %v1112
    %v1114 = vrot.slane %v1113, 1
    %v1115 = vadd.f32 %v1113, %v1114
    %v1116 = vmul.f32 %v1115, 1.442695
    %v1117 = vpow.pop %v1116
    %v1118 = vmul.f32 %v905, %v1117
    %v1119 = vmul.f32 %v737, %v554
    %v1120 = vmul.f32 %v743, %v562
    %v1121 = vadd.f32 %v1119, %v1120
    %v1122 = vrot.slane %v1121, 4
    %v1123 = vadd.f32 %v1121, %v1122
    %v1124 = vrot.slane %v1123, 2
    %v1125 = vadd.f32 %v1123, %v1124
    %v1126 = vrot.slane %v1125, 1
    %v1127 = vadd.f32 %v1125, %v1126
    %v1128 = vmul.f32 %v1127, 1.442695
    %v1129 = vpow.pop %v1128
    %v1130 = vmul.f32 %v908, %v1129
    %v1131 = vadd.f32 %v1118, %v1130
    %v1132 = vmul.f32 %v737, %v556
    %v1133 = vmul.f32 %v743, %v564
    %v1134 = vadd.f32 %v1132, %v1133
    %v1135 = vrot.slane %v1134, 4
    %v1136 = vadd.f32 %v1134, %v1135
    %v1137 = vrot.slane %v1136, 2
    %v1138 = vadd.f32 %v1136, %v1137
    %v1139 = vrot.slane %v1138, 1
    %v1140 = vadd.f32 %v1138, %v1139
    %v1141 = vmul.f32 %v1140, 1.442695
    %v1142 = vpow.pop %v1141
    %v1143 = vmul.f32 %v914, %v1142
    %v1144 = vadd.f32 %v1131, %v1143
    %v1145 = vmul.f32 %v737, %v557
    %v1146 = vmul.f32 %v743, %v565
    %v1147 = vadd.f32 %v1145, %v1146
    %v1148 = vrot.slane %v1147, 4
    %v1149 = vadd.f32 %v1147, %v1148
    %v1150 = vrot.slane %v1149, 2
    %v1151 = vadd.f32 %v1149, %v1150
    %v1152 = vrot.slane %v1151, 1
    %v1153 = vadd.f32 %v1151, %v1152
    %v1154 = vmul.f32 %v1153, 1.442695
    %v1155 = vpow.pop %v1154
    %v1156 = vmul.f32 %v917, %v1155
    %v1157 = vadd.f32 %v1144, %v1156
    %v1158 = vmul.f32 %v737, %v558
    %v1159 = vmul.f32 %v743, %v566
    %v1160 = vadd.f32 %v1158, %v1159
    %v1161 = vrot.slane %v1160, 4
    %v1162 = vadd.f32 %v1160, %v1161
    %v1163 = vrot.slane %v1162, 2
    %v1164 = vadd.f32 %v1162, %v1163
    %v1165 = vrot.slane %v1164, 1
    %v1166 = vadd.f32 %v1164, %v1165
    %v1167 = vmul.f32 %v1166, 1.442695
    %v1168 = vpow.pop %v1167
    %v1169 = vmul.f32 %v920, %v1168
    %v1170 = vadd.f32 %v1157, %v1169
    %v1171 = vmul.f32 %v737, %v559
    %v1172 = vmul.f32 %v743, %v567
    %v1173 = vadd.f32 %v1171, %v1172
    %v1174 = vrot.slane %v1173, 4
    %v1175 = vadd.f32 %v1173, %v1174
    %v1176 = vrot.slane %v1175, 2
    %v1177 = vadd.f32 %v1175, %v1176
    %v1178 = vrot.slane %v1177, 1
    %v1179 = vadd.f32 %v1177, %v1178
    %v1180 = vmul.f32 %v1179, 1.442695
    %v1181 = vpow.pop %v1180
    %v1182 = vmul.f32 %v923, %v1181
    %v1183 = vadd.f32 %v1170, %v1182
    %v1184 = vmul.f32 %v737, %v560
    %v1185 = vmul.f32 %v743, %v568
    %v1186 = vadd.f32 %v1184, %v1185
    %v1187 = vrot.slane %v1186, 4
    %v1188 = vadd.f32 %v1186, %v1187
    %v1189 = vrot.slane %v1188, 2
    %v1190 = vadd.f32 %v1188, %v1189
    %v1191 = vrot.slane %v1190, 1
    %v1192 = vadd.f32 %v1190, %v1191
    %v1193 = vmul.f32 %v1192, 1.442695
    %v1194 = vpow.pop %v1193
    %v1195 = vmul.f32 %v926, %v1194
    %v1196 = vadd.f32 %v1183, %v1195
    %v1197 = vmul.f32 %v739, %v553
    %v1198 = vmul.f32 %v745, %v561
    %v1199 = vadd.f32 %v1197, %v1198
    %v1200 = vrot.slane %v1199, 4
    %v1201 = vadd.f32 %v1199, %v1200
    %v1202 = vrot.slane %v1201, 2
    %v1203 = vadd.f32 %v1201, %v1202
    %v1204 = vrot.slane %v1203, 1
    %v1205 = vadd.f32 %v1203, %v1204
    %v1206 = vmul.f32 %v1205, 1.442695
    %v1207 = vpow.pop %v1206
    %v1208 = vmul.f32 %v905, %v1207
    %v1209 = vmul.f32 %v739, %v554
    %v1210 = vmul.f32 %v745, %v562
    %v1211 = vadd.f32 %v1209, %v1210
    %v1212 = vrot.slane %v1211, 4
    %v1213 = vadd.f32 %v1211, %v1212
    %v1214 = vrot.slane %v1213, 2
    %v1215 = vadd.f32 %v1213, %v1214
    %v1216 = vrot.slane %v1215, 1
    %v1217 = vadd.f32 %v1215, %v1216
    %v1218 = vmul.f32 %v1217, 1.442695
    %v1219 = vpow.pop %v1218
    %v1220 = vmul.f32 %v908, %v1219
    %v1221 = vadd.f32 %v1208, %v1220
    %v1222 = vmul.f32 %v739, %v555
    %v1223 = vmul.f32 %v745, %v563
    %v1224 = vadd.f32 %v1222, %v1223
    %v1225 = vrot.slane %v1224, 4
    %v1226 = vadd.f32 %v1224, %v1225
    %v1227 = vrot.slane %v1226, 2
    %v1228 = vadd.f32 %v1226, %v1227
    %v1229 = vrot.slane %v1228, 1
    %v1230 = vadd.f32 %v1228, %v1229
    %v1231 = vmul.f32 %v1230, 1.442695
    %v1232 = vpow.pop %v1231
    %v1233 = vmul.f32 %v911, %v1232
    %v1234 = vadd.f32 %v1221, %v1233
    %v1235 = vmul.f32 %v739, %v557
    %v1236 = vmul.f32 %v745, %v565
    %v1237 = vadd.f32 %v1235, %v1236
    %v1238 = vrot.slane %v1237, 4
    %v1239 = vadd.f32 %v1237, %v1238
    %v1240 = vrot.slane %v1239, 2
    %v1241 = vadd.f32 %v1239, %v1240
    %v1242 = vrot.slane %v1241, 1
    %v1243 = vadd.f32 %v1241, %v1242
    %v1244 = vmul.f32 %v1243, 1.442695
    %v1245 = vpow.pop %v1244
    %v1246 = vmul.f32 %v917, %v1245
    %v1247 = vadd.f32 %v1234, %v1246
    %v1248 = vmul.f32 %v739, %v558
    %v1249 = vmul.f32 %v745, %v566
    %v1250 = vadd.f32 %v1248, %v1249
    %v1251 = vrot.slane %v1250, 4
    %v1252 = vadd.f32 %v1250, %v1251
    %v1253 = vrot.slane %v1252, 2
    %v1254 = vadd.f32 %v1252, %v1253
    %v1255 = vrot.slane %v1254, 1
    %v1256 = vadd.f32 %v1254, %v1255
    %v1257 = vmul.f32 %v1256, 1.442695
    %v1258 = vpow.pop %v1257
    %v1259 = vmul.f32 %v920, %v1258
    %v1260 = vadd.f32 %v1247, %v1259
    %v1261 = vmul.f32 %v739, %v559
    %v1262 = vmul.f32 %v745, %v567
    %v1263 = vadd.f32 %v1261, %v1262
    %v1264 = vrot.slane %v1263, 4
    %v1265 = vadd.f32 %v1263, %v1264
    %v1266 = vrot.slane %v1265, 2
    %v1267 = vadd.f32 %v1265, %v1266
    %v1268 = vrot.slane %v1267, 1
    %v1269 = vadd.f32 %v1267, %v1268
    %v1270 = vmul.f32 %v1269, 1.442695
    %v1271 = vpow.pop %v1270
    %v1272 = vmul.f32 %v923, %v1271
    %v1273 = vadd.f32 %v1260, %v1272
    %v1274 = vmul.f32 %v739, %v560
    %v1275 = vmul.f32 %v745, %v568
    %v1276 = vadd.f32 %v1274, %v1275
    %v1277 = vrot.slane %v1276, 4
    %v1278 = vadd.f32 %v1276, %v1277
    %v1279 = vrot.slane %v1278, 2
    %v1280 = vadd.f32 %v1278, %v1279
    %v1281 = vrot.slane %v1280, 1
    %v1282 = vadd.f32 %v1280, %v1281
    %v1283 = vmul.f32 %v1282, 1.442695
    %v1284 = vpow.pop %v1283
    %v1285 = vmul.f32 %v926, %v1284
    %v1286 = vadd.f32 %v1273, %v1285
    %v1287 = vmul.f32 %v814, %v553
    %v1288 = vmul.f32 %v820, %v561
    %v1289 = vadd.f32 %v1287, %v1288
    %v1290 = vrot.slane %v1289, 4
    %v1291 = vadd.f32 %v1289, %v1290
    %v1292 = vrot.slane %v1291, 2
    %v1293 = vadd.f32 %v1291, %v1292
    %v1294 = vrot.slane %v1293, 1
    %v1295 = vadd.f32 %v1293, %v1294
    %v1296 = vmul.f32 %v1295, 1.442695
    %v1297 = vpow.pop %v1296
    %v1298 = vmul.f32 %v905, %v1297
    %v1299 = vmul.f32 %v814, %v554
    %v1300 = vmul.f32 %v820, %v562
    %v1301 = vadd.f32 %v1299, %v1300
    %v1302 = vrot.slane %v1301, 4
    %v1303 = vadd.f32 %v1301, %v1302
    %v1304 = vrot.slane %v1303, 2
    %v1305 = vadd.f32 %v1303, %v1304
    %v1306 = vrot.slane %v1305, 1
    %v1307 = vadd.f32 %v1305, %v1306
    %v1308 = vmul.f32 %v1307, 1.442695
    %v1309 = vpow.pop %v1308
    %v1310 = vmul.f32 %v908, %v1309
    %v1311 = vadd.f32 %v1298, %v1310
    %v1312 = vmul.f32 %v814, %v555
    %v1313 = vmul.f32 %v820, %v563
    %v1314 = vadd.f32 %v1312, %v1313
    %v1315 = vrot.slane %v1314, 4
    %v1316 = vadd.f32 %v1314, %v1315
    %v1317 = vrot.slane %v1316, 2
    %v1318 = vadd.f32 %v1316, %v1317
    %v1319 = vrot.slane %v1318, 1
    %v1320 = vadd.f32 %v1318, %v1319
    %v1321 = vmul.f32 %v1320, 1.442695
    %v1322 = vpow.pop %v1321
    %v1323 = vmul.f32 %v911, %v1322
    %v1324 = vadd.f32 %v1311, %v1323
    %v1325 = vmul.f32 %v814, %v556
    %v1326 = vmul.f32 %v820, %v564
    %v1327 = vadd.f32 %v1325, %v1326
    %v1328 = vrot.slane %v1327, 4
    %v1329 = vadd.f32 %v1327, %v1328
    %v1330 = vrot.slane %v1329, 2
    %v1331 = vadd.f32 %v1329, %v1330
    %v1332 = vrot.slane %v1331, 1
    %v1333 = vadd.f32 %v1331, %v1332
    %v1334 = vmul.f32 %v1333, 1.442695
    %v1335 = vpow.pop %v1334
    %v1336 = vmul.f32 %v914, %v1335
    %v1337 = vadd.f32 %v1324, %v1336
    %v1338 = vmul.f32 %v814, %v558
    %v1339 = vmul.f32 %v820, %v566
    %v1340 = vadd.f32 %v1338, %v1339
    %v1341 = vrot.slane %v1340, 4
    %v1342 = vadd.f32 %v1340, %v1341
    %v1343 = vrot.slane %v1342, 2
    %v1344 = vadd.f32 %v1342, %v1343
    %v1345 = vrot.slane %v1344, 1
    %v1346 = vadd.f32 %v1344, %v1345
    %v1347 = vmul.f32 %v1346, 1.442695
    %v1348 = vpow.pop %v1347
    %v1349 = vmul.f32 %v920, %v1348
    %v1350 = vadd.f32 %v1337, %v1349
    %v1351 = vmul.f32 %v814, %v559
    %v1352 = vmul.f32 %v820, %v567
    %v1353 = vadd.f32 %v1351, %v1352
    %v1354 = vrot.slane %v1353, 4
    %v1355 = vadd.f32 %v1353, %v1354
    %v1356 = vrot.slane %v1355, 2
    %v1357 = vadd.f32 %v1355, %v1356
    %v1358 = vrot.slane %v1357, 1
    %v1359 = vadd.f32 %v1357, %v1358
    %v1360 = vmul.f32 %v1359, 1.442695
    %v1361 = vpow.pop %v1360
    %v1362 = vmul.f32 %v923, %v1361
    %v1363 = vadd.f32 %v1350, %v1362
    %v1364 = vmul.f32 %v814, %v560
    %v1365 = vmul.f32 %v820, %v568
    %v1366 = vadd.f32 %v1364, %v1365
    %v1367 = vrot.slane %v1366, 4
    %v1368 = vadd.f32 %v1366, %v1367
    %v1369 = vrot.slane %v1368, 2
    %v1370 = vadd.f32 %v1368, %v1369
    %v1371 = vrot.slane %v1370, 1
    %v1372 = vadd.f32 %v1370, %v1371
    %v1373 = vmul.f32 %v1372, 1.442695
    %v1374 = vpow.pop %v1373
    %v1375 = vmul.f32 %v926, %v1374
    %v1376 = vadd.f32 %v1363, %v1375
    %v1377 = vmul.f32 %v816, %v553
    %v1378 = vmul.f32 %v822, %v561
    %v1379 = vadd.f32 %v1377, %v1378
    %v1380 = vrot.slane %v1379, 4
    %v1381 = vadd.f32 %v1379, %v1380
    %v1382 = vrot.slane %v1381, 2
    %v1383 = vadd.f32 %v1381, %v1382
    %v1384 = vrot.slane %v1383, 1
    %v1385 = vadd.f32 %v1383, %v1384
    %v1386 = vmul.f32 %v1385, 1.442695
    %v1387 = vpow.pop %v1386
    %v1388 = vmul.f32 %v905, %v1387
    %v1389 = vmul.f32 %v816, %v554
    %v1390 = vmul.f32 %v822, %v562
    %v1391 = vadd.f32 %v1389, %v1390
    %v1392 = vrot.slane %v1391, 4
    %v1393 = vadd.f32 %v1391, %v1392
    %v1394 = vrot.slane %v1393, 2
    %v1395 = vadd.f32 %v1393, %v1394
    %v1396 = vrot.slane %v1395, 1
    %v1397 = vadd.f32 %v1395, %v1396
    %v1398 = vmul.f32 %v1397, 1.442695
    %v1399 = vpow.pop %v1398
    %v1400 = vmul.f32 %v908, %v1399
    %v1401 = vadd.f32 %v1388, %v1400
    %v1402 = vmul.f32 %v816, %v555
    %v1403 = vmul.f32 %v822, %v563
    %v1404 = vadd.f32 %v1402, %v1403
    %v1405 = vrot.slane %v1404, 4
    %v1406 = vadd.f32 %v1404, %v1405
    %v1407 = vrot.slane %v1406, 2
    %v1408 = vadd.f32 %v1406, %v1407
    %v1409 = vrot.slane %v1408, 1
    %v1410 = vadd.f32 %v1408, %v1409
    %v1411 = vmul.f32 %v1410, 1.442695
    %v1412 = vpow.pop %v1411
    %v1413 = vmul.f32 %v911, %v1412
    %v1414 = vadd.f32 %v1401, %v1413
    %v1415 = vmul.f32 %v816, %v556
    %v1416 = vmul.f32 %v822, %v564
    %v1417 = vadd.f32 %v1415, %v1416
    %v1418 = vrot.slane %v1417, 4
    %v1419 = vadd.f32 %v1417, %v1418
    %v1420 = vrot.slane %v1419, 2
    %v1421 = vadd.f32 %v1419, %v1420
    %v1422 = vrot.slane %v1421, 1
    %v1423 = vadd.f32 %v1421, %v1422
    %v1424 = vmul.f32 %v1423, 1.442695
    %v1425 = vpow.pop %v1424
    %v1426 = vmul.f32 %v914, %v1425
    %v1427 = vadd.f32 %v1414, %v1426
    %v1428 = vmul.f32 %v816, %v557
    %v1429 = vmul.f32 %v822, %v565
    %v1430 = vadd.f32 %v1428, %v1429
    %v1431 = vrot.slane %v1430, 4
    %v1432 = vadd.f32 %v1430, %v1431
    %v1433 = vrot.slane %v1432, 2
    %v1434 = vadd.f32 %v1432, %v1433
    %v1435 = vrot.slane %v1434, 1
    %v1436 = vadd.f32 %v1434, %v1435
    %v1437 = vmul.f32 %v1436, 1.442695
    %v1438 = vpow.pop %v1437
    %v1439 = vmul.f32 %v917, %v1438
    %v1440 = vadd.f32 %v1427, %v1439
    %v1441 = vmul.f32 %v816, %v559
    %v1442 = vmul.f32 %v822, %v567
    %v1443 = vadd.f32 %v1441, %v1442
    %v1444 = vrot.slane %v1443, 4
    %v1445 = vadd.f32 %v1443, %v1444
    %v1446 = vrot.slane %v1445, 2
    %v1447 = vadd.f32 %v1445, %v1446
    %v1448 = vrot.slane %v1447, 1
    %v1449 = vadd.f32 %v1447, %v1448
    %v1450 = vmul.f32 %v1449, 1.442695
    %v1451 = vpow.pop %v1450
    %v1452 = vmul.f32 %v923, %v1451
    %v1453 = vadd.f32 %v1440, %v1452
    %v1454 = vmul.f32 %v816, %v560
    %v1455 = vmul.f32 %v822, %v568
    %v1456 = vadd.f32 %v1454, %v1455
    %v1457 = vrot.slane %v1456, 4
    %v1458 = vadd.f32 %v1456, %v1457
    %v1459 = vrot.slane %v1458, 2
    %v1460 = vadd.f32 %v1458, %v1459
    %v1461 = vrot.slane %v1460, 1
    %v1462 = vadd.f32 %v1460, %v1461
    %v1463 = vmul.f32 %v1462, 1.442695
    %v1464 = vpow.pop %v1463
    %v1465 = vmul.f32 %v926, %v1464
    %v1466 = vadd.f32 %v1453, %v1465
    %v1467 = vmul.f32 %v891, %v553
    %v1468 = vmul.f32 %v897, %v561
    %v1469 = vadd.f32 %v1467, %v1468
    %v1470 = vrot.slane %v1469, 4
    %v1471 = vadd.f32 %v1469, %v1470
    %v1472 = vrot.slane %v1471, 2
    %v1473 = vadd.f32 %v1471, %v1472
    %v1474 = vrot.slane %v1473, 1
    %v1475 = vadd.f32 %v1473, %v1474
    %v1476 = vmul.f32 %v1475, 1.442695
    %v1477 = vpow.pop %v1476
    %v1478 = vmul.f32 %v905, %v1477
    %v1479 = vmul.f32 %v891, %v554
    %v1480 = vmul.f32 %v897, %v562
    %v1481 = vadd.f32 %v1479, %v1480
    %v1482 = vrot.slane %v1481, 4
    %v1483 = vadd.f32 %v1481, %v1482
    %v1484 = vrot.slane %v1483, 2
    %v1485 = vadd.f32 %v1483, %v1484
    %v1486 = vrot.slane %v1485, 1
    %v1487 = vadd.f32 %v1485, %v1486
    %v1488 = vmul.f32 %v1487, 1.442695
    %v1489 = vpow.pop %v1488
    %v1490 = vmul.f32 %v908, %v1489
    %v1491 = vadd.f32 %v1478, %v1490
    %v1492 = vmul.f32 %v891, %v555
    %v1493 = vmul.f32 %v897, %v563
    %v1494 = vadd.f32 %v1492, %v1493
    %v1495 = vrot.slane %v1494, 4
    %v1496 = vadd.f32 %v1494, %v1495
    %v1497 = vrot.slane %v1496, 2
    %v1498 = vadd.f32 %v1496, %v1497
    %v1499 = vrot.slane %v1498, 1
    %v1500 = vadd.f32 %v1498, %v1499
    %v1501 = vmul.f32 %v1500, 1.442695
    %v1502 = vpow.pop %v1501
    %v1503 = vmul.f32 %v911, %v1502
    %v1504 = vadd.f32 %v1491, %v1503
    %v1505 = vmul.f32 %v891, %v556
    %v1506 = vmul.f32 %v897, %v564
    %v1507 = vadd.f32 %v1505, %v1506
    %v1508 = vrot.slane %v1507, 4
    %v1509 = vadd.f32 %v1507, %v1508
    %v1510 = vrot.slane %v1509, 2
    %v1511 = vadd.f32 %v1509, %v1510
    %v1512 = vrot.slane %v1511, 1
    %v1513 = vadd.f32 %v1511, %v1512
    %v1514 = vmul.f32 %v1513, 1.442695
    %v1515 = vpow.pop %v1514
    %v1516 = vmul.f32 %v914, %v1515
    %v1517 = vadd.f32 %v1504, %v1516
    %v1518 = vmul.f32 %v891, %v557
    %v1519 = vmul.f32 %v897, %v565
    %v1520 = vadd.f32 %v1518, %v1519
    %v1521 = vrot.slane %v1520, 4
    %v1522 = vadd.f32 %v1520, %v1521
    %v1523 = vrot.slane %v1522, 2
    %v1524 = vadd.f32 %v1522, %v1523
    %v1525 = vrot.slane %v1524, 1
    %v1526 = vadd.f32 %v1524, %v1525
    %v1527 = vmul.f32 %v1526, 1.442695
    %v1528 = vpow.pop %v1527
    %v1529 = vmul.f32 %v917, %v1528
    %v1530 = vadd.f32 %v1517, %v1529
    %v1531 = vmul.f32 %v891, %v558
    %v1532 = vmul.f32 %v897, %v566
    %v1533 = vadd.f32 %v1531, %v1532
    %v1534 = vrot.slane %v1533, 4
    %v1535 = vadd.f32 %v1533, %v1534
    %v1536 = vrot.slane %v1535, 2
    %v1537 = vadd.f32 %v1535, %v1536
    %v1538 = vrot.slane %v1537, 1
    %v1539 = vadd.f32 %v1537, %v1538
    %v1540 = vmul.f32 %v1539, 1.442695
    %v1541 = vpow.pop %v1540
    %v1542 = vmul.f32 %v920, %v1541
    %v1543 = vadd.f32 %v1530, %v1542
    %v1544 = vmul.f32 %v891, %v560
    %v1545 = vmul.f32 %v897, %v568
    %v1546 = vadd.f32 %v1544, %v1545
    %v1547 = vrot.slane %v1546, 4
    %v1548 = vadd.f32 %v1546, %v1547
    %v1549 = vrot.slane %v1548, 2
    %v1550 = vadd.f32 %v1548, %v1549
    %v1551 = vrot.slane %v1550, 1
    %v1552 = vadd.f32 %v1550, %v1551
    %v1553 = vmul.f32 %v1552, 1.442695
    %v1554 = vpow.pop %v1553
    %v1555 = vmul.f32 %v926, %v1554
    %v1556 = vadd.f32 %v1543, %v1555
    %v1557 = vmul.f32 %v893, %v553
    %v1558 = vmul.f32 %v899, %v561
    %v1559 = vadd.f32 %v1557, %v1558
    %v1560 = vrot.slane %v1559, 4
    %v1561 = vadd.f32 %v1559, %v1560
    %v1562 = vrot.slane %v1561, 2
    %v1563 = vadd.f32 %v1561, %v1562
    %v1564 = vrot.slane %v1563, 1
    %v1565 = vadd.f32 %v1563, %v1564
    %v1566 = vmul.f32 %v1565, 1.442695
    %v1567 = vpow.pop %v1566
    %v1568 = vmul.f32 %v905, %v1567
    %v1569 = vmul.f32 %v893, %v554
    %v1570 = vmul.f32 %v899, %v562
    %v1571 = vadd.f32 %v1569, %v1570
    %v1572 = vrot.slane %v1571, 4
    %v1573 = vadd.f32 %v1571, %v1572
    %v1574 = vrot.slane %v1573, 2
    %v1575 = vadd.f32 %v1573, %v1574
    %v1576 = vrot.slane %v1575, 1
    %v1577 = vadd.f32 %v1575, %v1576
    %v1578 = vmul.f32 %v1577, 1.442695
    %v1579 = vpow.pop %v1578
    %v1580 = vmul.f32 %v908, %v1579
    %v1581 = vadd.f32 %v1568, %v1580
    %v1582 = vmul.f32 %v893, %v555
    %v1583 = vmul.f32 %v899, %v563
    %v1584 = vadd.f32 %v1582, %v1583
    %v1585 = vrot.slane %v1584, 4
    %v1586 = vadd.f32 %v1584, %v1585
    %v1587 = vrot.slane %v1586, 2
    %v1588 = vadd.f32 %v1586, %v1587
    %v1589 = vrot.slane %v1588, 1
    %v1590 = vadd.f32 %v1588, %v1589
    %v1591 = vmul.f32 %v1590, 1.442695
    %v1592 = vpow.pop %v1591
    %v1593 = vmul.f32 %v911, %v1592
    %v1594 = vadd.f32 %v1581, %v1593
    %v1595 = vmul.f32 %v893, %v556
    %v1596 = vmul.f32 %v899, %v564
    %v1597 = vadd.f32 %v1595, %v1596
    %v1598 = vrot.slane %v1597, 4
    %v1599 = vadd.f32 %v1597, %v1598
    %v1600 = vrot.slane %v1599, 2
    %v1601 = vadd.f32 %v1599, %v1600
    %v1602 = vrot.slane %v1601, 1
    %v1603 = vadd.f32 %v1601, %v1602
    %v1604 = vmul.f32 %v1603, 1.442695
    %v1605 = vpow.pop %v1604
    %v1606 = vmul.f32 %v914, %v1605
    %v1607 = vadd.f32 %v1594, %v1606
    %v1608 = vmul.f32 %v893, %v557
    %v1609 = vmul.f32 %v899, %v565
    %v1610 = vadd.f32 %v1608, %v1609
    %v1611 = vrot.slane %v1610, 4
    %v1612 = vadd.f32 %v1610, %v1611
    %v1613 = vrot.slane %v1612, 2
    %v1614 = vadd.f32 %v1612, %v1613
    %v1615 = vrot.slane %v1614, 1
    %v1616 = vadd.f32 %v1614, %v1615
    %v1617 = vmul.f32 %v1616, 1.442695
    %v1618 = vpow.pop %v1617
    %v1619 = vmul.f32 %v917, %v1618
    %v1620 = vadd.f32 %v1607, %v1619
    %v1621 = vmul.f32 %v893, %v558
    %v1622 = vmul.f32 %v899, %v566
    %v1623 = vadd.f32 %v1621, %v1622
    %v1624 = vrot.slane %v1623, 4
    %v1625 = vadd.f32 %v1623, %v1624
    %v1626 = vrot.slane %v1625, 2
    %v1627 = vadd.f32 %v1625, %v1626
    %v1628 = vrot.slane %v1627, 1
    %v1629 = vadd.f32 %v1627, %v1628
    %v1630 = vmul.f32 %v1629, 1.442695
    %v1631 = vpow.pop %v1630
    %v1632 = vmul.f32 %v920, %v1631
    %v1633 = vadd.f32 %v1620, %v1632
    %v1634 = vmul.f32 %v893, %v559
    %v1635 = vmul.f32 %v899, %v567
    %v1636 = vadd.f32 %v1634, %v1635
    %v1637 = vrot.slane %v1636, 4
    %v1638 = vadd.f32 %v1636, %v1637
    %v1639 = vrot.slane %v1638, 2
    %v1640 = vadd.f32 %v1638, %v1639
    %v1641 = vrot.slane %v1640, 1
    %v1642 = vadd.f32 %v1640, %v1641
    %v1643 = vmul.f32 %v1642, 1.442695
    %v1644 = vpow.pop %v1643
    %v1645 = vmul.f32 %v923, %v1644
    %v1646 = vadd.f32 %v1633, %v1645
    %v1647 = vadd.f32 %v1016, %v1106
    %v1648 = vadd.f32 %v1647, %v1196
    %v1649 = vadd.f32 %v1648, %v1286
    %v1650 = vadd.f32 %v1649, %v1376
    %v1651 = vadd.f32 %v1650, %v1466
    %v1652 = vadd.f32 %v1651, %v1556
    %v1653 = vadd.f32 %v1652, %v1646
    %v1654 = vlaneseq
    %v1655 = vshrl.u32 %v1654, 7
    %v1656 = vsub.s32 0, %v1655
    %v1657 = vrot.slane %v570, %v1656
    %v1658 = vmul.f32 %v905, %v1657
    %v1659 = vlaneseq
    %v1660 = vshrl.u32 %v1659, 7
    %v1661 = vsub.s32 0, %v1660
    %v1662 = vrot.slane %v572, %v1661
    %v1663 = vmul.f32 %v908, %v1662
    %v1664 = vadd.f32 %v1658, %v1663
    %v1665 = vlaneseq
    %v1666 = vshrl.u32 %v1665, 7
    %v1667 = vsub.s32 0, %v1666
    %v1668 = vrot.slane %v574, %v1667
    %v1669 = vmul.f32 %v911, %v1668
    %v1670 = vadd.f32 %v1664, %v1669
    %v1671 = vlaneseq
    %v1672 = vshrl.u32 %v1671, 7
    %v1673 = vsub.s32 0, %v1672
    %v1674 = vrot.slane %v576, %v1673
    %v1675 = vmul.f32 %v914, %v1674
    %v1676 = vadd.f32 %v1670, %v1675
    %v1677 = vlaneseq
    %v1678 = vshrl.u32 %v1677, 7
    %v1679 = vsub.s32 0, %v1678
    %v1680 = vrot.slane %v578, %v1679
    %v1681 = vmul.f32 %v917, %v1680
    %v1682 = vadd.f32 %v1676, %v1681
    %v1683 = vlaneseq
    %v1684 = vshrl.u32 %v1683, 7
    %v1685 = vsub.s32 0, %v1684
    %v1686 = vrot.slane %v580, %v1685
    %v1687 = vmul.f32 %v920, %v1686
    %v1688 = vadd.f32 %v1682, %v1687
    %v1689 = vlaneseq
    %v1690 = vshrl.u32 %v1689, 7
    %v1691 = vsub.s32 0, %v1690
    %v1692 = vrot.slane %v582, %v1691
    %v1693 = vmul.f32 %v923, %v1692
    %v1694 = vadd.f32 %v1688, %v1693
    %v1695 = vlaneseq
    %v1696 = vshrl.u32 %v1695, 7
    %v1697 = vsub.s32 0, %v1696
    %v1698 = vrot.slane %v584, %v1697
    %v1699 = vmul.f32 %v926, %v1698
    %v1700 = vadd.f32 %v1694, %v1699
    %v1701 = vmul.f32 %v908, %v1653
    %v1702 = vsub.f32 %v1701, %v1106
    %v1703 = vmul.f32 %v911, %v1653
    %v1704 = vsub.f32 %v1703, %v1196
    %v1705 = vmul.f32 %v914, %v1653
    %v1706 = vsub.f32 %v1705, %v1286
    %v1707 = vmul.f32 %v917, %v1653
    %v1708 = vsub.f32 %v1707, %v1376
    %v1709 = vmul.f32 %v920, %v1653
    %v1710 = vsub.f32 %v1709, %v1466
    %v1711 = vmul.f32 %v923, %v1653
    %v1712 = vsub.f32 %v1711, %v1556
    %v1713 = vmul.f32 %v926, %v1653
    %v1714 = vsub.f32 %v1713, %v1646
    %v1715 = vrcp.pop %v1700
    %v1716 = vmul.f32 %v1700, %v1715
    %v1717 = vsub.f32 2.0, %v1716
    %v1718 = vmul.f32 %v1715, %v1717
    %v1719 = vlaneseq
    %v1720 = vshrl.u32 %v1719, 7
    %v1721 = vsub.s32 0, %v1720
    %v1722 = vrot.slane %v1718, %v1721
    %v1723 = vmul.f32 %v1700, %v1722
    %v1724 = vmul.f32 %v905, %v1722
    %v1725 = vsub.f32 %v1700, 1.0
    %v1726 = vlaneseq
    %v1727 = vshrl.u32 %v1726, 7
    %v1728 = vsub.s32 0, %v1727
    %v1729 = vrot.slane %v1725, %v1728
    %v1730 = vmul.f32 %v1729, %v1723
    %v1731 = vsub.f32 %v1700, %v1730
    %v1732 = vmul.f32 %v1729, %v1724
    %v1733 = vsub.f32 %v905, %v1732
    %v1734 = vlaneseq
    %v1735 = vshrl.u32 %v1734, 7
    %v1736 = vsub.s32 0, %v1735
    %v1737 = vrot.slane %v1702, %v1736
    %v1738 = vmul.f32 %v1737, %v1723
    %v1739 = vsub.f32 %v1702, %v1738
    %v1740 = vmul.f32 %v1737, %v1724
    %v1741 = vsub.f32 %v908, %v1740
    %v1742 = vlaneseq
    %v1743 = vshrl.u32 %v1742, 7
    %v1744 = vsub.s32 0, %v1743
    %v1745 = vrot.slane %v1704, %v1744
    %v1746 = vmul.f32 %v1745, %v1723
    %v1747 = vsub.f32 %v1704, %v1746
    %v1748 = vmul.f32 %v1745, %v1724
    %v1749 = vsub.f32 %v911, %v1748
    %v1750 = vlaneseq
    %v1751 = vshrl.u32 %v1750, 7
    %v1752 = vsub.s32 0, %v1751
    %v1753 = vrot.slane %v1706, %v1752
    %v1754 = vmul.f32 %v1753, %v1723
    %v1755 = vsub.f32 %v1706, %v1754
    %v1756 = vmul.f32 %v1753, %v1724
    %v1757 = vsub.f32 %v914, %v1756
    %v1758 = vlaneseq
    %v1759 = vshrl.u32 %v1758, 7
    %v1760 = vsub.s32 0, %v1759
    %v1761 = vrot.slane %v1708, %v1760
    %v1762 = vmul.f32 %v1761, %v1723
    %v1763 = vsub.f32 %v1708, %v1762
    %v1764 = vmul.f32 %v1761, %v1724
    %v1765 = vsub.f32 %v917, %v1764
    %v1766 = vlaneseq
    %v1767 = vshrl.u32 %v1766, 7
    %v1768 = vsub.s32 0, %v1767
    %v1769 = vrot.slane %v1710, %v1768
    %v1770 = vmul.f32 %v1769, %v1723
    %v1771 = vsub.f32 %v1710, %v1770
    %v1772 = vmul.f32 %v1769, %v1724
    %v1773 = vsub.f32 %v920, %v1772
    %v1774 = vlaneseq
    %v1775 = vshrl.u32 %v1774, 7
    %v1776 = vsub.s32 0, %v1775
    %v1777 = vrot.slane %v1712, %v1776
    %v1778 = vmul.f32 %v1777, %v1723
    %v1779 = vsub.f32 %v1712, %v1778
    %v1780 = vmul.f32 %v1777, %v1724
    %v1781 = vsub.f32 %v923, %v1780
    %v1782 = vlaneseq
    %v1783 = vshrl.u32 %v1782, 7
    %v1784 = vsub.s32 0, %v1783
    %v1785 = vrot.slane %v1714, %v1784
    %v1786 = vmul.f32 %v1785, %v1723
    %v1787 = vsub.f32 %v1714, %v1786
    %v1788 = vmul.f32 %v1785, %v1724
    %v1789 = vsub.f32 %v926, %v1788
    %v1790 = vrcp.pop %v1739
    %v1791 = vmul.f32 %v1739, %v1790
    %v1792 = vsub.f32 2.0, %v1791
    %v1793 = vmul.f32 %v1790, %v1792
    %v1794 = vlaneseq
    %v1795 = vshrl.u32 %v1794, 7
    %v1796 = vsub.s32 1, %v1795
    %v1797 = vrot.slane %v1793, %v1796
    %v1798 = vmul.f32 %v1739, %v1797
    %v1799 = vmul.f32 %v1741, %v1797
    %v1800 = vlaneseq
    %v1801 = vshrl.u32 %v1800, 7
    %v1802 = vsub.s32 1, %v1801
    %v1803 = vrot.slane %v1731, %v1802
    %v1804 = vmul.f32 %v1803, %v1798
    %v1805 = vsub.f32 %v1731, %v1804
    %v1806 = vmul.f32 %v1803, %v1799
    %v1807 = vsub.f32 %v1733, %v1806
    %v1808 = vsub.f32 %v1739, 1.0
    %v1809 = vlaneseq
    %v1810 = vshrl.u32 %v1809, 7
    %v1811 = vsub.s32 1, %v1810
    %v1812 = vrot.slane %v1808, %v1811
    %v1813 = vmul.f32 %v1812, %v1798
    %v1814 = vsub.f32 %v1739, %v1813
    %v1815 = vmul.f32 %v1812, %v1799
    %v1816 = vsub.f32 %v1741, %v1815
    %v1817 = vlaneseq
    %v1818 = vshrl.u32 %v1817, 7
    %v1819 = vsub.s32 1, %v1818
    %v1820 = vrot.slane %v1747, %v1819
    %v1821 = vmul.f32 %v1820, %v1798
    %v1822 = vsub.f32 %v1747, %v1821
    %v1823 = vmul.f32 %v1820, %v1799
    %v1824 = vsub.f32 %v1749, %v1823
    %v1825 = vlaneseq
    %v1826 = vshrl.u32 %v1825, 7
    %v1827 = vsub.s32 1, %v1826
    %v1828 = vrot.slane %v1755, %v1827
    %v1829 = vmul.f32 %v1828, %v1798
    %v1830 = vsub.f32 %v1755, %v1829
    %v1831 = vmul.f32 %v1828, %v1799
    %v1832 = vsub.f32 %v1757, %v1831
    %v1833 = vlaneseq
    %v1834 = vshrl.u32 %v1833, 7
    %v1835 = vsub.s32 1, %v1834
    %v1836 = vrot.slane %v1763, %v1835
    %v1837 = vmul.f32 %v1836, %v1798
    %v1838 = vsub.f32 %v1763, %v1837
    %v1839 = vmul.f32 %v1836, %v1799
    %v1840 = vsub.f32 %v1765, %v1839
    %v1841 = vlaneseq
    %v1842 = vshrl.u32 %v1841, 7
    %v1843 = vsub.s32 1, %v1842
    %v1844 = vrot.slane %v1771, %v1843
    %v1845 = vmul.f32 %v1844, %v1798
    %v1846 = vsub.f32 %v1771, %v1845
    %v1847 = vmul.f32 %v1844, %v1799
    %v1848 = vsub.f32 %v1773, %v1847
    %v1849 = vlaneseq
    %v1850 = vshrl.u32 %v1849, 7
    %v1851 = vsub.s32 1, %v1850
    %v1852 = vrot.slane %v1779, %v1851
    %v1853 = vmul.f32 %v1852, %v1798
    %v1854 = vsub.f32 %v1779, %v1853
    %v1855 = vmul.f32 %v1852, %v1799
    %v1856 = vsub.f32 %v1781, %v1855
    %v1857 = vlaneseq
    %v1858 = vshrl.u32 %v1857, 7
    %v1859 = vsub.s32 1, %v1858
    %v1860 = vrot.slane %v1787, %v1859
    %v1861 = vmul.f32 %v1860, %v1798
    %v1862 = vsub.f32 %v1787, %v1861
    %v1863 = vmul.f32 %v1860, %v1799
    %v1864 = vsub.f32 %v1789, %v1863
    %v1865 = vrcp.pop %v1822
    %v1866 = vmul.f32 %v1822, %v1865
    %v1867 = vsub.f32 2.0, %v1866
    %v1868 = vmul.f32 %v1865, %v1867
    %v1869 = vlaneseq
    %v1870 = vshrl.u32 %v1869, 7
    %v1871 = vsub.s32 2, %v1870
    %v1872 = vrot.slane %v1868, %v1871
    %v1873 = vmul.f32 %v1822, %v1872
    %v1874 = vmul.f32 %v1824, %v1872
    %v1875 = vlaneseq
    %v1876 = vshrl.u32 %v1875, 7
    %v1877 = vsub.s32 2, %v1876
    %v1878 = vrot.slane %v1805, %v1877
    %v1879 = vmul.f32 %v1878, %v1873
    %v1880 = vsub.f32 %v1805, %v1879
    %v1881 = vmul.f32 %v1878, %v1874
    %v1882 = vsub.f32 %v1807, %v1881
    %v1883 = vlaneseq
    %v1884 = vshrl.u32 %v1883, 7
    %v1885 = vsub.s32 2, %v1884
    %v1886 = vrot.slane %v1814, %v1885
    %v1887 = vmul.f32 %v1886, %v1873
    %v1888 = vsub.f32 %v1814, %v1887
    %v1889 = vmul.f32 %v1886, %v1874
    %v1890 = vsub.f32 %v1816, %v1889
    %v1891 = vsub.f32 %v1822, 1.0
    %v1892 = vlaneseq
    %v1893 = vshrl.u32 %v1892, 7
    %v1894 = vsub.s32 2, %v1893
    %v1895 = vrot.slane %v1891, %v1894
    %v1896 = vmul.f32 %v1895, %v1873
    %v1897 = vsub.f32 %v1822, %v1896
    %v1898 = vmul.f32 %v1895, %v1874
    %v1899 = vsub.f32 %v1824, %v1898
    %v1900 = vlaneseq
    %v1901 = vshrl.u32 %v1900, 7
    %v1902 = vsub.s32 2, %v1901
    %v1903 = vrot.slane %v1830, %v1902
    %v1904 = vmul.f32 %v1903, %v1873
    %v1905 = vsub.f32 %v1830, %v1904
    %v1906 = vmul.f32 %v1903, %v1874
    %v1907 = vsub.f32 %v1832, %v1906
    %v1908 = vlaneseq
    %v1909 = vshrl.u32 %v1908, 7
    %v1910 = vsub.s32 2, %v1909
    %v1911 = vrot.slane %v1838, %v1910
    %v1912 = vmul.f32 %v1911, %v1873
    %v1913 = vsub.f32 %v1838, %v1912
    %v1914 = vmul.f32 %v1911, %v1874
    %v1915 = vsub.f32 %v1840, %v1914
    %v1916 = vlaneseq
    %v1917 = vshrl.u32 %v1916, 7
    %v1918 = vsub.s32 2, %v1917
    %v1919 = vrot.slane %v1846, %v1918
    %v1920 = vmul.f32 %v1919, %v1873
    %v1921 = vsub.f32 %v1846, %v1920
    %v1922 = vmul.f32 %v1919, %v1874
    %v1923 = vsub.f32 %v1848, %v1922
    %v1924 = vlaneseq
    %v1925 = vshrl.u32 %v1924, 7
    %v1926 = vsub.s32 2, %v1925
    %v1927 = vrot.slane %v1854, %v1926
    %v1928 = vmul.f32 %v1927, %v1873
    %v1929 = vsub.f32 %v1854, %v1928
    %v1930 = vmul.f32 %v1927, %v1874
    %v1931 = vsub.f32 %v1856, %v1930
    %v1932 = vlaneseq
    %v1933 = vshrl.u32 %v1932, 7
    %v1934 = vsub.s32 2, %v1933
    %v1935 = vrot.slane %v1862, %v1934
    %v1936 = vmul.f32 %v1935, %v1873
    %v1937 = vsub.f32 %v1862, %v1936
    %v1938 = vmul.f32 %v1935, %v1874
    %v1939 = vsub.f32 %v1864, %v1938
    %v1940 = vrcp.pop %v1905
    %v1941 = vmul.f32 %v1905, %v1940
    %v1942 = vsub.f32 2.0, %v1941
    %v1943 = vmul.f32 %v1940, %v1942
    %v1944 = vlaneseq
    %v1945 = vshrl.u32 %v1944, 7
    %v1946 = vsub.s32 3, %v1945
    %v1947 = vrot.slane %v1943, %v1946
    %v1948 = vmul.f32 %v1905, %v1947
    %v1949 = vmul.f32 %v1907, %v1947
    %v1950 = vlaneseq
    %v1951 = vshrl.u32 %v1950, 7
    %v1952 = vsub.s32 3, %v1951
    %v1953 = vrot.slane %v1880, %v1952
    %v1954 = vmul.f32 %v1953, %v1948
    %v1955 = vsub.f32 %v1880, %v1954
    %v1956 = vmul.f32 %v1953, %v1949
    %v1957 = vsub.f32 %v1882, %v1956
    %v1958 = vlaneseq
    %v1959 = vshrl.u32 %v1958, 7
    %v1960 = vsub.s32 3, %v1959
    %v1961 = vrot.slane %v1888, %v1960
    %v1962 = vmul.f32 %v1961, %v1948
    %v1963 = vsub.f32 %v1888, %v1962
    %v1964 = vmul.f32 %v1961, %v1949
    %v1965 = vsub.f32 %v1890, %v1964
    %v1966 = vlaneseq
    %v1967 = vshrl.u32 %v1966, 7
    %v1968 = vsub.s32 3, %v1967
    %v1969 = vrot.slane %v1897, %v1968
    %v1970 = vmul.f32 %v1969, %v1948
    %v1971 = vsub.f32 %v1897, %v1970
    %v1972 = vmul.f32 %v1969, %v1949
    %v1973 = vsub.f32 %v1899, %v1972
    %v1974 = vsub.f32 %v1905, 1.0
    %v1975 = vlaneseq
    %v1976 = vshrl.u32 %v1975, 7
    %v1977 = vsub.s32 3, %v1976
    %v1978 = vrot.slane %v1974, %v1977
    %v1979 = vmul.f32 %v1978, %v1948
    %v1980 = vsub.f32 %v1905, %v1979
    %v1981 = vmul.f32 %v1978, %v1949
    %v1982 = vsub.f32 %v1907, %v1981
    %v1983 = vlaneseq
    %v1984 = vshrl.u32 %v1983, 7
    %v1985 = vsub.s32 3, %v1984
    %v1986 = vrot.slane %v1913, %v1985
    %v1987 = vmul.f32 %v1986, %v1948
    %v1988 = vsub.f32 %v1913, %v1987
    %v1989 = vmul.f32 %v1986, %v1949
    %v1990 = vsub.f32 %v1915, %v1989
    %v1991 = vlaneseq
    %v1992 = vshrl.u32 %v1991, 7
    %v1993 = vsub.s32 3, %v1992
    %v1994 = vrot.slane %v1921, %v1993
    %v1995 = vmul.f32 %v1994, %v1948
    %v1996 = vsub.f32 %v1921, %v1995
    %v1997 = vmul.f32 %v1994, %v1949
    %v1998 = vsub.f32 %v1923, %v1997
    %v1999 = vlaneseq
    %v2000 = vshrl.u32 %v1999, 7
    %v2001 = vsub.s32 3, %v2000
    %v2002 = vrot.slane %v1929, %v2001
    %v2003 = vmul.f32 %v2002, %v1948
    %v2004 = vsub.f32 %v1929, %v2003
    %v2005 = vmul.f32 %v2002, %v1949
    %v2006 = vsub.f32 %v1931, %v2005
    %v2007 = vlaneseq
    %v2008 = vshrl.u32 %v2007, 7
    %v2009 = vsub.s32 3, %v2008
    %v2010 = vrot.slane %v1937, %v2009
    %v2011 = vmul.f32 %v2010, %v1948
    %v2012 = vsub.f32 %v1937, %v2011
    %v2013 = vmul.f32 %v2010, %v1949
    %v2014 = vsub.f32 %v1939, %v2013
    %v2015 = vrcp.pop %v1988
    %v2016 = vmul.f32 %v1988, %v2015
    %v2017 = vsub.f32 2.0, %v2016
    %v2018 = vmul.f32 %v2015, %v2017
    %v2019 = vlaneseq
    %v2020 = vshrl.u32 %v2019, 7
    %v2021 = vsub.s32 4, %v2020
    %v2022 = vrot.slane %v2018, %v2021
    %v2023 = vmul.f32 %v1988, %v2022
    %v2024 = vmul.f32 %v1990, %v2022
    %v2025 = vlaneseq
    %v2026 = vshrl.u32 %v2025, 7
    %v2027 = vsub.s32 4, %v2026
    %v2028 = vrot.slane %v1955, %v2027
    %v2029 = vmul.f32 %v2028, %v2023
    %v2030 = vsub.f32 %v1955, %v2029
    %v2031 = vmul.f32 %v2028, %v2024
    %v2032 = vsub.f32 %v1957, %v2031
    %v2033 = vlaneseq
    %v2034 = vshrl.u32 %v2033, 7
    %v2035 = vsub.s32 4, %v2034
    %v2036 = vrot.slane %v1963, %v2035
    %v2037 = vmul.f32 %v2036, %v2023
    %v2038 = vsub.f32 %v1963, %v2037
    %v2039 = vmul.f32 %v2036, %v2024
    %v2040 = vsub.f32 %v1965, %v2039
    %v2041 = vlaneseq
    %v2042 = vshrl.u32 %v2041, 7
    %v2043 = vsub.s32 4, %v2042
    %v2044 = vrot.slane %v1971, %v2043
    %v2045 = vmul.f32 %v2044, %v2023
    %v2046 = vsub.f32 %v1971, %v2045
    %v2047 = vmul.f32 %v2044, %v2024
    %v2048 = vsub.f32 %v1973, %v2047
    %v2049 = vlaneseq
    %v2050 = vshrl.u32 %v2049, 7
    %v2051 = vsub.s32 4, %v2050
    %v2052 = vrot.slane %v1980, %v2051
    %v2053 = vmul.f32 %v2052, %v2023
    %v2054 = vsub.f32 %v1980, %v2053
    %v2055 = vmul.f32 %v2052, %v2024
    %v2056 = vsub.f32 %v1982, %v2055
    %v2057 = vsub.f32 %v1988, 1.0
    %v2058 = vlaneseq
    %v2059 = vshrl.u32 %v2058, 7
    %v2060 = vsub.s32 4, %v2059
    %v2061 = vrot.slane %v2057, %v2060
    %v2062 = vmul.f32 %v2061, %v2023
    %v2063 = vsub.f32 %v1988, %v2062
    %v2064 = vmul.f32 %v2061, %v2024
    %v2065 = vsub.f32 %v1990, %v2064
    %v2066 = vlaneseq
    %v2067 = vshrl.u32 %v2066, 7
    %v2068 = vsub.s32 4, %v2067
    %v2069 = vrot.slane %v1996, %v2068
    %v2070 = vmul.f32 %v2069, %v2023
    %v2071 = vsub.f32 %v1996, %v2070
    %v2072 = vmul.f32 %v2069, %v2024
    %v2073 = vsub.f32 %v1998, %v2072
    %v2074 = vlaneseq
    %v2075 = vshrl.u32 %v2074, 7
    %v2076 = vsub.s32 4, %v2075
    %v2077 = vrot.slane %v2004, %v2076
    %v2078 = vmul.f32 %v2077, %v2023
    %v2079 = vsub.f32 %v2004, %v2078
    %v2080 = vmul.f32 %v2077, %v2024
    %v2081 = vsub.f32 %v2006, %v2080
    %v2082 = vlaneseq
    %v2083 = vshrl.u32 %v2082, 7
    %v2084 = vsub.s32 4, %v2083
    %v2085 = vrot.slane %v2012, %v2084
    %v2086 = vmul.f32 %v2085, %v2023
    %v2087 = vsub.f32 %v2012, %v2086
    %v2088 = vmul.f32 %v2085, %v2024
    %v2089 = vsub.f32 %v2014, %v2088
    %v2090 = vrcp.pop %v2071
    %v2091 = vmul.f32 %v2071, %v2090
    %v2092 = vsub.f32 2.0, %v2091
    %v2093 = vmul.f32 %v2090, %v2092
    %v2094 = vlaneseq
    %v2095 = vshrl.u32 %v2094, 7
    %v2096 = vsub.s32 5, %v2095
    %v2097 = vrot.slane %v2093, %v2096
    %v2098 = vmul.f32 %v2071, %v2097
    %v2099 = vmul.f32 %v2073, %v2097
    %v2100 = vlaneseq
    %v2101 = vshrl.u32 %v2100, 7
    %v2102 = vsub.s32 5, %v2101
    %v2103 = vrot.slane %v2030, %v2102
    %v2104 = vmul.f32 %v2103, %v2098
    %v2105 = vsub.f32 %v2030, %v2104
    %v2106 = vmul.f32 %v2103, %v2099
    %v2107 = vsub.f32 %v2032, %v2106
    %v2108 = vlaneseq
    %v2109 = vshrl.u32 %v2108, 7
    %v2110 = vsub.s32 5, %v2109
    %v2111 = vrot.slane %v2038, %v2110
    %v2112 = vmul.f32 %v2111, %v2098
    %v2113 = vsub.f32 %v2038, %v2112
    %v2114 = vmul.f32 %v2111, %v2099
    %v2115 = vsub.f32 %v2040, %v2114
    %v2116 = vlaneseq
    %v2117 = vshrl.u32 %v2116, 7
    %v2118 = vsub.s32 5, %v2117
    %v2119 = vrot.slane %v2046, %v2118
    %v2120 = vmul.f32 %v2119, %v2098
    %v2121 = vsub.f32 %v2046, %v2120
    %v2122 = vmul.f32 %v2119, %v2099
    %v2123 = vsub.f32 %v2048, %v2122
    %v2124 = vlaneseq
    %v2125 = vshrl.u32 %v2124, 7
    %v2126 = vsub.s32 5, %v2125
    %v2127 = vrot.slane %v2054, %v2126
    %v2128 = vmul.f32 %v2127, %v2098
    %v2129 = vsub.f32 %v2054, %v2128
    %v2130 = vmul.f32 %v2127, %v2099
    %v2131 = vsub.f32 %v2056, %v2130
    %v2132 = vlaneseq
    %v2133 = vshrl.u32 %v2132, 7
    %v2134 = vsub.s32 5, %v2133
    %v2135 = vrot.slane %v2063, %v2134
    %v2136 = vmul.f32 %v2135, %v2098
    %v2137 = vsub.f32 %v2063, %v2136
    %v2138 = vmul.f32 %v2135, %v2099
    %v2139 = vsub.f32 %v2065, %v2138
    %v2140 = vsub.f32 %v2071, 1.0
    %v2141 = vlaneseq
    %v2142 = vshrl.u32 %v2141, 7
    %v2143 = vsub.s32 5, %v2142
    %v2144 = vrot.slane %v2140, %v2143
    %v2145 = vmul.f32 %v2144, %v2098
    %v2146 = vsub.f32 %v2071, %v2145
    %v2147 = vmul.f32 %v2144, %v2099
    %v2148 = vsub.f32 %v2073, %v2147
    %v2149 = vlaneseq
    %v2150 = vshrl.u32 %v2149, 7
    %v2151 = vsub.s32 5, %v2150
    %v2152 = vrot.slane %v2079, %v2151
    %v2153 = vmul.f32 %v2152, %v2098
    %v2154 = vsub.f32 %v2079, %v2153
    %v2155 = vmul.f32 %v2152, %v2099
    %v2156 = vsub.f32 %v2081, %v2155
    %v2157 = vlaneseq
    %v2158 = vshrl.u32 %v2157, 7
    %v2159 = vsub.s32 5, %v2158
    %v2160 = vrot.slane %v2087, %v2159
    %v2161 = vmul.f32 %v2160, %v2098
    %v2162 = vsub.f32 %v2087, %v2161
    %v2163 = vmul.f32 %v2160, %v2099
    %v2164 = vsub.f32 %v2089, %v2163
    %v2165 = vrcp.pop %v2154
    %v2166 = vmul.f32 %v2154, %v2165
    %v2167 = vsub.f32 2.0, %v2166
    %v2168 = vmul.f32 %v2165, %v2167
    %v2169 = vlaneseq
    %v2170 = vshrl.u32 %v2169, 7
    %v2171 = vsub.s32 6, %v2170
    %v2172 = vrot.slane %v2168, %v2171
    %v2173 = vmul.f32 %v2154, %v2172
    %v2174 = vmul.f32 %v2156, %v2172
    %v2175 = vlaneseq
    %v2176 = vshrl.u32 %v2175, 7
    %v2177 = vsub.s32 6, %v2176
    %v2178 = vrot.slane %v2105, %v2177
    %v2179 = vmul.f32 %v2178, %v2173
    %v2180 = vsub.f32 %v2105, %v2179
    %v2181 = vmul.f32 %v2178, %v2174
    %v2182 = vsub.f32 %v2107, %v2181
    %v2183 = vlaneseq
    %v2184 = vshrl.u32 %v2183, 7
    %v2185 = vsub.s32 6, %v2184
    %v2186 = vrot.slane %v2113, %v2185
    %v2187 = vmul.f32 %v2186, %v2173
    %v2188 = vsub.f32 %v2113, %v2187
    %v2189 = vmul.f32 %v2186, %v2174
    %v2190 = vsub.f32 %v2115, %v2189
    %v2191 = vlaneseq
    %v2192 = vshrl.u32 %v2191, 7
    %v2193 = vsub.s32 6, %v2192
    %v2194 = vrot.slane %v2121, %v2193
    %v2195 = vmul.f32 %v2194, %v2173
    %v2196 = vsub.f32 %v2121, %v2195
    %v2197 = vmul.f32 %v2194, %v2174
    %v2198 = vsub.f32 %v2123, %v2197
    %v2199 = vlaneseq
    %v2200 = vshrl.u32 %v2199, 7
    %v2201 = vsub.s32 6, %v2200
    %v2202 = vrot.slane %v2129, %v2201
    %v2203 = vmul.f32 %v2202, %v2173
    %v2204 = vsub.f32 %v2129, %v2203
    %v2205 = vmul.f32 %v2202, %v2174
    %v2206 = vsub.f32 %v2131, %v2205
    %v2207 = vlaneseq
    %v2208 = vshrl.u32 %v2207, 7
    %v2209 = vsub.s32 6, %v2208
    %v2210 = vrot.slane %v2137, %v2209
    %v2211 = vmul.f32 %v2210, %v2173
    %v2212 = vsub.f32 %v2137, %v2211
    %v2213 = vmul.f32 %v2210, %v2174
    %v2214 = vsub.f32 %v2139, %v2213
    %v2215 = vlaneseq
    %v2216 = vshrl.u32 %v2215, 7
    %v2217 = vsub.s32 6, %v2216
    %v2218 = vrot.slane %v2146, %v2217
    %v2219 = vmul.f32 %v2218, %v2173
    %v2220 = vsub.f32 %v2146, %v2219
    %v2221 = vmul.f32 %v2218, %v2174
    %v2222 = vsub.f32 %v2148, %v2221
    %v2223 = vsub.f32 %v2154, 1.0
    %v2224 = vlaneseq
    %v2225 = vshrl.u32 %v2224, 7
    %v2226 = vsub.s32 6, %v2225
    %v2227 = vrot.slane %v2223, %v2226
    %v2228 = vmul.f32 %v2227, %v2173
    %v2229 = vsub.f32 %v2154, %v2228
    %v2230 = vmul.f32 %v2227, %v2174
    %v2231 = vsub.f32 %v2156, %v2230
    %v2232 = vlaneseq
    %v2233 = vshrl.u32 %v2232, 7
    %v2234 = vsub.s32 6, %v2233
    %v2235 = vrot.slane %v2162, %v2234
    %v2236 = vmul.f32 %v2235, %v2173
    %v2237 = vsub.f32 %v2162, %v2236
    %v2238 = vmul.f32 %v2235, %v2174
    %v2239 = vsub.f32 %v2164, %v2238
    %v2240 = vrcp.pop %v2237
    %v2241 = vmul.f32 %v2237, %v2240
    %v2242 = vsub.f32 2.0, %v2241
    %v2243 = vmul.f32 %v2240, %v2242
    %v2244 = vlaneseq
    %v2245 = vshrl.u32 %v2244, 7
    %v2246 = vsub.s32 7, %v2245
    %v2247 = vrot.slane %v2243, %v2246
    %v2248 = vmul.f32 %v2239, %v2247
    %v2249 = vlaneseq
    %v2250 = vshrl.u32 %v2249, 7
    %v2251 = vsub.s32 7, %v2250
    %v2252 = vrot.slane %v2180, %v2251
    %v2253 = vmul.f32 %v2252, %v2248
    %v2254 = vsub.f32 %v2182, %v2253
    %v2255 = vlaneseq
    %v2256 = vshrl.u32 %v2255, 7
    %v2257 = vsub.s32 7, %v2256
    %v2258 = vrot.slane %v2188, %v2257
    %v2259 = vmul.f32 %v2258, %v2248
    %v2260 = vsub.f32 %v2190, %v2259
    %v2261 = vlaneseq
    %v2262 = vshrl.u32 %v2261, 7
    %v2263 = vsub.s32 7, %v2262
    %v2264 = vrot.slane %v2196, %v2263
    %v2265 = vmul.f32 %v2264, %v2248
    %v2266 = vsub.f32 %v2198, %v2265
    %v2267 = vlaneseq
    %v2268 = vshrl.u32 %v2267, 7
    %v2269 = vsub.s32 7, %v2268
    %v2270 = vrot.slane %v2204, %v2269
    %v2271 = vmul.f32 %v2270, %v2248
    %v2272 = vsub.f32 %v2206, %v2271
    %v2273 = vlaneseq
    %v2274 = vshrl.u32 %v2273, 7
    %v2275 = vsub.s32 7, %v2274
    %v2276 = vrot.slane %v2212, %v2275
    %v2277 = vmul.f32 %v2276, %v2248
    %v2278 = vsub.f32 %v2214, %v2277
    %v2279 = vlaneseq
    %v2280 = vshrl.u32 %v2279, 7
    %v2281 = vsub.s32 7, %v2280
    %v2282 = vrot.slane %v2220, %v2281
    %v2283 = vmul.f32 %v2282, %v2248
    %v2284 = vsub.f32 %v2222, %v2283
    %v2285 = vlaneseq
    %v2286 = vshrl.u32 %v2285, 7
    %v2287 = vsub.s32 7, %v2286
    %v2288 = vrot.slane %v2229, %v2287
    %v2289 = vmul.f32 %v2288, %v2248
    %v2290 = vsub.f32 %v2231, %v2289
    %v2291 = vsub.f32 %v2237, 1.0
    %v2292 = vlaneseq
    %v2293 = vshrl.u32 %v2292, 7
    %v2294 = vsub.s32 7, %v2293
    %v2295 = vrot.slane %v2291, %v2294
    %v2296 = vmul.f32 %v2295, %v2248
    %v2297 = vsub.f32 %v2239, %v2296
    %v2298 = vlaneseq
    %v2299 = vshrl.u32 %v2298, 7
    %v2300 = vsub.s32 0, %v2299
    %v2301 = vrot.slane %v2254, %v2300
    %v2302 = vmul.f32 %v905, %v2301
    %v2303 = vlaneseq
    %v2304 = vshrl.u32 %v2303, 7
    %v2305 = vsub.s32 1, %v2304
    %v2306 = vrot.slane %v2260, %v2305
    %v2307 = vmul.f32 %v908, %v2306
    %v2308 = vadd.f32 %v2302, %v2307
    %v2309 = vlaneseq
    %v2310 = vshrl.u32 %v2309, 7
    %v2311 = vsub.s32 2, %v2310
    %v2312 = vrot.slane %v2266, %v2311
    %v2313 = vmul.f32 %v911, %v2312
    %v2314 = vadd.f32 %v2308, %v2313
    %v2315 = vlaneseq
    %v2316 = vshrl.u32 %v2315, 7
    %v2317 = vsub.s32 3, %v2316
    %v2318 = vrot.slane %v2272, %v2317
    %v2319 = vmul.f32 %v914, %v2318
    %v2320 = vadd.f32 %v2314, %v2319
    %v2321 = vlaneseq
    %v2322 = vshrl.u32 %v2321, 7
    %v2323 = vsub.s32 4, %v2322
    %v2324 = vrot.slane %v2278, %v2323
    %v2325 = vmul.f32 %v917, %v2324
    %v2326 = vadd.f32 %v2320, %v2325
    %v2327 = vlaneseq
    %v2328 = vshrl.u32 %v2327, 7
    %v2329 = vsub.s32 5, %v2328
    %v2330 = vrot.slane %v2284, %v2329
    %v2331 = vmul.f32 %v920, %v2330
    %v2332 = vadd.f32 %v2326, %v2331
    %v2333 = vlaneseq
    %v2334 = vshrl.u32 %v2333, 7
    %v2335 = vsub.s32 6, %v2334
    %v2336 = vrot.slane %v2290, %v2335
    %v2337 = vmul.f32 %v923, %v2336
    %v2338 = vadd.f32 %v2332, %v2337
    %v2339 = vlaneseq
    %v2340 = vshrl.u32 %v2339, 7
    %v2341 = vsub.s32 7, %v2340
    %v2342 = vrot.slane %v2297, %v2341
    %v2343 = vmul.f32 %v926, %v2342
    %v2344 = vadd.f32 %v2338, %v2343
    %v2345 = vsub.f32 1.0, %v905
    %v2346 = vsub.f32 0.0, %v905
    %v2347 = vmul.f32 %v2344, %v1016
    %v2348 = vmul.f32 %v2345, %v2347
    %v2349 = vmul.f32 %v2344, %v1106
    %v2350 = vmul.f32 %v2346, %v2349
    %v2351 = vmul.f32 %v2344, %v1196
    %v2352 = vmul.f32 %v2346, %v2351
    %v2353 = vmul.f32 %v2344, %v1286
    %v2354 = vmul.f32 %v2346, %v2353
    %v2355 = vmul.f32 %v2344, %v1376
    %v2356 = vmul.f32 %v2346, %v2355
    %v2357 = vmul.f32 %v2344, %v1466
    %v2358 = vmul.f32 %v2346, %v2357
    %v2359 = vmul.f32 %v2344, %v1556
    %v2360 = vmul.f32 %v2346, %v2359
    %v2361 = vmul.f32 %v2344, %v1646
    %v2362 = vmul.f32 %v2346, %v2361
    %v2363 = vld [vmem:[%s8] sm:$0xff]
    %v2364 = vld [vmem:[%s8 + $0x8] sm:$0xff]
    %v2365 = vmul.f32 %v570, %v2254
    %2367 = vset.pattern.permute.xlu0 0
    %2368 = vperm.xlu0 %2367, %v2363
    %v2369 = vpop.permute.xlu0 %2368
    %2372 = vset.pattern.permute.xlu0 0
    %2373 = vperm.xlu0 %2372, %v2364
    %v2374 = vpop.permute.xlu0 %2373
    %v2376 = vlaneseq
    %v2377 = vshrl.u32 %v2376, 7
    %v2378 = vsub.s32 0, %v2377
    %v2379 = vrot.slane %v2365, %v2378
    %v2380 = vmul.f32 %v2369, %v2379
    %v2381 = vmul.f32 %v2374, %v2379
    %v2382 = vlaneseq
    %v2383 = vshrl.u32 %v2382, 7
    %v2384 = vsub.s32 0, %v2383
    %v2385 = vrot.slane %v2348, %v2384
    %v2386 = vmul.f32 %v90, %v2385
    %v2387 = vmul.f32 %v98, %v2385
    %v2388 = vadd.f32 %v2380, %v2386
    %v2389 = vadd.f32 %v2381, %v2387
    %v2390 = vlaneseq
    %v2391 = vshrl.u32 %v2390, 7
    %v2392 = vsub.s32 0, %v2391
    %v2393 = vrot.slane %v2350, %v2392
    %v2394 = vmul.f32 %v91, %v2393
    %v2395 = vmul.f32 %v99, %v2393
    %v2396 = vadd.f32 %v2388, %v2394
    %v2397 = vadd.f32 %v2389, %v2395
    %v2398 = vlaneseq
    %v2399 = vshrl.u32 %v2398, 7
    %v2400 = vsub.s32 0, %v2399
    %v2401 = vrot.slane %v2352, %v2400
    %v2402 = vmul.f32 %v92, %v2401
    %v2403 = vmul.f32 %v100, %v2401
    %v2404 = vadd.f32 %v2396, %v2402
    %v2405 = vadd.f32 %v2397, %v2403
    %v2406 = vlaneseq
    %v2407 = vshrl.u32 %v2406, 7
    %v2408 = vsub.s32 0, %v2407
    %v2409 = vrot.slane %v2354, %v2408
    %v2410 = vmul.f32 %v93, %v2409
    %v2411 = vmul.f32 %v101, %v2409
    %v2412 = vadd.f32 %v2404, %v2410
    %v2413 = vadd.f32 %v2405, %v2411
    %v2414 = vlaneseq
    %v2415 = vshrl.u32 %v2414, 7
    %v2416 = vsub.s32 0, %v2415
    %v2417 = vrot.slane %v2356, %v2416
    %v2418 = vmul.f32 %v94, %v2417
    %v2419 = vmul.f32 %v102, %v2417
    %v2420 = vadd.f32 %v2412, %v2418
    %v2421 = vadd.f32 %v2413, %v2419
    %v2422 = vlaneseq
    %v2423 = vshrl.u32 %v2422, 7
    %v2424 = vsub.s32 0, %v2423
    %v2425 = vrot.slane %v2358, %v2424
    %v2426 = vmul.f32 %v95, %v2425
    %v2427 = vmul.f32 %v103, %v2425
    %v2428 = vadd.f32 %v2420, %v2426
    %v2429 = vadd.f32 %v2421, %v2427
    %v2430 = vlaneseq
    %v2431 = vshrl.u32 %v2430, 7
    %v2432 = vsub.s32 0, %v2431
    %v2433 = vrot.slane %v2360, %v2432
    %v2434 = vmul.f32 %v96, %v2433
    %v2435 = vmul.f32 %v104, %v2433
    %v2436 = vadd.f32 %v2428, %v2434
    %v2437 = vadd.f32 %v2429, %v2435
    %v2438 = vlaneseq
    %v2439 = vshrl.u32 %v2438, 7
    %v2440 = vsub.s32 0, %v2439
    %v2441 = vrot.slane %v2362, %v2440
    %v2442 = vmul.f32 %v97, %v2441
    %v2443 = vmul.f32 %v105, %v2441
    %v2444 = vadd.f32 %v2436, %v2442
    %v2445 = vadd.f32 %v2437, %v2443
    %v2446 = vmul.f32 %v572, %v2260
    %v2447 = vlaneseq
    %v2448 = vshrl.u32 %v2447, 7
    %v2449 = vsub.s32 0, %v2448
    %v2450 = vrot.slane %v2446, %v2449
    %v2451 = vmul.f32 %v2369, %v2450
    %v2452 = vmul.f32 %v2374, %v2450
    %v2453 = vlaneseq
    %v2454 = vshrl.u32 %v2453, 7
    %v2455 = vsub.s32 1, %v2454
    %v2456 = vrot.slane %v2348, %v2455
    %v2457 = vmul.f32 %v90, %v2456
    %v2458 = vmul.f32 %v98, %v2456
    %v2459 = vadd.f32 %v2451, %v2457
    %v2460 = vadd.f32 %v2452, %v2458
    %v2461 = vlaneseq
    %v2462 = vshrl.u32 %v2461, 7
    %v2463 = vsub.s32 1, %v2462
    %v2464 = vrot.slane %v2350, %v2463
    %v2465 = vmul.f32 %v91, %v2464
    %v2466 = vmul.f32 %v99, %v2464
    %v2467 = vadd.f32 %v2459, %v2465
    %v2468 = vadd.f32 %v2460, %v2466
    %v2469 = vlaneseq
    %v2470 = vshrl.u32 %v2469, 7
    %v2471 = vsub.s32 1, %v2470
    %v2472 = vrot.slane %v2352, %v2471
    %v2473 = vmul.f32 %v92, %v2472
    %v2474 = vmul.f32 %v100, %v2472
    %v2475 = vadd.f32 %v2467, %v2473
    %v2476 = vadd.f32 %v2468, %v2474
    %v2477 = vlaneseq
    %v2478 = vshrl.u32 %v2477, 7
    %v2479 = vsub.s32 1, %v2478
    %v2480 = vrot.slane %v2354, %v2479
    %v2481 = vmul.f32 %v93, %v2480
    %v2482 = vmul.f32 %v101, %v2480
    %v2483 = vadd.f32 %v2475, %v2481
    %v2484 = vadd.f32 %v2476, %v2482
    %v2485 = vlaneseq
    %v2486 = vshrl.u32 %v2485, 7
    %v2487 = vsub.s32 1, %v2486
    %v2488 = vrot.slane %v2356, %v2487
    %v2489 = vmul.f32 %v94, %v2488
    %v2490 = vmul.f32 %v102, %v2488
    %v2491 = vadd.f32 %v2483, %v2489
    %v2492 = vadd.f32 %v2484, %v2490
    %v2493 = vlaneseq
    %v2494 = vshrl.u32 %v2493, 7
    %v2495 = vsub.s32 1, %v2494
    %v2496 = vrot.slane %v2358, %v2495
    %v2497 = vmul.f32 %v95, %v2496
    %v2498 = vmul.f32 %v103, %v2496
    %v2499 = vadd.f32 %v2491, %v2497
    %v2500 = vadd.f32 %v2492, %v2498
    %v2501 = vlaneseq
    %v2502 = vshrl.u32 %v2501, 7
    %v2503 = vsub.s32 1, %v2502
    %v2504 = vrot.slane %v2360, %v2503
    %v2505 = vmul.f32 %v96, %v2504
    %v2506 = vmul.f32 %v104, %v2504
    %v2507 = vadd.f32 %v2499, %v2505
    %v2508 = vadd.f32 %v2500, %v2506
    %v2509 = vlaneseq
    %v2510 = vshrl.u32 %v2509, 7
    %v2511 = vsub.s32 1, %v2510
    %v2512 = vrot.slane %v2362, %v2511
    %v2513 = vmul.f32 %v97, %v2512
    %v2514 = vmul.f32 %v105, %v2512
    %v2515 = vadd.f32 %v2507, %v2513
    %v2516 = vadd.f32 %v2508, %v2514
    %v2517 = vmul.f32 %v574, %v2266
    %v2518 = vlaneseq
    %v2519 = vshrl.u32 %v2518, 7
    %v2520 = vsub.s32 0, %v2519
    %v2521 = vrot.slane %v2517, %v2520
    %v2522 = vmul.f32 %v2369, %v2521
    %v2523 = vmul.f32 %v2374, %v2521
    %v2524 = vlaneseq
    %v2525 = vshrl.u32 %v2524, 7
    %v2526 = vsub.s32 2, %v2525
    %v2527 = vrot.slane %v2348, %v2526
    %v2528 = vmul.f32 %v90, %v2527
    %v2529 = vmul.f32 %v98, %v2527
    %v2530 = vadd.f32 %v2522, %v2528
    %v2531 = vadd.f32 %v2523, %v2529
    %v2532 = vlaneseq
    %v2533 = vshrl.u32 %v2532, 7
    %v2534 = vsub.s32 2, %v2533
    %v2535 = vrot.slane %v2350, %v2534
    %v2536 = vmul.f32 %v91, %v2535
    %v2537 = vmul.f32 %v99, %v2535
    %v2538 = vadd.f32 %v2530, %v2536
    %v2539 = vadd.f32 %v2531, %v2537
    %v2540 = vlaneseq
    %v2541 = vshrl.u32 %v2540, 7
    %v2542 = vsub.s32 2, %v2541
    %v2543 = vrot.slane %v2352, %v2542
    %v2544 = vmul.f32 %v92, %v2543
    %v2545 = vmul.f32 %v100, %v2543
    %v2546 = vadd.f32 %v2538, %v2544
    %v2547 = vadd.f32 %v2539, %v2545
    %v2548 = vlaneseq
    %v2549 = vshrl.u32 %v2548, 7
    %v2550 = vsub.s32 2, %v2549
    %v2551 = vrot.slane %v2354, %v2550
    %v2552 = vmul.f32 %v93, %v2551
    %v2553 = vmul.f32 %v101, %v2551
    %v2554 = vadd.f32 %v2546, %v2552
    %v2555 = vadd.f32 %v2547, %v2553
    %v2556 = vlaneseq
    %v2557 = vshrl.u32 %v2556, 7
    %v2558 = vsub.s32 2, %v2557
    %v2559 = vrot.slane %v2356, %v2558
    %v2560 = vmul.f32 %v94, %v2559
    %v2561 = vmul.f32 %v102, %v2559
    %v2562 = vadd.f32 %v2554, %v2560
    %v2563 = vadd.f32 %v2555, %v2561
    %v2564 = vlaneseq
    %v2565 = vshrl.u32 %v2564, 7
    %v2566 = vsub.s32 2, %v2565
    %v2567 = vrot.slane %v2358, %v2566
    %v2568 = vmul.f32 %v95, %v2567
    %v2569 = vmul.f32 %v103, %v2567
    %v2570 = vadd.f32 %v2562, %v2568
    %v2571 = vadd.f32 %v2563, %v2569
    %v2572 = vlaneseq
    %v2573 = vshrl.u32 %v2572, 7
    %v2574 = vsub.s32 2, %v2573
    %v2575 = vrot.slane %v2360, %v2574
    %v2576 = vmul.f32 %v96, %v2575
    %v2577 = vmul.f32 %v104, %v2575
    %v2578 = vadd.f32 %v2570, %v2576
    %v2579 = vadd.f32 %v2571, %v2577
    %v2580 = vlaneseq
    %v2581 = vshrl.u32 %v2580, 7
    %v2582 = vsub.s32 2, %v2581
    %v2583 = vrot.slane %v2362, %v2582
    %v2584 = vmul.f32 %v97, %v2583
    %v2585 = vmul.f32 %v105, %v2583
    %v2586 = vadd.f32 %v2578, %v2584
    %v2587 = vadd.f32 %v2579, %v2585
    %v2588 = vmul.f32 %v576, %v2272
    %v2589 = vlaneseq
    %v2590 = vshrl.u32 %v2589, 7
    %v2591 = vsub.s32 0, %v2590
    %v2592 = vrot.slane %v2588, %v2591
    %v2593 = vmul.f32 %v2369, %v2592
    %v2594 = vmul.f32 %v2374, %v2592
    %v2595 = vlaneseq
    %v2596 = vshrl.u32 %v2595, 7
    %v2597 = vsub.s32 3, %v2596
    %v2598 = vrot.slane %v2348, %v2597
    %v2599 = vmul.f32 %v90, %v2598
    %v2600 = vmul.f32 %v98, %v2598
    %v2601 = vadd.f32 %v2593, %v2599
    %v2602 = vadd.f32 %v2594, %v2600
    %v2603 = vlaneseq
    %v2604 = vshrl.u32 %v2603, 7
    %v2605 = vsub.s32 3, %v2604
    %v2606 = vrot.slane %v2350, %v2605
    %v2607 = vmul.f32 %v91, %v2606
    %v2608 = vmul.f32 %v99, %v2606
    %v2609 = vadd.f32 %v2601, %v2607
    %v2610 = vadd.f32 %v2602, %v2608
    %v2611 = vlaneseq
    %v2612 = vshrl.u32 %v2611, 7
    %v2613 = vsub.s32 3, %v2612
    %v2614 = vrot.slane %v2352, %v2613
    %v2615 = vmul.f32 %v92, %v2614
    %v2616 = vmul.f32 %v100, %v2614
    %v2617 = vadd.f32 %v2609, %v2615
    %v2618 = vadd.f32 %v2610, %v2616
    %v2619 = vlaneseq
    %v2620 = vshrl.u32 %v2619, 7
    %v2621 = vsub.s32 3, %v2620
    %v2622 = vrot.slane %v2354, %v2621
    %v2623 = vmul.f32 %v93, %v2622
    %v2624 = vmul.f32 %v101, %v2622
    %v2625 = vadd.f32 %v2617, %v2623
    %v2626 = vadd.f32 %v2618, %v2624
    %v2627 = vlaneseq
    %v2628 = vshrl.u32 %v2627, 7
    %v2629 = vsub.s32 3, %v2628
    %v2630 = vrot.slane %v2356, %v2629
    %v2631 = vmul.f32 %v94, %v2630
    %v2632 = vmul.f32 %v102, %v2630
    %v2633 = vadd.f32 %v2625, %v2631
    %v2634 = vadd.f32 %v2626, %v2632
    %v2635 = vlaneseq
    %v2636 = vshrl.u32 %v2635, 7
    %v2637 = vsub.s32 3, %v2636
    %v2638 = vrot.slane %v2358, %v2637
    %v2639 = vmul.f32 %v95, %v2638
    %v2640 = vmul.f32 %v103, %v2638
    %v2641 = vadd.f32 %v2633, %v2639
    %v2642 = vadd.f32 %v2634, %v2640
    %v2643 = vlaneseq
    %v2644 = vshrl.u32 %v2643, 7
    %v2645 = vsub.s32 3, %v2644
    %v2646 = vrot.slane %v2360, %v2645
    %v2647 = vmul.f32 %v96, %v2646
    %v2648 = vmul.f32 %v104, %v2646
    %v2649 = vadd.f32 %v2641, %v2647
    %v2650 = vadd.f32 %v2642, %v2648
    %v2651 = vlaneseq
    %v2652 = vshrl.u32 %v2651, 7
    %v2653 = vsub.s32 3, %v2652
    %v2654 = vrot.slane %v2362, %v2653
    %v2655 = vmul.f32 %v97, %v2654
    %v2656 = vmul.f32 %v105, %v2654
    %v2657 = vadd.f32 %v2649, %v2655
    %v2658 = vadd.f32 %v2650, %v2656
    %v2659 = vmul.f32 %v578, %v2278
    %v2660 = vlaneseq
    %v2661 = vshrl.u32 %v2660, 7
    %v2662 = vsub.s32 0, %v2661
    %v2663 = vrot.slane %v2659, %v2662
    %v2664 = vmul.f32 %v2369, %v2663
    %v2665 = vmul.f32 %v2374, %v2663
    %v2666 = vlaneseq
    %v2667 = vshrl.u32 %v2666, 7
    %v2668 = vsub.s32 4, %v2667
    %v2669 = vrot.slane %v2348, %v2668
    %v2670 = vmul.f32 %v90, %v2669
    %v2671 = vmul.f32 %v98, %v2669
    %v2672 = vadd.f32 %v2664, %v2670
    %v2673 = vadd.f32 %v2665, %v2671
    %v2674 = vlaneseq
    %v2675 = vshrl.u32 %v2674, 7
    %v2676 = vsub.s32 4, %v2675
    %v2677 = vrot.slane %v2350, %v2676
    %v2678 = vmul.f32 %v91, %v2677
    %v2679 = vmul.f32 %v99, %v2677
    %v2680 = vadd.f32 %v2672, %v2678
    %v2681 = vadd.f32 %v2673, %v2679
    %v2682 = vlaneseq
    %v2683 = vshrl.u32 %v2682, 7
    %v2684 = vsub.s32 4, %v2683
    %v2685 = vrot.slane %v2352, %v2684
    %v2686 = vmul.f32 %v92, %v2685
    %v2687 = vmul.f32 %v100, %v2685
    %v2688 = vadd.f32 %v2680, %v2686
    %v2689 = vadd.f32 %v2681, %v2687
    %v2690 = vlaneseq
    %v2691 = vshrl.u32 %v2690, 7
    %v2692 = vsub.s32 4, %v2691
    %v2693 = vrot.slane %v2354, %v2692
    %v2694 = vmul.f32 %v93, %v2693
    %v2695 = vmul.f32 %v101, %v2693
    %v2696 = vadd.f32 %v2688, %v2694
    %v2697 = vadd.f32 %v2689, %v2695
    %v2698 = vlaneseq
    %v2699 = vshrl.u32 %v2698, 7
    %v2700 = vsub.s32 4, %v2699
    %v2701 = vrot.slane %v2356, %v2700
    %v2702 = vmul.f32 %v94, %v2701
    %v2703 = vmul.f32 %v102, %v2701
    %v2704 = vadd.f32 %v2696, %v2702
    %v2705 = vadd.f32 %v2697, %v2703
    %v2706 = vlaneseq
    %v2707 = vshrl.u32 %v2706, 7
    %v2708 = vsub.s32 4, %v2707
    %v2709 = vrot.slane %v2358, %v2708
    %v2710 = vmul.f32 %v95, %v2709
    %v2711 = vmul.f32 %v103, %v2709
    %v2712 = vadd.f32 %v2704, %v2710
    %v2713 = vadd.f32 %v2705, %v2711
    %v2714 = vlaneseq
    %v2715 = vshrl.u32 %v2714, 7
    %v2716 = vsub.s32 4, %v2715
    %v2717 = vrot.slane %v2360, %v2716
    %v2718 = vmul.f32 %v96, %v2717
    %v2719 = vmul.f32 %v104, %v2717
    %v2720 = vadd.f32 %v2712, %v2718
    %v2721 = vadd.f32 %v2713, %v2719
    %v2722 = vlaneseq
    %v2723 = vshrl.u32 %v2722, 7
    %v2724 = vsub.s32 4, %v2723
    %v2725 = vrot.slane %v2362, %v2724
    %v2726 = vmul.f32 %v97, %v2725
    %v2727 = vmul.f32 %v105, %v2725
    %v2728 = vadd.f32 %v2720, %v2726
    %v2729 = vadd.f32 %v2721, %v2727
    %v2730 = vmul.f32 %v580, %v2284
    %v2731 = vlaneseq
    %v2732 = vshrl.u32 %v2731, 7
    %v2733 = vsub.s32 0, %v2732
    %v2734 = vrot.slane %v2730, %v2733
    %v2735 = vmul.f32 %v2369, %v2734
    %v2736 = vmul.f32 %v2374, %v2734
    %v2737 = vlaneseq
    %v2738 = vshrl.u32 %v2737, 7
    %v2739 = vsub.s32 5, %v2738
    %v2740 = vrot.slane %v2348, %v2739
    %v2741 = vmul.f32 %v90, %v2740
    %v2742 = vmul.f32 %v98, %v2740
    %v2743 = vadd.f32 %v2735, %v2741
    %v2744 = vadd.f32 %v2736, %v2742
    %v2745 = vlaneseq
    %v2746 = vshrl.u32 %v2745, 7
    %v2747 = vsub.s32 5, %v2746
    %v2748 = vrot.slane %v2350, %v2747
    %v2749 = vmul.f32 %v91, %v2748
    %v2750 = vmul.f32 %v99, %v2748
    %v2751 = vadd.f32 %v2743, %v2749
    %v2752 = vadd.f32 %v2744, %v2750
    %v2753 = vlaneseq
    %v2754 = vshrl.u32 %v2753, 7
    %v2755 = vsub.s32 5, %v2754
    %v2756 = vrot.slane %v2352, %v2755
    %v2757 = vmul.f32 %v92, %v2756
    %v2758 = vmul.f32 %v100, %v2756
    %v2759 = vadd.f32 %v2751, %v2757
    %v2760 = vadd.f32 %v2752, %v2758
    %v2761 = vlaneseq
    %v2762 = vshrl.u32 %v2761, 7
    %v2763 = vsub.s32 5, %v2762
    %v2764 = vrot.slane %v2354, %v2763
    %v2765 = vmul.f32 %v93, %v2764
    %v2766 = vmul.f32 %v101, %v2764
    %v2767 = vadd.f32 %v2759, %v2765
    %v2768 = vadd.f32 %v2760, %v2766
    %v2769 = vlaneseq
    %v2770 = vshrl.u32 %v2769, 7
    %v2771 = vsub.s32 5, %v2770
    %v2772 = vrot.slane %v2356, %v2771
    %v2773 = vmul.f32 %v94, %v2772
    %v2774 = vmul.f32 %v102, %v2772
    %v2775 = vadd.f32 %v2767, %v2773
    %v2776 = vadd.f32 %v2768, %v2774
    %v2777 = vlaneseq
    %v2778 = vshrl.u32 %v2777, 7
    %v2779 = vsub.s32 5, %v2778
    %v2780 = vrot.slane %v2358, %v2779
    %v2781 = vmul.f32 %v95, %v2780
    %v2782 = vmul.f32 %v103, %v2780
    %v2783 = vadd.f32 %v2775, %v2781
    %v2784 = vadd.f32 %v2776, %v2782
    %v2785 = vlaneseq
    %v2786 = vshrl.u32 %v2785, 7
    %v2787 = vsub.s32 5, %v2786
    %v2788 = vrot.slane %v2360, %v2787
    %v2789 = vmul.f32 %v96, %v2788
    %v2790 = vmul.f32 %v104, %v2788
    %v2791 = vadd.f32 %v2783, %v2789
    %v2792 = vadd.f32 %v2784, %v2790
    %v2793 = vlaneseq
    %v2794 = vshrl.u32 %v2793, 7
    %v2795 = vsub.s32 5, %v2794
    %v2796 = vrot.slane %v2362, %v2795
    %v2797 = vmul.f32 %v97, %v2796
    %v2798 = vmul.f32 %v105, %v2796
    %v2799 = vadd.f32 %v2791, %v2797
    %v2800 = vadd.f32 %v2792, %v2798
    %v2801 = vmul.f32 %v582, %v2290
    %v2802 = vlaneseq
    %v2803 = vshrl.u32 %v2802, 7
    %v2804 = vsub.s32 0, %v2803
    %v2805 = vrot.slane %v2801, %v2804
    %v2806 = vmul.f32 %v2369, %v2805
    %v2807 = vmul.f32 %v2374, %v2805
    %v2808 = vlaneseq
    %v2809 = vshrl.u32 %v2808, 7
    %v2810 = vsub.s32 6, %v2809
    %v2811 = vrot.slane %v2348, %v2810
    %v2812 = vmul.f32 %v90, %v2811
    %v2813 = vmul.f32 %v98, %v2811
    %v2814 = vadd.f32 %v2806, %v2812
    %v2815 = vadd.f32 %v2807, %v2813
    %v2816 = vlaneseq
    %v2817 = vshrl.u32 %v2816, 7
    %v2818 = vsub.s32 6, %v2817
    %v2819 = vrot.slane %v2350, %v2818
    %v2820 = vmul.f32 %v91, %v2819
    %v2821 = vmul.f32 %v99, %v2819
    %v2822 = vadd.f32 %v2814, %v2820
    %v2823 = vadd.f32 %v2815, %v2821
    %v2824 = vlaneseq
    %v2825 = vshrl.u32 %v2824, 7
    %v2826 = vsub.s32 6, %v2825
    %v2827 = vrot.slane %v2352, %v2826
    %v2828 = vmul.f32 %v92, %v2827
    %v2829 = vmul.f32 %v100, %v2827
    %v2830 = vadd.f32 %v2822, %v2828
    %v2831 = vadd.f32 %v2823, %v2829
    %v2832 = vlaneseq
    %v2833 = vshrl.u32 %v2832, 7
    %v2834 = vsub.s32 6, %v2833
    %v2835 = vrot.slane %v2354, %v2834
    %v2836 = vmul.f32 %v93, %v2835
    %v2837 = vmul.f32 %v101, %v2835
    %v2838 = vadd.f32 %v2830, %v2836
    %v2839 = vadd.f32 %v2831, %v2837
    %v2840 = vlaneseq
    %v2841 = vshrl.u32 %v2840, 7
    %v2842 = vsub.s32 6, %v2841
    %v2843 = vrot.slane %v2356, %v2842
    %v2844 = vmul.f32 %v94, %v2843
    %v2845 = vmul.f32 %v102, %v2843
    %v2846 = vadd.f32 %v2838, %v2844
    %v2847 = vadd.f32 %v2839, %v2845
    %v2848 = vlaneseq
    %v2849 = vshrl.u32 %v2848, 7
    %v2850 = vsub.s32 6, %v2849
    %v2851 = vrot.slane %v2358, %v2850
    %v2852 = vmul.f32 %v95, %v2851
    %v2853 = vmul.f32 %v103, %v2851
    %v2854 = vadd.f32 %v2846, %v2852
    %v2855 = vadd.f32 %v2847, %v2853
    %v2856 = vlaneseq
    %v2857 = vshrl.u32 %v2856, 7
    %v2858 = vsub.s32 6, %v2857
    %v2859 = vrot.slane %v2360, %v2858
    %v2860 = vmul.f32 %v96, %v2859
    %v2861 = vmul.f32 %v104, %v2859
    %v2862 = vadd.f32 %v2854, %v2860
    %v2863 = vadd.f32 %v2855, %v2861
    %v2864 = vlaneseq
    %v2865 = vshrl.u32 %v2864, 7
    %v2866 = vsub.s32 6, %v2865
    %v2867 = vrot.slane %v2362, %v2866
    %v2868 = vmul.f32 %v97, %v2867
    %v2869 = vmul.f32 %v105, %v2867
    %v2870 = vadd.f32 %v2862, %v2868
    %v2871 = vadd.f32 %v2863, %v2869
    %v2872 = vmul.f32 %v584, %v2297
    %v2873 = vlaneseq
    %v2874 = vshrl.u32 %v2873, 7
    %v2875 = vsub.s32 0, %v2874
    %v2876 = vrot.slane %v2872, %v2875
    %v2877 = vmul.f32 %v2369, %v2876
    %v2878 = vmul.f32 %v2374, %v2876
    %v2879 = vlaneseq
    %v2880 = vshrl.u32 %v2879, 7
    %v2881 = vsub.s32 7, %v2880
    %v2882 = vrot.slane %v2348, %v2881
    %v2883 = vmul.f32 %v90, %v2882
    %v2884 = vmul.f32 %v98, %v2882
    %v2885 = vadd.f32 %v2877, %v2883
    %v2886 = vadd.f32 %v2878, %v2884
    %v2887 = vlaneseq
    %v2888 = vshrl.u32 %v2887, 7
    %v2889 = vsub.s32 7, %v2888
    %v2890 = vrot.slane %v2350, %v2889
    %v2891 = vmul.f32 %v91, %v2890
    %v2892 = vmul.f32 %v99, %v2890
    %v2893 = vadd.f32 %v2885, %v2891
    %v2894 = vadd.f32 %v2886, %v2892
    %v2895 = vlaneseq
    %v2896 = vshrl.u32 %v2895, 7
    %v2897 = vsub.s32 7, %v2896
    %v2898 = vrot.slane %v2352, %v2897
    %v2899 = vmul.f32 %v92, %v2898
    %v2900 = vmul.f32 %v100, %v2898
    %v2901 = vadd.f32 %v2893, %v2899
    %v2902 = vadd.f32 %v2894, %v2900
    %v2903 = vlaneseq
    %v2904 = vshrl.u32 %v2903, 7
    %v2905 = vsub.s32 7, %v2904
    %v2906 = vrot.slane %v2354, %v2905
    %v2907 = vmul.f32 %v93, %v2906
    %v2908 = vmul.f32 %v101, %v2906
    %v2909 = vadd.f32 %v2901, %v2907
    %v2910 = vadd.f32 %v2902, %v2908
    %v2911 = vlaneseq
    %v2912 = vshrl.u32 %v2911, 7
    %v2913 = vsub.s32 7, %v2912
    %v2914 = vrot.slane %v2356, %v2913
    %v2915 = vmul.f32 %v94, %v2914
    %v2916 = vmul.f32 %v102, %v2914
    %v2917 = vadd.f32 %v2909, %v2915
    %v2918 = vadd.f32 %v2910, %v2916
    %v2919 = vlaneseq
    %v2920 = vshrl.u32 %v2919, 7
    %v2921 = vsub.s32 7, %v2920
    %v2922 = vrot.slane %v2358, %v2921
    %v2923 = vmul.f32 %v95, %v2922
    %v2924 = vmul.f32 %v103, %v2922
    %v2925 = vadd.f32 %v2917, %v2923
    %v2926 = vadd.f32 %v2918, %v2924
    %v2927 = vlaneseq
    %v2928 = vshrl.u32 %v2927, 7
    %v2929 = vsub.s32 7, %v2928
    %v2930 = vrot.slane %v2360, %v2929
    %v2931 = vmul.f32 %v96, %v2930
    %v2932 = vmul.f32 %v104, %v2930
    %v2933 = vadd.f32 %v2925, %v2931
    %v2934 = vadd.f32 %v2926, %v2932
    %v2935 = vlaneseq
    %v2936 = vshrl.u32 %v2935, 7
    %v2937 = vsub.s32 7, %v2936
    %v2938 = vrot.slane %v2362, %v2937
    %v2939 = vmul.f32 %v97, %v2938
    %v2940 = vmul.f32 %v105, %v2938
    %v2941 = vadd.f32 %v2933, %v2939
    %v2942 = vadd.f32 %v2934, %v2940
    %v2943 = vld [vmem:[#allocation5] sm:$0xff]
    %v2944 = vld [vmem:[#allocation5 + $0x8] sm:$0xff]
    %v2945 = vld [vmem:[#allocation7] sm:$0xff]
    %v2946 = vld [vmem:[#allocation7 + $0x8] sm:$0xff]
    %v2948 = vsel %vm141, %v2945, 0
    %v2951 = vsel %vm141, %v2946, 0
    %2953 = vmatprep.subr.mxu0 %v2515
    %2954 = vmatpush1.msra.mxu0 %v2444
    %2955 = vmatprep.subr.mxu0 %v2516
    %2956 = vmatpush1.msra.mxu0 %v2445
    %2957 = vmatprep.subr.mxu0 0.0
    %2958 = vmatpush1.msra.mxu0 0.0
    %2959 = vmatprep.subr.mxu0 0.0
    %2960 = vmatpush1.msra.mxu0 0.0
    %2961 = vmatprep.subr.mxu0 0.0
    %2962 = vmatpush1.msra.mxu0 0.0
    %2963 = vmatprep.subr.mxu0 0.0
    %2964 = vmatpush1.msra.mxu0 0.0
    %2965 = vmatprep.subr.mxu0 0.0
    %2966 = vmatpush1.msra.mxu0 0.0
    %2967 = vmatprep.subr.mxu0 0.0
    %2968 = vmatpush1.msra.mxu0 0.0
    %2969 = vmatprep.subr.mxu0 0.0
    %2970 = vmatpush1.msra.mxu0 0.0
    %2971 = vmatprep.subr.mxu0 0.0
    %2972 = vmatpush1.msra.mxu0 0.0
    %2973 = vmatprep.subr.mxu0 0.0
    %2974 = vmatpush1.msra.mxu0 0.0
    %2975 = vmatprep.subr.mxu0 0.0
    %2976 = vmatpush1.msra.mxu0 0.0
    %2977 = vmatprep.subr.mxu0 0.0
    %2978 = vmatpush1.msra.mxu0 0.0
    %2979 = vmatprep.subr.mxu0 0.0
    %2980 = vmatpush1.msra.mxu0 0.0
    %2981 = vmatprep.subr.mxu0 0.0
    %2982 = vmatpush1.msra.mxu0 0.0
    %2983 = vmatprep.subr.mxu0 0.0
    %2984 = vmatpush1.msra.mxu0 0.0
    %2985 = vmatprep.subr.mxu0 0.0
    %2986 = vmatpush1.msra.mxu0 0.0
    %2987 = vmatprep.subr.mxu0 0.0
    %2988 = vmatpush1.msra.mxu0 0.0
    %2989 = vmatprep.subr.mxu0 0.0
    %2990 = vmatpush1.msra.mxu0 0.0
    %2991 = vmatprep.subr.mxu0 0.0
    %2992 = vmatpush1.msra.mxu0 0.0
    %2993 = vmatprep.subr.mxu0 0.0
    %2994 = vmatpush1.msra.mxu0 0.0
    %2995 = vmatprep.subr.mxu0 0.0
    %2996 = vmatpush1.msra.mxu0 0.0
    %2997 = vmatprep.subr.mxu0 0.0
    %2998 = vmatpush1.msra.mxu0 0.0
    %2999 = vmatprep.subr.mxu0 0.0
    %3000 = vmatpush1.msra.mxu0 0.0
    %3001 = vmatprep.subr.mxu0 0.0
    %3002 = vmatpush1.msra.mxu0 0.0
    %3003 = vmatprep.subr.mxu0 0.0
    %3004 = vmatpush1.msra.mxu0 0.0
    %3005 = vmatprep.subr.mxu0 0.0
    %3006 = vmatpush1.msra.mxu0 0.0
    %3007 = vmatprep.subr.mxu0 0.0
    %3008 = vmatpush1.msra.mxu0 0.0
    %3009 = vmatprep.subr.mxu0 0.0
    %3010 = vmatpush1.msra.mxu0 0.0
    %3011 = vmatprep.subr.mxu0 0.0
    %3012 = vmatpush1.msra.mxu0 0.0
    %3013 = vmatprep.subr.mxu0 0.0
    %3014 = vmatpush1.msra.mxu0 0.0
    %3015 = vmatprep.subr.mxu0 0.0
    %3016 = vmatpush1.msra.mxu0 0.0
    %3017 = vmatprep.mubr.f32.mxu0 0.0
    %3018 = vmatmul.mubr.f32.gmra.mrb[0].mxu0 %v2948
    %v3019 = vpop.f32.mrb[0].mxu0
    %v3020 = vadd.f32 0.0, %v3019
    %v3021 = vpop.f32.mrb[0].mxu0
    %v3022 = vadd.f32 0.0, %v3021
    %3023 = vmatprep.mubr.f32.mxu0 0.0
    %3024 = vmatmul.mubr.f32.gmra.mrb[0].mxu0 %v2951
    %v3025 = vpop.f32.mrb[0].mxu0
    %v3026 = vadd.f32 0.0, %v3025
    %v3027 = vpop.f32.mrb[0].mxu0
    %v3028 = vadd.f32 0.0, %v3027
    %3029 = vdwg.mxu0
    %3030 = vmatprep.subr.mxu0 %v2657
    %3031 = vmatpush1.msra.mxu0 %v2586
    %3032 = vmatprep.subr.mxu0 %v2658
    %3033 = vmatpush1.msra.mxu0 %v2587
    %3034 = vmatprep.subr.mxu0 0.0
    %3035 = vmatpush1.msra.mxu0 0.0
    %3036 = vmatprep.subr.mxu0 0.0
    %3037 = vmatpush1.msra.mxu0 0.0
    %3038 = vmatprep.subr.mxu0 0.0
    %3039 = vmatpush1.msra.mxu0 0.0
    %3040 = vmatprep.subr.mxu0 0.0
    %3041 = vmatpush1.msra.mxu0 0.0
    %3042 = vmatprep.subr.mxu0 0.0
    %3043 = vmatpush1.msra.mxu0 0.0
    %3044 = vmatprep.subr.mxu0 0.0
    %3045 = vmatpush1.msra.mxu0 0.0
    %3046 = vmatprep.subr.mxu0 0.0
    %3047 = vmatpush1.msra.mxu0 0.0
    %3048 = vmatprep.subr.mxu0 0.0
    %3049 = vmatpush1.msra.mxu0 0.0
    %3050 = vmatprep.subr.mxu0 0.0
    %3051 = vmatpush1.msra.mxu0 0.0
    %3052 = vmatprep.subr.mxu0 0.0
    %3053 = vmatpush1.msra.mxu0 0.0
    %3054 = vmatprep.subr.mxu0 0.0
    %3055 = vmatpush1.msra.mxu0 0.0
    %3056 = vmatprep.subr.mxu0 0.0
    %3057 = vmatpush1.msra.mxu0 0.0
    %3058 = vmatprep.subr.mxu0 0.0
    %3059 = vmatpush1.msra.mxu0 0.0
    %3060 = vmatprep.subr.mxu0 0.0
    %3061 = vmatpush1.msra.mxu0 0.0
    %3062 = vmatprep.subr.mxu0 0.0
    %3063 = vmatpush1.msra.mxu0 0.0
    %3064 = vmatprep.subr.mxu0 0.0
    %3065 = vmatpush1.msra.mxu0 0.0
    %3066 = vmatprep.subr.mxu0 0.0
    %3067 = vmatpush1.msra.mxu0 0.0
    %3068 = vmatprep.subr.mxu0 0.0
    %3069 = vmatpush1.msra.mxu0 0.0
    %3070 = vmatprep.subr.mxu0 0.0
    %3071 = vmatpush1.msra.mxu0 0.0
    %3072 = vmatprep.subr.mxu0 0.0
    %3073 = vmatpush1.msra.mxu0 0.0
    %3074 = vmatprep.subr.mxu0 0.0
    %3075 = vmatpush1.msra.mxu0 0.0
    %3076 = vmatprep.subr.mxu0 0.0
    %3077 = vmatpush1.msra.mxu0 0.0
    %3078 = vmatprep.subr.mxu0 0.0
    %3079 = vmatpush1.msra.mxu0 0.0
    %3080 = vmatprep.subr.mxu0 0.0
    %3081 = vmatpush1.msra.mxu0 0.0
    %3082 = vmatprep.subr.mxu0 0.0
    %3083 = vmatpush1.msra.mxu0 0.0
    %3084 = vmatprep.subr.mxu0 0.0
    %3085 = vmatpush1.msra.mxu0 0.0
    %3086 = vmatprep.subr.mxu0 0.0
    %3087 = vmatpush1.msra.mxu0 0.0
    %3088 = vmatprep.subr.mxu0 0.0
    %3089 = vmatpush1.msra.mxu0 0.0
    %3090 = vmatprep.subr.mxu0 0.0
    %3091 = vmatpush1.msra.mxu0 0.0
    %3092 = vmatprep.subr.mxu0 0.0
    %3093 = vmatpush1.msra.mxu0 0.0
    %3094 = vmatprep.mubr.f32.mxu0 0.0
    %3095 = vmatmul.mubr.f32.gmra.mrb[0].mxu0 %v2948
    %v3096 = vpop.f32.mrb[0].mxu0
    %v3097 = vadd.f32 0.0, %v3096
    %v3098 = vpop.f32.mrb[0].mxu0
    %v3099 = vadd.f32 0.0, %v3098
    %3100 = vmatprep.mubr.f32.mxu0 0.0
    %3101 = vmatmul.mubr.f32.gmra.mrb[0].mxu0 %v2951
    %v3102 = vpop.f32.mrb[0].mxu0
    %v3103 = vadd.f32 0.0, %v3102
    %v3104 = vpop.f32.mrb[0].mxu0
    %v3105 = vadd.f32 0.0, %v3104
    %3106 = vdwg.mxu0
    %3107 = vmatprep.subr.mxu0 %v2799
    %3108 = vmatpush1.msra.mxu0 %v2728
    %3109 = vmatprep.subr.mxu0 %v2800
    %3110 = vmatpush1.msra.mxu0 %v2729
    %3111 = vmatprep.subr.mxu0 0.0
    %3112 = vmatpush1.msra.mxu0 0.0
    %3113 = vmatprep.subr.mxu0 0.0
    %3114 = vmatpush1.msra.mxu0 0.0
    %3115 = vmatprep.subr.mxu0 0.0
    %3116 = vmatpush1.msra.mxu0 0.0
    %3117 = vmatprep.subr.mxu0 0.0
    %3118 = vmatpush1.msra.mxu0 0.0
    %3119 = vmatprep.subr.mxu0 0.0
    %3120 = vmatpush1.msra.mxu0 0.0
    %3121 = vmatprep.subr.mxu0 0.0
    %3122 = vmatpush1.msra.mxu0 0.0
    %3123 = vmatprep.subr.mxu0 0.0
    %3124 = vmatpush1.msra.mxu0 0.0
    %3125 = vmatprep.subr.mxu0 0.0
    %3126 = vmatpush1.msra.mxu0 0.0
    %3127 = vmatprep.subr.mxu0 0.0
    %3128 = vmatpush1.msra.mxu0 0.0
    %3129 = vmatprep.subr.mxu0 0.0
    %3130 = vmatpush1.msra.mxu0 0.0
    %3131 = vmatprep.subr.mxu0 0.0
    %3132 = vmatpush1.msra.mxu0 0.0
    %3133 = vmatprep.subr.mxu0 0.0
    %3134 = vmatpush1.msra.mxu0 0.0
    %3135 = vmatprep.subr.mxu0 0.0
    %3136 = vmatpush1.msra.mxu0 0.0
    %3137 = vmatprep.subr.mxu0 0.0
    %3138 = vmatpush1.msra.mxu0 0.0
    %3139 = vmatprep.subr.mxu0 0.0
    %3140 = vmatpush1.msra.mxu0 0.0
    %3141 = vmatprep.subr.mxu0 0.0
    %3142 = vmatpush1.msra.mxu0 0.0
    %3143 = vmatprep.subr.mxu0 0.0
    %3144 = vmatpush1.msra.mxu0 0.0
    %3145 = vmatprep.subr.mxu0 0.0
    %3146 = vmatpush1.msra.mxu0 0.0
    %3147 = vmatprep.subr.mxu0 0.0
    %3148 = vmatpush1.msra.mxu0 0.0
    %3149 = vmatprep.subr.mxu0 0.0
    %3150 = vmatpush1.msra.mxu0 0.0
    %3151 = vmatprep.subr.mxu0 0.0
    %3152 = vmatpush1.msra.mxu0 0.0
    %3153 = vmatprep.subr.mxu0 0.0
    %3154 = vmatpush1.msra.mxu0 0.0
    %3155 = vmatprep.subr.mxu0 0.0
    %3156 = vmatpush1.msra.mxu0 0.0
    %3157 = vmatprep.subr.mxu0 0.0
    %3158 = vmatpush1.msra.mxu0 0.0
    %3159 = vmatprep.subr.mxu0 0.0
    %3160 = vmatpush1.msra.mxu0 0.0
    %3161 = vmatprep.subr.mxu0 0.0
    %3162 = vmatpush1.msra.mxu0 0.0
    %3163 = vmatprep.subr.mxu0 0.0
    %3164 = vmatpush1.msra.mxu0 0.0
    %3165 = vmatprep.subr.mxu0 0.0
    %3166 = vmatpush1.msra.mxu0 0.0
    %3167 = vmatprep.subr.mxu0 0.0
    %3168 = vmatpush1.msra.mxu0 0.0
    %3169 = vmatprep.subr.mxu0 0.0
    %3170 = vmatpush1.msra.mxu0 0.0
    %3171 = vmatprep.mubr.f32.mxu0 0.0
    %3172 = vmatmul.mubr.f32.gmra.mrb[0].mxu0 %v2948
    %v3173 = vpop.f32.mrb[0].mxu0
    %v3174 = vadd.f32 0.0, %v3173
    %v3175 = vpop.f32.mrb[0].mxu0
    %v3176 = vadd.f32 0.0, %v3175
    %3177 = vmatprep.mubr.f32.mxu0 0.0
    %3178 = vmatmul.mubr.f32.gmra.mrb[0].mxu0 %v2951
    %v3179 = vpop.f32.mrb[0].mxu0
    %v3180 = vadd.f32 0.0, %v3179
    %v3181 = vpop.f32.mrb[0].mxu0
    %v3182 = vadd.f32 0.0, %v3181
    %3183 = vdwg.mxu0
    %3184 = vmatprep.subr.mxu0 %v2941
    %3185 = vmatpush1.msra.mxu0 %v2870
    %3186 = vmatprep.subr.mxu0 %v2942
    %3187 = vmatpush1.msra.mxu0 %v2871
    %3188 = vmatprep.subr.mxu0 0.0
    %3189 = vmatpush1.msra.mxu0 0.0
    %3190 = vmatprep.subr.mxu0 0.0
    %3191 = vmatpush1.msra.mxu0 0.0
    %3192 = vmatprep.subr.mxu0 0.0
    %3193 = vmatpush1.msra.mxu0 0.0
    %3194 = vmatprep.subr.mxu0 0.0
    %3195 = vmatpush1.msra.mxu0 0.0
    %3196 = vmatprep.subr.mxu0 0.0
    %3197 = vmatpush1.msra.mxu0 0.0
    %3198 = vmatprep.subr.mxu0 0.0
    %3199 = vmatpush1.msra.mxu0 0.0
    %3200 = vmatprep.subr.mxu0 0.0
    %3201 = vmatpush1.msra.mxu0 0.0
    %3202 = vmatprep.subr.mxu0 0.0
    %3203 = vmatpush1.msra.mxu0 0.0
    %3204 = vmatprep.subr.mxu0 0.0
    %3205 = vmatpush1.msra.mxu0 0.0
    %3206 = vmatprep.subr.mxu0 0.0
    %3207 = vmatpush1.msra.mxu0 0.0
    %3208 = vmatprep.subr.mxu0 0.0
    %3209 = vmatpush1.msra.mxu0 0.0
    %3210 = vmatprep.subr.mxu0 0.0
    %3211 = vmatpush1.msra.mxu0 0.0
    %3212 = vmatprep.subr.mxu0 0.0
    %3213 = vmatpush1.msra.mxu0 0.0
    %3214 = vmatprep.subr.mxu0 0.0
    %3215 = vmatpush1.msra.mxu0 0.0
    %3216 = vmatprep.subr.mxu0 0.0
    %3217 = vmatpush1.msra.mxu0 0.0
    %3218 = vmatprep.subr.mxu0 0.0
    %3219 = vmatpush1.msra.mxu0 0.0
    %3220 = vmatprep.subr.mxu0 0.0
    %3221 = vmatpush1.msra.mxu0 0.0
    %3222 = vmatprep.subr.mxu0 0.0
    %3223 = vmatpush1.msra.mxu0 0.0
    %3224 = vmatprep.subr.mxu0 0.0
    %3225 = vmatpush1.msra.mxu0 0.0
    %3226 = vmatprep.subr.mxu0 0.0
    %3227 = vmatpush1.msra.mxu0 0.0
    %3228 = vmatprep.subr.mxu0 0.0
    %3229 = vmatpush1.msra.mxu0 0.0
    %3230 = vmatprep.subr.mxu0 0.0
    %3231 = vmatpush1.msra.mxu0 0.0
    %3232 = vmatprep.subr.mxu0 0.0
    %3233 = vmatpush1.msra.mxu0 0.0
    %3234 = vmatprep.subr.mxu0 0.0
    %3235 = vmatpush1.msra.mxu0 0.0
    %3236 = vmatprep.subr.mxu0 0.0
    %3237 = vmatpush1.msra.mxu0 0.0
    %3238 = vmatprep.subr.mxu0 0.0
    %3239 = vmatpush1.msra.mxu0 0.0
    %3240 = vmatprep.subr.mxu0 0.0
    %3241 = vmatpush1.msra.mxu0 0.0
    %3242 = vmatprep.subr.mxu0 0.0
    %3243 = vmatpush1.msra.mxu0 0.0
    %3244 = vmatprep.subr.mxu0 0.0
    %3245 = vmatpush1.msra.mxu0 0.0
    %3246 = vmatprep.subr.mxu0 0.0
    %3247 = vmatpush1.msra.mxu0 0.0
    %3248 = vmatprep.mubr.f32.mxu0 0.0
    %3249 = vmatmul.mubr.f32.gmra.mrb[0].mxu0 %v2948
    %v3250 = vpop.f32.mrb[0].mxu0
    %v3251 = vadd.f32 0.0, %v3250
    %v3252 = vpop.f32.mrb[0].mxu0
    %v3253 = vadd.f32 0.0, %v3252
    %3254 = vmatprep.mubr.f32.mxu0 0.0
    %3255 = vmatmul.mubr.f32.gmra.mrb[0].mxu0 %v2951
    %v3256 = vpop.f32.mrb[0].mxu0
    %v3257 = vadd.f32 0.0, %v3256
    %v3258 = vpop.f32.mrb[0].mxu0
    %v3259 = vadd.f32 0.0, %v3258
    %3260 = vdwg.mxu0
    %v3262 = vsel %vm141, %v2943, 0
    %v3265 = vsel %vm141, %v2944, 0
    %3267 = vmatprep.subr.mxu0 %v91
    %3268 = vmatpush1.msra.mxu0 %v90
    %3269 = vmatprep.subr.mxu0 %v99
    %3270 = vmatpush1.msra.mxu0 %v98
    %3271 = vmatprep.subr.mxu0 0.0
    %3272 = vmatpush1.msra.mxu0 0.0
    %3273 = vmatprep.subr.mxu0 0.0
    %3274 = vmatpush1.msra.mxu0 0.0
    %3275 = vmatprep.subr.mxu0 0.0
    %3276 = vmatpush1.msra.mxu0 0.0
    %3277 = vmatprep.subr.mxu0 0.0
    %3278 = vmatpush1.msra.mxu0 0.0
    %3279 = vmatprep.subr.mxu0 0.0
    %3280 = vmatpush1.msra.mxu0 0.0
    %3281 = vmatprep.subr.mxu0 0.0
    %3282 = vmatpush1.msra.mxu0 0.0
    %3283 = vmatprep.subr.mxu0 0.0
    %3284 = vmatpush1.msra.mxu0 0.0
    %3285 = vmatprep.subr.mxu0 0.0
    %3286 = vmatpush1.msra.mxu0 0.0
    %3287 = vmatprep.subr.mxu0 0.0
    %3288 = vmatpush1.msra.mxu0 0.0
    %3289 = vmatprep.subr.mxu0 0.0
    %3290 = vmatpush1.msra.mxu0 0.0
    %3291 = vmatprep.subr.mxu0 0.0
    %3292 = vmatpush1.msra.mxu0 0.0
    %3293 = vmatprep.subr.mxu0 0.0
    %3294 = vmatpush1.msra.mxu0 0.0
    %3295 = vmatprep.subr.mxu0 0.0
    %3296 = vmatpush1.msra.mxu0 0.0
    %3297 = vmatprep.subr.mxu0 0.0
    %3298 = vmatpush1.msra.mxu0 0.0
    %3299 = vmatprep.subr.mxu0 0.0
    %3300 = vmatpush1.msra.mxu0 0.0
    %3301 = vmatprep.subr.mxu0 0.0
    %3302 = vmatpush1.msra.mxu0 0.0
    %3303 = vmatprep.subr.mxu0 0.0
    %3304 = vmatpush1.msra.mxu0 0.0
    %3305 = vmatprep.subr.mxu0 0.0
    %3306 = vmatpush1.msra.mxu0 0.0
    %3307 = vmatprep.subr.mxu0 0.0
    %3308 = vmatpush1.msra.mxu0 0.0
    %3309 = vmatprep.subr.mxu0 0.0
    %3310 = vmatpush1.msra.mxu0 0.0
    %3311 = vmatprep.subr.mxu0 0.0
    %3312 = vmatpush1.msra.mxu0 0.0
    %3313 = vmatprep.subr.mxu0 0.0
    %3314 = vmatpush1.msra.mxu0 0.0
    %3315 = vmatprep.subr.mxu0 0.0
    %3316 = vmatpush1.msra.mxu0 0.0
    %3317 = vmatprep.subr.mxu0 0.0
    %3318 = vmatpush1.msra.mxu0 0.0
    %3319 = vmatprep.subr.mxu0 0.0
    %3320 = vmatpush1.msra.mxu0 0.0
    %3321 = vmatprep.subr.mxu0 0.0
    %3322 = vmatpush1.msra.mxu0 0.0
    %3323 = vmatprep.subr.mxu0 0.0
    %3324 = vmatpush1.msra.mxu0 0.0
    %3325 = vmatprep.subr.mxu0 0.0
    %3326 = vmatpush1.msra.mxu0 0.0
    %3327 = vmatprep.subr.mxu0 0.0
    %3328 = vmatpush1.msra.mxu0 0.0
    %3329 = vmatprep.subr.mxu0 0.0
    %3330 = vmatpush1.msra.mxu0 0.0
    %3331 = vmatprep.mubr.f32.mxu0 0.0
    %3332 = vmatmul.mubr.f32.gmra.mrb[0].mxu0 %v3262
    %v3333 = vpop.f32.mrb[0].mxu0
    %v3334 = vadd.f32 %v3020, %v3333
    %v3335 = vpop.f32.mrb[0].mxu0
    %v3336 = vadd.f32 %v3022, %v3335
    %3337 = vmatprep.mubr.f32.mxu0 0.0
    %3338 = vmatmul.mubr.f32.gmra.mrb[0].mxu0 %v3265
    %v3339 = vpop.f32.mrb[0].mxu0
    %v3340 = vadd.f32 %v3026, %v3339
    %v3341 = vpop.f32.mrb[0].mxu0
    %v3342 = vadd.f32 %v3028, %v3341
    %3343 = vdwg.mxu0
    %3344 = vmatprep.subr.mxu0 %v93
    %3345 = vmatpush1.msra.mxu0 %v92
    %3346 = vmatprep.subr.mxu0 %v101
    %3347 = vmatpush1.msra.mxu0 %v100
    %3348 = vmatprep.subr.mxu0 0.0
    %3349 = vmatpush1.msra.mxu0 0.0
    %3350 = vmatprep.subr.mxu0 0.0
    %3351 = vmatpush1.msra.mxu0 0.0
    %3352 = vmatprep.subr.mxu0 0.0
    %3353 = vmatpush1.msra.mxu0 0.0
    %3354 = vmatprep.subr.mxu0 0.0
    %3355 = vmatpush1.msra.mxu0 0.0
    %3356 = vmatprep.subr.mxu0 0.0
    %3357 = vmatpush1.msra.mxu0 0.0
    %3358 = vmatprep.subr.mxu0 0.0
    %3359 = vmatpush1.msra.mxu0 0.0
    %3360 = vmatprep.subr.mxu0 0.0
    %3361 = vmatpush1.msra.mxu0 0.0
    %3362 = vmatprep.subr.mxu0 0.0
    %3363 = vmatpush1.msra.mxu0 0.0
    %3364 = vmatprep.subr.mxu0 0.0
    %3365 = vmatpush1.msra.mxu0 0.0
    %3366 = vmatprep.subr.mxu0 0.0
    %3367 = vmatpush1.msra.mxu0 0.0
    %3368 = vmatprep.subr.mxu0 0.0
    %3369 = vmatpush1.msra.mxu0 0.0
    %3370 = vmatprep.subr.mxu0 0.0
    %3371 = vmatpush1.msra.mxu0 0.0
    %3372 = vmatprep.subr.mxu0 0.0
    %3373 = vmatpush1.msra.mxu0 0.0
    %3374 = vmatprep.subr.mxu0 0.0
    %3375 = vmatpush1.msra.mxu0 0.0
    %3376 = vmatprep.subr.mxu0 0.0
    %3377 = vmatpush1.msra.mxu0 0.0
    %3378 = vmatprep.subr.mxu0 0.0
    %3379 = vmatpush1.msra.mxu0 0.0
    %3380 = vmatprep.subr.mxu0 0.0
    %3381 = vmatpush1.msra.mxu0 0.0
    %3382 = vmatprep.subr.mxu0 0.0
    %3383 = vmatpush1.msra.mxu0 0.0
    %3384 = vmatprep.subr.mxu0 0.0
    %3385 = vmatpush1.msra.mxu0 0.0
    %3386 = vmatprep.subr.mxu0 0.0
    %3387 = vmatpush1.msra.mxu0 0.0
    %3388 = vmatprep.subr.mxu0 0.0
    %3389 = vmatpush1.msra.mxu0 0.0
    %3390 = vmatprep.subr.mxu0 0.0
    %3391 = vmatpush1.msra.mxu0 0.0
    %3392 = vmatprep.subr.mxu0 0.0
    %3393 = vmatpush1.msra.mxu0 0.0
    %3394 = vmatprep.subr.mxu0 0.0
    %3395 = vmatpush1.msra.mxu0 0.0
    %3396 = vmatprep.subr.mxu0 0.0
    %3397 = vmatpush1.msra.mxu0 0.0
    %3398 = vmatprep.subr.mxu0 0.0
    %3399 = vmatpush1.msra.mxu0 0.0
    %3400 = vmatprep.subr.mxu0 0.0
    %3401 = vmatpush1.msra.mxu0 0.0
    %3402 = vmatprep.subr.mxu0 0.0
    %3403 = vmatpush1.msra.mxu0 0.0
    %3404 = vmatprep.subr.mxu0 0.0
    %3405 = vmatpush1.msra.mxu0 0.0
    %3406 = vmatprep.subr.mxu0 0.0
    %3407 = vmatpush1.msra.mxu0 0.0
    %3408 = vmatprep.mubr.f32.mxu0 0.0
    %3409 = vmatmul.mubr.f32.gmra.mrb[0].mxu0 %v3262
    %v3410 = vpop.f32.mrb[0].mxu0
    %v3411 = vadd.f32 %v3097, %v3410
    %v3412 = vpop.f32.mrb[0].mxu0
    %v3413 = vadd.f32 %v3099, %v3412
    %3414 = vmatprep.mubr.f32.mxu0 0.0
    %3415 = vmatmul.mubr.f32.gmra.mrb[0].mxu0 %v3265
    %v3416 = vpop.f32.mrb[0].mxu0
    %v3417 = vadd.f32 %v3103, %v3416
    %v3418 = vpop.f32.mrb[0].mxu0
    %v3419 = vadd.f32 %v3105, %v3418
    %3420 = vdwg.mxu0
    %3421 = vmatprep.subr.mxu0 %v95
    %3422 = vmatpush1.msra.mxu0 %v94
    %3423 = vmatprep.subr.mxu0 %v103
    %3424 = vmatpush1.msra.mxu0 %v102
    %3425 = vmatprep.subr.mxu0 0.0
    %3426 = vmatpush1.msra.mxu0 0.0
    %3427 = vmatprep.subr.mxu0 0.0
    %3428 = vmatpush1.msra.mxu0 0.0
    %3429 = vmatprep.subr.mxu0 0.0
    %3430 = vmatpush1.msra.mxu0 0.0
    %3431 = vmatprep.subr.mxu0 0.0
    %3432 = vmatpush1.msra.mxu0 0.0
    %3433 = vmatprep.subr.mxu0 0.0
    %3434 = vmatpush1.msra.mxu0 0.0
    %3435 = vmatprep.subr.mxu0 0.0
    %3436 = vmatpush1.msra.mxu0 0.0
    %3437 = vmatprep.subr.mxu0 0.0
    %3438 = vmatpush1.msra.mxu0 0.0
    %3439 = vmatprep.subr.mxu0 0.0
    %3440 = vmatpush1.msra.mxu0 0.0
    %3441 = vmatprep.subr.mxu0 0.0
    %3442 = vmatpush1.msra.mxu0 0.0
    %3443 = vmatprep.subr.mxu0 0.0
    %3444 = vmatpush1.msra.mxu0 0.0
    %3445 = vmatprep.subr.mxu0 0.0
    %3446 = vmatpush1.msra.mxu0 0.0
    %3447 = vmatprep.subr.mxu0 0.0
    %3448 = vmatpush1.msra.mxu0 0.0
    %3449 = vmatprep.subr.mxu0 0.0
    %3450 = vmatpush1.msra.mxu0 0.0
    %3451 = vmatprep.subr.mxu0 0.0
    %3452 = vmatpush1.msra.mxu0 0.0
    %3453 = vmatprep.subr.mxu0 0.0
    %3454 = vmatpush1.msra.mxu0 0.0
    %3455 = vmatprep.subr.mxu0 0.0
    %3456 = vmatpush1.msra.mxu0 0.0
    %3457 = vmatprep.subr.mxu0 0.0
    %3458 = vmatpush1.msra.mxu0 0.0
    %3459 = vmatprep.subr.mxu0 0.0
    %3460 = vmatpush1.msra.mxu0 0.0
    %3461 = vmatprep.subr.mxu0 0.0
    %3462 = vmatpush1.msra.mxu0 0.0
    %3463 = vmatprep.subr.mxu0 0.0
    %3464 = vmatpush1.msra.mxu0 0.0
    %3465 = vmatprep.subr.mxu0 0.0
    %3466 = vmatpush1.msra.mxu0 0.0
    %3467 = vmatprep.subr.mxu0 0.0
    %3468 = vmatpush1.msra.mxu0 0.0
    %3469 = vmatprep.subr.mxu0 0.0
    %3470 = vmatpush1.msra.mxu0 0.0
    %3471 = vmatprep.subr.mxu0 0.0
    %3472 = vmatpush1.msra.mxu0 0.0
    %3473 = vmatprep.subr.mxu0 0.0
    %3474 = vmatpush1.msra.mxu0 0.0
    %3475 = vmatprep.subr.mxu0 0.0
    %3476 = vmatpush1.msra.mxu0 0.0
    %3477 = vmatprep.subr.mxu0 0.0
    %3478 = vmatpush1.msra.mxu0 0.0
    %3479 = vmatprep.subr.mxu0 0.0
    %3480 = vmatpush1.msra.mxu0 0.0
    %3481 = vmatprep.subr.mxu0 0.0
    %3482 = vmatpush1.msra.mxu0 0.0
    %3483 = vmatprep.subr.mxu0 0.0
    %3484 = vmatpush1.msra.mxu0 0.0
    %3485 = vmatprep.mubr.f32.mxu0 0.0
    %3486 = vmatmul.mubr.f32.gmra.mrb[0].mxu0 %v3262
    %v3487 = vpop.f32.mrb[0].mxu0
    %v3488 = vadd.f32 %v3174, %v3487
    %v3489 = vpop.f32.mrb[0].mxu0
    %v3490 = vadd.f32 %v3176, %v3489
    %3491 = vmatprep.mubr.f32.mxu0 0.0
    %3492 = vmatmul.mubr.f32.gmra.mrb[0].mxu0 %v3265
    %v3493 = vpop.f32.mrb[0].mxu0
    %v3494 = vadd.f32 %v3180, %v3493
    %v3495 = vpop.f32.mrb[0].mxu0
    %v3496 = vadd.f32 %v3182, %v3495
    %3497 = vdwg.mxu0
    %3498 = vmatprep.subr.mxu0 %v97
    %3499 = vmatpush1.msra.mxu0 %v96
    %3500 = vmatprep.subr.mxu0 %v105
    %3501 = vmatpush1.msra.mxu0 %v104
    %3502 = vmatprep.subr.mxu0 0.0
    %3503 = vmatpush1.msra.mxu0 0.0
    %3504 = vmatprep.subr.mxu0 0.0
    %3505 = vmatpush1.msra.mxu0 0.0
    %3506 = vmatprep.subr.mxu0 0.0
    %3507 = vmatpush1.msra.mxu0 0.0
    %3508 = vmatprep.subr.mxu0 0.0
    %3509 = vmatpush1.msra.mxu0 0.0
    %3510 = vmatprep.subr.mxu0 0.0
    %3511 = vmatpush1.msra.mxu0 0.0
    %3512 = vmatprep.subr.mxu0 0.0
    %3513 = vmatpush1.msra.mxu0 0.0
    %3514 = vmatprep.subr.mxu0 0.0
    %3515 = vmatpush1.msra.mxu0 0.0
    %3516 = vmatprep.subr.mxu0 0.0
    %3517 = vmatpush1.msra.mxu0 0.0
    %3518 = vmatprep.subr.mxu0 0.0
    %3519 = vmatpush1.msra.mxu0 0.0
    %3520 = vmatprep.subr.mxu0 0.0
    %3521 = vmatpush1.msra.mxu0 0.0
    %3522 = vmatprep.subr.mxu0 0.0
    %3523 = vmatpush1.msra.mxu0 0.0
    %3524 = vmatprep.subr.mxu0 0.0
    %3525 = vmatpush1.msra.mxu0 0.0
    %3526 = vmatprep.subr.mxu0 0.0
    %3527 = vmatpush1.msra.mxu0 0.0
    %3528 = vmatprep.subr.mxu0 0.0
    %3529 = vmatpush1.msra.mxu0 0.0
    %3530 = vmatprep.subr.mxu0 0.0
    %3531 = vmatpush1.msra.mxu0 0.0
    %3532 = vmatprep.subr.mxu0 0.0
    %3533 = vmatpush1.msra.mxu0 0.0
    %3534 = vmatprep.subr.mxu0 0.0
    %3535 = vmatpush1.msra.mxu0 0.0
    %3536 = vmatprep.subr.mxu0 0.0
    %3537 = vmatpush1.msra.mxu0 0.0
    %3538 = vmatprep.subr.mxu0 0.0
    %3539 = vmatpush1.msra.mxu0 0.0
    %3540 = vmatprep.subr.mxu0 0.0
    %3541 = vmatpush1.msra.mxu0 0.0
    %3542 = vmatprep.subr.mxu0 0.0
    %3543 = vmatpush1.msra.mxu0 0.0
    %3544 = vmatprep.subr.mxu0 0.0
    %3545 = vmatpush1.msra.mxu0 0.0
    %3546 = vmatprep.subr.mxu0 0.0
    %3547 = vmatpush1.msra.mxu0 0.0
    %3548 = vmatprep.subr.mxu0 0.0
    %3549 = vmatpush1.msra.mxu0 0.0
    %3550 = vmatprep.subr.mxu0 0.0
    %3551 = vmatpush1.msra.mxu0 0.0
    %3552 = vmatprep.subr.mxu0 0.0
    %3553 = vmatpush1.msra.mxu0 0.0
    %3554 = vmatprep.subr.mxu0 0.0
    %3555 = vmatpush1.msra.mxu0 0.0
    %3556 = vmatprep.subr.mxu0 0.0
    %3557 = vmatpush1.msra.mxu0 0.0
    %3558 = vmatprep.subr.mxu0 0.0
    %3559 = vmatpush1.msra.mxu0 0.0
    %3560 = vmatprep.subr.mxu0 0.0
    %3561 = vmatpush1.msra.mxu0 0.0
    %3562 = vmatprep.mubr.f32.mxu0 0.0
    %3563 = vmatmul.mubr.f32.gmra.mrb[0].mxu0 %v3262
    %v3564 = vpop.f32.mrb[0].mxu0
    %v3565 = vadd.f32 %v3251, %v3564
    %v3566 = vpop.f32.mrb[0].mxu0
    %v3567 = vadd.f32 %v3253, %v3566
    %3568 = vmatprep.mubr.f32.mxu0 0.0
    %3569 = vmatmul.mubr.f32.gmra.mrb[0].mxu0 %v3265
    %v3570 = vpop.f32.mrb[0].mxu0
    %v3571 = vadd.f32 %v3257, %v3570
    %v3572 = vpop.f32.mrb[0].mxu0
    %v3573 = vadd.f32 %v3259, %v3572
    %3574 = vdwg.mxu0
    %v3575 = vld [vmem:[%s7] sm:$0xff]
    %v3576 = vld [vmem:[%s7 + $0x8] sm:$0xff]
    %3578 = vset.pattern.permute.xlu0 0
    %3579 = vperm.xlu0 %3578, %v3575
    %v3580 = vpop.permute.xlu0 %3579
    %3583 = vset.pattern.permute.xlu0 0
    %3584 = vperm.xlu0 %3583, %v3576
    %v3585 = vpop.permute.xlu0 %3584
    %v3587 = vadd.f32 %v3334, %v3580
    %v3588 = vadd.f32 %v3336, %v3580
    %v3589 = vadd.f32 %v3411, %v3580
    %v3590 = vadd.f32 %v3413, %v3580
    %v3591 = vadd.f32 %v3488, %v3580
    %v3592 = vadd.f32 %v3490, %v3580
    %v3593 = vadd.f32 %v3565, %v3580
    %v3594 = vadd.f32 %v3567, %v3580
    %v3595 = vadd.f32 %v3340, %v3585
    %v3596 = vadd.f32 %v3342, %v3585
    %v3597 = vadd.f32 %v3417, %v3585
    %v3598 = vadd.f32 %v3419, %v3585
    %v3599 = vadd.f32 %v3494, %v3585
    %v3600 = vadd.f32 %v3496, %v3585
    %v3601 = vadd.f32 %v3571, %v3585
    %v3602 = vadd.f32 %v3573, %v3585
    %v3603 = vmax.f32 %v3587, 0.0
    %v3604 = vmax.f32 %v3588, 0.0
    %v3605 = vmax.f32 %v3589, 0.0
    %v3606 = vmax.f32 %v3590, 0.0
    %v3607 = vmax.f32 %v3591, 0.0
    %v3608 = vmax.f32 %v3592, 0.0
    %v3609 = vmax.f32 %v3593, 0.0
    %v3610 = vmax.f32 %v3594, 0.0
    %v3611 = vmax.f32 %v3595, 0.0
    %v3612 = vmax.f32 %v3596, 0.0
    %v3613 = vmax.f32 %v3597, 0.0
    %v3614 = vmax.f32 %v3598, 0.0
    %v3615 = vmax.f32 %v3599, 0.0
    %v3616 = vmax.f32 %v3600, 0.0
    %v3617 = vmax.f32 %v3601, 0.0
    %v3618 = vmax.f32 %v3602, 0.0
    %3619 = vst [vmem:[#allocation8] sm:$0xff] %v3603
    %3620 = vst [vmem:[#allocation8 + $0x8] sm:$0xff] %v3604
    %3621 = vst [vmem:[#allocation8 + $0x10] sm:$0xff] %v3605
    %3622 = vst [vmem:[#allocation8 + $0x18] sm:$0xff] %v3606
    %3623 = vst [vmem:[#allocation8 + $0x20] sm:$0xff] %v3607
    %3624 = vst [vmem:[#allocation8 + $0x28] sm:$0xff] %v3608
    %3625 = vst [vmem:[#allocation8 + $0x30] sm:$0xff] %v3609
    %3626 = vst [vmem:[#allocation8 + $0x38] sm:$0xff] %v3610
    %3627 = vst [vmem:[#allocation8 + $0x40] sm:$0xff] %v3611
    %3628 = vst [vmem:[#allocation8 + $0x48] sm:$0xff] %v3612
    %3629 = vst [vmem:[#allocation8 + $0x50] sm:$0xff] %v3613
    %3630 = vst [vmem:[#allocation8 + $0x58] sm:$0xff] %v3614
    %3631 = vst [vmem:[#allocation8 + $0x60] sm:$0xff] %v3615
    %3632 = vst [vmem:[#allocation8 + $0x68] sm:$0xff] %v3616
    %3633 = vst [vmem:[#allocation8 + $0x70] sm:$0xff] %v3617
    %3634 = vst [vmem:[#allocation8 + $0x78] sm:$0xff] %v3618
    // Predicated region
    $region50: #{tpu_custom_call.1} parent=1 // pred_check
      _
    $region51: #{tpu_custom_call.1} parent=1 // pred_check_branch
      %3636 = sbr.rel (0) target = $region53
    $region52: #{tpu_custom_call.1} parent=1 // pred_region
      %s3638 = ssub.s32 2048, 2048
      %3639 = vsyncadd [#allocation4], %s3638
      %s3640 = sshll.u32 [#allocation8], 4
      %s3641 = int_to_ptr.vmem [resolvable:$true] %s3640
      %3646 = dma.vmem_to_hbm [thread:$0]  %s3641, 2048, %s9, [#allocation4], 1024, 1024, 64
    $region53: #{tpu_custom_call.1} parent=1 // pred_fallthru
      _
    // Predicated region
    $region54: #{tpu_custom_call.1} parent=1 // pred_check
      _
    $region55: #{tpu_custom_call.1} parent=1 // pred_check_branch
      %3648 = sbr.rel (0) target = $region57
    $region56: #{tpu_custom_call.1} parent=1 // pred_region
      %3649 = dma.done [#allocation4], 2048
    $region57: #{tpu_custom_call.1} parent=1 // pred_fallthru
      _
    %3650 = vsyncpa [#allocation3], 1
    %3651 = vsyncpa [#allocation6], 1
    %3652 = vsyncpa [#allocation4], 1

</llo_original>
